<compile_context>
chip_gen: v7x
topology: tpu7x:2x2x1
jax: 0.10.0
libtpu: 0.0.40
codegen_flags: <defaults>
</compile_context>

<pallas_src>
import functools

import jax
import jax.numpy as jnp
from jax import lax
from jax.experimental import pallas as pl
from jax.experimental.pallas import tpu as pltpu


# ---------------------------------------------------------------------------
# Pallas kernels (hot path)
# ---------------------------------------------------------------------------

def _matmul_bias_kernel(a_ref, w_ref, b_ref, o_ref, *, relu):
    # a_ref: (tm, K) bf16   w_ref: (K, Cout) bf16   b_ref: (1, Cout) f32   o_ref: (tm, Cout) bf16
    acc = jnp.dot(a_ref[...], w_ref[...], preferred_element_type=jnp.float32)
    acc = acc + b_ref[...]
    if relu:
        acc = jnp.maximum(acc, 0.0)
    o_ref[...] = acc.astype(o_ref.dtype)


def _conv_diff_mse_kernel(px_ref, py_ref, w_ref, o_ref, acc_ref, *, inv_denom):
    # Fused conv2_1 difference + MSE:  sum(((px - py) @ W)**2) accumulated across row tiles.
    i = pl.program_id(0)

    @pl.when(i == 0)
    def _():
        acc_ref[0, 0] = 0.0

    diff = px_ref[...] - py_ref[...]          # zero in padded K cols / padded rows
    d = jnp.dot(diff, w_ref[...], preferred_element_type=jnp.float32)
    acc_ref[0, 0] += jnp.sum(d * d)

    @pl.when(i == pl.num_programs(0) - 1)
    def _():
        o_ref[0, 0] = acc_ref[0, 0] * inv_denom


# ---------------------------------------------------------------------------
# Pallas wrappers
# ---------------------------------------------------------------------------

def _row_tiling(M, *, max_tm=512, min_tiles=1):
    """Row-tile size (multiple of 8, or the whole M) and zero-padded M."""
    target = max(1, M // min_tiles)
    tm = min(max_tm, target)
    if tm < M:
        tm = max(8, (tm // 8) * 8)
        Mp = ((M + tm - 1) // tm) * tm
    else:
        tm, Mp = M, M
    return tm, Mp


def pallas_matmul_bias(patches, w_mat, bias_row, *, relu):
    """(M, K) bf16 @ (K, Cout) bf16 + f32 bias, optional ReLU, bf16 out, tiled over M."""
    M, K = patches.shape
    Cout = w_mat.shape[1]
    # >=2 row tiles so both TensorCores on v7x get work; costs one extra grid step on v5e/v6e.
    tm, Mp = _row_tiling(M, max_tm=512, min_tiles=2)
    if Mp > M:
        patches = jnp.pad(patches, ((0, Mp - M), (0, 0)))
    kernel = functools.partial(_matmul_bias_kernel, relu=relu)
    out = pl.pallas_call(
        kernel,
        out_shape=jax.ShapeDtypeStruct((Mp, Cout), jnp.bfloat16),
        grid=(Mp // tm,),
        in_specs=[
            pl.BlockSpec((tm, K), lambda i: (i, 0)),
            pl.BlockSpec((K, Cout), lambda i: (0, 0)),
            pl.BlockSpec((1, Cout), lambda i: (0, 0)),
        ],
        out_specs=pl.BlockSpec((tm, Cout), lambda i: (i, 0)),
        compiler_params=pltpu.CompilerParams(dimension_semantics=("parallel",)),
    )(patches, w_mat, bias_row)
    return out[:M] if Mp > M else out


def pallas_conv_diff_mse(px, py, w_mat, denom):
    """mean(((px - py) @ W)**2) with the true element count `denom` as divisor."""
    Mh, K = px.shape
    Cout = w_mat.shape[1]
    tm, Mp = _row_tiling(Mh, max_tm=512, min_tiles=1)
    if Mp > Mh:
        px = jnp.pad(px, ((0, Mp - Mh), (0, 0)))
        py = jnp.pad(py, ((0, Mp - Mh), (0, 0)))
    kernel = functools.partial(_conv_diff_mse_kernel, inv_denom=1.0 / float(denom))
    out = pl.pallas_call(
        kernel,
        out_shape=jax.ShapeDtypeStruct((1, 1), jnp.float32),
        grid=(Mp // tm,),
        in_specs=[
            pl.BlockSpec((tm, K), lambda i: (i, 0)),
            pl.BlockSpec((tm, K), lambda i: (i, 0)),
            pl.BlockSpec((K, Cout), lambda i: (0, 0)),
        ],
        out_specs=pl.BlockSpec(memory_space=pltpu.MemorySpace.SMEM),
        scratch_shapes=[pltpu.SMEM((1, 1), jnp.float32)],
        compiler_params=pltpu.CompilerParams(dimension_semantics=("arbitrary",)),
    )(px, py, w_mat)
    return out[0, 0]


# ---------------------------------------------------------------------------
# JAX glue (im2col / pooling / parameter setup)
# ---------------------------------------------------------------------------

def _im2col_3x3(x_nhwc):
    """3x3, stride 1, pad 1 patch extraction -> (N*H*W, 9*C), tap-major then channel."""
    N, H, W, C = x_nhwc.shape
    xp = jnp.pad(x_nhwc, ((0, 0), (1, 1), (1, 1), (0, 0)))
    taps = [xp[:, dy:dy + H, dx:dx + W, :] for dy in range(3) for dx in range(3)]
    patches = jnp.stack(taps, axis=3)                       # (N, H, W, 9, C)
    return patches.reshape(N * H * W, 9 * C)


def conv3x3_bf16(x_nhwc, w_mat, b_row, *, relu):
    """VGG 3x3 same conv as im2col + Pallas matmul. w_mat: (Kp, Cout) bf16, K zero-padded."""
    N, H, W, _ = x_nhwc.shape
    Cout = w_mat.shape[1]
    patches = _im2col_3x3(x_nhwc)
    K, Kp = patches.shape[1], w_mat.shape[0]
    if Kp > K:
        patches = jnp.pad(patches, ((0, 0), (0, Kp - K)))
    out = pallas_matmul_bias(patches, w_mat, b_row, relu=relu)
    return out.reshape(N, H, W, Cout)


def prepare_params(params):
    """Fold the mono->RGB repeat into conv1_1, flatten conv weights to (Kp, Cout) bf16
    (K zero-padded to a lane multiple), biases to (1, Cout) f32. conv2_1's bias cancels
    in the x-y difference and is not needed."""
    def mat(w):
        K, Cout = w.shape[0] * w.shape[1] * w.shape[2], w.shape[3]
        Kp = ((K + 127) // 128) * 128
        m = w.reshape(K, Cout)
        if Kp > K:
            m = jnp.pad(m, ((0, Kp - K), (0, 0)))
        return m.astype(jnp.bfloat16)

    w0_mono = jnp.sum(params["w0"], axis=2, keepdims=True)   # 3 identical input channels
    return {
        "w0": mat(w0_mono),
        "b0": params["b0"].reshape(1, -1).astype(jnp.float32),
        "w2": mat(params["w2"]),
        "b2": params["b2"].reshape(1, -1).astype(jnp.float32),
        "w5": mat(params["w5"]),
    }


# ---------------------------------------------------------------------------
# Forward pass
# ---------------------------------------------------------------------------

def implicit_loss(x, y, prep):
    # --- to_rgb: mean over last dim (+RGB repeat folded into w0), AvgPool2d(4,4; stride 2) ---
    xy = jnp.concatenate([x, y], axis=0)                     # batch both branches: 1 conv pass
    mono = jnp.mean(xy, axis=-1, keepdims=True)              # (2N, H, W, 1)
    pooled = lax.reduce_window(mono, 0.0, lax.add,
                               (1, 4, 4, 1), (1, 2, 2, 1), "VALID") / 16.0
    h = pooled.astype(jnp.bfloat16)

    # --- VGG19.features[0..5] ---
    h = conv3x3_bf16(h, prep["w0"], prep["b0"], relu=True)   # conv1_1 + ReLU
    h = conv3x3_bf16(h, prep["w2"], prep["b2"], relu=True)   # conv1_2 + ReLU
    N2, Hh, Wh, C = h.shape
    h = h.reshape(N2, Hh // 2, 2, Wh // 2, 2, C).max(axis=(2, 4))   # MaxPool2d(2,2)

    # --- conv2_1 (pre-ReLU) fused with the MSE; bias cancels in (x - y) ---
    Nb, Hf, Wf, C = h.shape
    patches = _im2col_3x3(h)
    K, Kp = patches.shape[1], prep["w5"].shape[0]
    if Kp > K:
        patches = jnp.pad(patches, ((0, 0), (0, Kp - K)))
    Mh = (Nb // 2) * Hf * Wf                                 # rows belonging to the x branch
    px, py = patches[:Mh], patches[Mh:]
    denom = Mh * prep["w5"].shape[1]                         # == N * Cout * Hf * Wf
    return pallas_conv_diff_mse(px, py, prep["w5"], denom)


def init_params(key):
    # TODO(synk): pretrained VGG19 weights are not loadable in-script; deterministic init instead.
    ks = jax.random.split(key, 6)

    def conv_init(kw, kb, cin, cout):
        std = (2.0 / (9 * cin)) ** 0.5
        w = jax.random.normal(kw, (3, 3, cin, cout), jnp.float32) * std
        b = jax.random.normal(kb, (cout,), jnp.float32) * 0.01
        return w, b

    w0, b0 = conv_init(ks[0], ks[1], 3, 64)
    w2, b2 = conv_init(ks[2], ks[3], 64, 64)
    w5, b5 = conv_init(ks[4], ks[5], 64, 128)
    return {"w0": w0, "b0": b0, "w2": w2, "b2": b2, "w5": w5, "b5": b5}


if __name__ == "__main__":
    key = jax.random.PRNGKey(0)
    kp, kx, ky = jax.random.split(key, 3)
    params = init_params(kp)
    prep = prepare_params(params)                            # one-time weight prep (outside jit)

    # x, y: (N, H, W, C_last); after to_rgb/avgpool -> 16x16; conv2_1 features -> (2, 128, 8, 8)
    x = jax.random.normal(kx, (2, 34, 34, 4), jnp.float32)
    y = jax.random.normal(ky, (2, 34, 34, 4), jnp.float32)

    loss = jax.jit(implicit_loss)(x, y, prep)
    jax.block_until_ready(loss)
    assert bool(jnp.isfinite(loss))
    print("KERNEL_OK")
</pallas_src>

<mosaic_0001>
module attributes {stable_mosaic.version = 11 : i64} {
  func.func @_matmul_bias_kernel(%arg0: i32, %arg1: memref<512x128xbf16, #tpu.memory_space<vmem>>, %arg2: memref<128x64xbf16, #tpu.memory_space<vmem>>, %arg3: memref<1x64xf32, #tpu.memory_space<vmem>>, %arg4: memref<512x64xbf16, #tpu.memory_space<vmem>>) attributes {dimension_semantics = [#tpu.dimension_semantics<parallel>], iteration_bounds = array<i64: 2>, scalar_prefetch = 0 : i64, scratch_operands = 0 : i64, tpu.core_type = #tpu.core_type<tc>, window_params = [{transform_indices = @transform_0, window_bounds = array<i64: 512, 128>}, {pipeline_mode = #tpu.pipeline_mode<synchronous>, transform_indices = @transform_1, window_bounds = array<i64: 128, 64>}, {pipeline_mode = #tpu.pipeline_mode<synchronous>, transform_indices = @transform_2, window_bounds = array<i64: 1, 64>}, {transform_indices = @transform_3, window_bounds = array<i64: 512, 64>}]} {
    %c0 = arith.constant 0 : index
    %c0_0 = arith.constant 0 : index
    %0 = vector.load %arg1[%c0, %c0_0] : memref<512x128xbf16, #tpu.memory_space<vmem>>, vector<512x128xbf16>
    %c0_1 = arith.constant 0 : index
    %c0_2 = arith.constant 0 : index
    %1 = vector.load %arg2[%c0_1, %c0_2] : memref<128x64xbf16, #tpu.memory_space<vmem>>, vector<128x64xbf16>
    %cst = arith.constant dense<0.000000e+00> : vector<512x64xf32>
    %2 = tpu.matmul %0, %1, %cst {dimension_numbers = #tpu.dot_dimension_numbers<[1], [0], [0], [1], [0, 0, 1, 1], [], []>} : vector<512x128xbf16>, vector<128x64xbf16>, vector<512x64xf32> -> vector<512x64xf32>
    %c0_3 = arith.constant 0 : index
    %c0_4 = arith.constant 0 : index
    %3 = vector.load %arg3[%c0_3, %c0_4] : memref<1x64xf32, #tpu.memory_space<vmem>>, vector<1x64xf32>
    %4 = vector.broadcast %3 : vector<1x64xf32> to vector<512x64xf32>
    %5 = arith.addf %2, %4 : vector<512x64xf32>
    %cst_5 = arith.constant 0.000000e+00 : f32
    %6 = vector.broadcast %cst_5 : f32 to vector<512x64xf32>
    %7 = arith.maximumf %5, %6 : vector<512x64xf32>
    %8 = arith.truncf %7 : vector<512x64xf32> to vector<512x64xbf16>
    %c0_6 = arith.constant 0 : index
    %c0_7 = arith.constant 0 : index
    %9 = vector.load %arg4[%c0_6, %c0_7] : memref<512x64xbf16, #tpu.memory_space<vmem>>, vector<512x64xbf16>
    tpu.vector_store %arg4[%c0_6, %c0_7], %8 {strides = array<i32>} : memref<512x64xbf16, #tpu.memory_space<vmem>>, vector<512x64xbf16>,
    return
  }
  func.func @transform_0(%arg0: i32) -> (i32, i32) {
    %c0_i32 = arith.constant 0 : i32
    %c0_i32_0 = arith.constant 0 : i32
    return %arg0, %c0_i32 : i32, i32
  }
  func.func @transform_1(%arg0: i32) -> (i32, i32) {
    %c0_i32 = arith.constant 0 : i32
    %c0_i32_0 = arith.constant 0 : i32
    %c0_i32_1 = arith.constant 0 : i32
    return %c0_i32, %c0_i32_0 : i32, i32
  }
  func.func @transform_2(%arg0: i32) -> (i32, i32) {
    %c0_i32 = arith.constant 0 : i32
    %c0_i32_0 = arith.constant 0 : i32
    %c0_i32_1 = arith.constant 0 : i32
    return %c0_i32, %c0_i32_0 : i32, i32
  }
  func.func @transform_3(%arg0: i32) -> (i32, i32) {
    %c0_i32 = arith.constant 0 : i32
    %c0_i32_0 = arith.constant 0 : i32
    return %arg0, %c0_i32 : i32, i32
  }
}

module attributes {stable_mosaic.version = 11 : i64} {
  func.func @_matmul_bias_kernel(%arg0: i32, %arg1: memref<512x640xbf16, #tpu.memory_space<vmem>>, %arg2: memref<640x64xbf16, #tpu.memory_space<vmem>>, %arg3: memref<1x64xf32, #tpu.memory_space<vmem>>, %arg4: memref<512x64xbf16, #tpu.memory_space<vmem>>) attributes {dimension_semantics = [#tpu.dimension_semantics<parallel>], iteration_bounds = array<i64: 2>, scalar_prefetch = 0 : i64, scratch_operands = 0 : i64, tpu.core_type = #tpu.core_type<tc>, window_params = [{transform_indices = @transform_0, window_bounds = array<i64: 512, 640>}, {pipeline_mode = #tpu.pipeline_mode<synchronous>, transform_indices = @transform_1, window_bounds = array<i64: 640, 64>}, {pipeline_mode = #tpu.pipeline_mode<synchronous>, transform_indices = @transform_2, window_bounds = array<i64: 1, 64>}, {transform_indices = @transform_3, window_bounds = array<i64: 512, 64>}]} {
    %c0 = arith.constant 0 : index
    %c0_0 = arith.constant 0 : index
    %0 = vector.load %arg1[%c0, %c0_0] : memref<512x640xbf16, #tpu.memory_space<vmem>>, vector<512x640xbf16>
    %c0_1 = arith.constant 0 : index
    %c0_2 = arith.constant 0 : index
    %1 = vector.load %arg2[%c0_1, %c0_2] : memref<640x64xbf16, #tpu.memory_space<vmem>>, vector<640x64xbf16>
    %cst = arith.constant dense<0.000000e+00> : vector<512x64xf32>
    %2 = tpu.matmul %0, %1, %cst {dimension_numbers = #tpu.dot_dimension_numbers<[1], [0], [0], [1], [0, 0, 1, 1], [], []>} : vector<512x640xbf16>, vector<640x64xbf16>, vector<512x64xf32> -> vector<512x64xf32>
    %c0_3 = arith.constant 0 : index
    %c0_4 = arith.constant 0 : index
    %3 = vector.load %arg3[%c0_3, %c0_4] : memref<1x64xf32, #tpu.memory_space<vmem>>, vector<1x64xf32>
    %4 = vector.broadcast %3 : vector<1x64xf32> to vector<512x64xf32>
    %5 = arith.addf %2, %4 : vector<512x64xf32>
    %cst_5 = arith.constant 0.000000e+00 : f32
    %6 = vector.broadcast %cst_5 : f32 to vector<512x64xf32>
    %7 = arith.maximumf %5, %6 : vector<512x64xf32>
    %8 = arith.truncf %7 : vector<512x64xf32> to vector<512x64xbf16>
    %c0_6 = arith.constant 0 : index
    %c0_7 = arith.constant 0 : index
    %9 = vector.load %arg4[%c0_6, %c0_7] : memref<512x64xbf16, #tpu.memory_space<vmem>>, vector<512x64xbf16>
    tpu.vector_store %arg4[%c0_6, %c0_7], %8 {strides = array<i32>} : memref<512x64xbf16, #tpu.memory_space<vmem>>, vector<512x64xbf16>,
    return
  }
  func.func @transform_0(%arg0: i32) -> (i32, i32) {
    %c0_i32 = arith.constant 0 : i32
    %c0_i32_0 = arith.constant 0 : i32
    return %arg0, %c0_i32 : i32, i32
  }
  func.func @transform_1(%arg0: i32) -> (i32, i32) {
    %c0_i32 = arith.constant 0 : i32
    %c0_i32_0 = arith.constant 0 : i32
    %c0_i32_1 = arith.constant 0 : i32
    return %c0_i32, %c0_i32_0 : i32, i32
  }
  func.func @transform_2(%arg0: i32) -> (i32, i32) {
    %c0_i32 = arith.constant 0 : i32
    %c0_i32_0 = arith.constant 0 : i32
    %c0_i32_1 = arith.constant 0 : i32
    return %c0_i32, %c0_i32_0 : i32, i32
  }
  func.func @transform_3(%arg0: i32) -> (i32, i32) {
    %c0_i32 = arith.constant 0 : i32
    %c0_i32_0 = arith.constant 0 : i32
    return %arg0, %c0_i32 : i32, i32
  }
}

module attributes {stable_mosaic.version = 11 : i64} {
  func.func @_conv_diff_mse_kernel(%arg0: i32, %arg1: memref<128x640xbf16, #tpu.memory_space<vmem>>, %arg2: memref<128x640xbf16, #tpu.memory_space<vmem>>, %arg3: memref<640x128xbf16, #tpu.memory_space<vmem>>, %arg4: memref<1x1xf32, #tpu.memory_space<smem>>, %arg5: memref<1x1xf32, #tpu.memory_space<smem>>) attributes {dimension_semantics = [#tpu.dimension_semantics<arbitrary>], iteration_bounds = array<i64: 1>, scalar_prefetch = 0 : i64, scratch_operands = 1 : i64, tpu.core_type = #tpu.core_type<tc>, window_params = [{transform_indices = @transform_0, window_bounds = array<i64: 128, 640>}, {transform_indices = @transform_1, window_bounds = array<i64: 128, 640>}, {pipeline_mode = #tpu.pipeline_mode<synchronous>, transform_indices = @transform_2, window_bounds = array<i64: 640, 128>}, {transform_indices = @transform_3, window_bounds = array<i64: 1, 1>}]} {
    %c0_i32 = arith.constant 0 : i32
    %0 = arith.cmpi eq, %arg0, %c0_i32 : i32
    %1 = arith.extui %0 : i1 to i32
    %c0_i32_0 = arith.constant 0 : i32
    %2 = arith.cmpi ne, %1, %c0_i32_0 : i32
    scf.if %2 {
      %cst_13 = arith.constant 0.000000e+00 : f32
      %c0_14 = arith.constant 0 : index
      %c0_15 = arith.constant 0 : index
      %19 = memref.load %arg5[%c0_14, %c0_15] : memref<1x1xf32, #tpu.memory_space<smem>>
      memref.store %cst_13, %arg5[%c0_14, %c0_15] : memref<1x1xf32, #tpu.memory_space<smem>>
    } else {
    }
    %c0 = arith.constant 0 : index
    %c0_1 = arith.constant 0 : index
    %3 = vector.load %arg1[%c0, %c0_1] : memref<128x640xbf16, #tpu.memory_space<vmem>>, vector<128x640xbf16>
    %c0_2 = arith.constant 0 : index
    %c0_3 = arith.constant 0 : index
    %4 = vector.load %arg2[%c0_2, %c0_3] : memref<128x640xbf16, #tpu.memory_space<vmem>>, vector<128x640xbf16>
    %5 = arith.subf %3, %4 : vector<128x640xbf16>
    %c0_4 = arith.constant 0 : index
    %c0_5 = arith.constant 0 : index
    %6 = vector.load %arg3[%c0_4, %c0_5] : memref<640x128xbf16, #tpu.memory_space<vmem>>, vector<640x128xbf16>
    %cst = arith.constant dense<0.000000e+00> : vector<128x128xf32>
    %7 = tpu.matmul %5, %6, %cst {dimension_numbers = #tpu.dot_dimension_numbers<[1], [0], [0], [1], [0, 0, 1, 1], [], []>} : vector<128x640xbf16>, vector<640x128xbf16>, vector<128x128xf32> -> vector<128x128xf32>
    %c0_6 = arith.constant 0 : index
    %c0_7 = arith.constant 0 : index
    %8 = memref.load %arg5[%c0_6, %c0_7] : memref<1x1xf32, #tpu.memory_space<smem>>
    %9 = arith.mulf %7, %7 : vector<128x128xf32>
    %10 = vector.shape_cast %9 : vector<128x128xf32> to vector<1x128x128xf32>
    %cst_8 = arith.constant dense<0.000000e+00> : vector<1xf32>
    %11 = vector.multi_reduction <add>, %10, %cst_8 [1, 2] : vector<1x128x128xf32> to vector<1xf32>
    %12 = vector.shape_cast %11 : vector<1xf32> to vector<1x1x1xf32>
    %13 = vector.extract %12[0, 0, 0] : f32 from vector<1x1x1xf32>
    %14 = arith.addf %8, %13 : f32
    %c0_9 = arith.constant 0 : index
    %c0_10 = arith.constant 0 : index
    %15 = memref.load %arg5[%c0_9, %c0_10] : memref<1x1xf32, #tpu.memory_space<smem>>
    memref.store %14, %arg5[%c0_9, %c0_10] : memref<1x1xf32, #tpu.memory_space<smem>>
    %c0_i32_11 = arith.constant 0 : i32
    %16 = arith.cmpi eq, %arg0, %c0_i32_11 : i32
    %17 = arith.extui %16 : i1 to i32
    %c0_i32_12 = arith.constant 0 : i32
    %18 = arith.cmpi ne, %17, %c0_i32_12 : i32
    scf.if %18 {
      %c0_13 = arith.constant 0 : index
      %c0_14 = arith.constant 0 : index
      %19 = memref.load %arg5[%c0_13, %c0_14] : memref<1x1xf32, #tpu.memory_space<smem>>
      %cst_15 = arith.constant 6.10351563E-5 : f32
      %20 = arith.mulf %19, %cst_15 : f32
      %c0_16 = arith.constant 0 : index
      %c0_17 = arith.constant 0 : index
      %21 = memref.load %arg4[%c0_16, %c0_17] : memref<1x1xf32, #tpu.memory_space<smem>>
      memref.store %20, %arg4[%c0_16, %c0_17] : memref<1x1xf32, #tpu.memory_space<smem>>
    } else {
    }
    return
  }
  func.func @transform_0(%arg0: i32) -> (i32, i32) {
    %c0_i32 = arith.constant 0 : i32
    %c0_i32_0 = arith.constant 0 : i32
    return %arg0, %c0_i32 : i32, i32
  }
  func.func @transform_1(%arg0: i32) -> (i32, i32) {
    %c0_i32 = arith.constant 0 : i32
    %c0_i32_0 = arith.constant 0 : i32
    return %arg0, %c0_i32 : i32, i32
  }
  func.func @transform_2(%arg0: i32) -> (i32, i32) {
    %c0_i32 = arith.constant 0 : i32
    %c0_i32_0 = arith.constant 0 : i32
    %c0_i32_1 = arith.constant 0 : i32
    return %c0_i32, %c0_i32_0 : i32, i32
  }
  func.func @transform_3(%arg0: i32) -> (i32, i32) {
    %c0_i32 = arith.constant 0 : i32
    %c0_i32_0 = arith.constant 0 : i32
    %c0_i32_1 = arith.constant 0 : i32
    return %c0_i32, %c0_i32_0 : i32, i32
  }
}

</mosaic_0001>

<llo_original>
// kernel: implicit_loss.3
$region0: #{implicit_loss.3}
  #allocation0 [shape = 'u32[]', space=smem, size = 0x4, offset = 0x4, fixed_abs, tag = 'smem constant byte address 0x4 - core index']
  #allocation1 [shape = 'u32[144,128]{1,0:T(1,128)}', space=vmem, size = 0x12000, scoped, tag = 'internal scratch']
  %s0 = inlined_call_operand.vmem [shape: bf16[1024,128], index: 0, kind: input, shape index: {}]
  %s1 = inlined_call_operand.vmem [shape: bf16[128,64], index: 1, kind: input, shape index: {}]
  %s2 = inlined_call_operand.hbm [shape: f32[1,64], index: 2, kind: input, shape index: {}]
  %s3 = inlined_call_operand.vmem [shape: bf16[1024,64], index: 3, kind: output, shape index: {}]
  %s4 = sld [smem:[#allocation0]]
  $region49: #{implicit_loss.3} parent=0
    _
  %s6 = ssub.s32 1, %s4
  %s7 = scalar_select 0, %s6, %s4
  $region1: #{implicit_loss.3} parent=0
    #allocation2 [shape = 'u8[512]{0}', space=vmem, size = 0x400, scoped, tag = 'input window, operand 2, single buffered']
    #allocation3 [shape = 's32[2]{0}', space=sflag, size = 0x8, scoped, tag = 'scoped memory for implicit_loss.3']
    %8 = vsyncpa [#allocation3], 0
    loop: start=0, step=1, limit=4
    $region2: #{implicit_loss.3} parent=1 // loop_pre_header
      _
    $region3: #{implicit_loss.3} parent=1 // loop_header
      %s10 = sphi 0, %s14
      %p11 = scmp.ge.s32.totalorder %s10, 4
      %s20 = sphi 0, %s22
      %s23 = sphi 0, %s20
      %s24 = sphi 0, %s23
      %s40 = sphi 0, %s24
      %s44 = sphi 0, %s44
      %s46 = sphi 0, %s44
      %s47 = sphi 0, %s46
      %s61 = sphi 0, %s47
      %s65 = sphi 0, %s65
      %s67 = sphi 0, %s65
      %s68 = sphi 0, %s67
      %s82 = sphi 0, %s68
      %s88 = sphi 0, %s90
      %s91 = sphi 0, %s88
      %s92 = sphi 0, %s91
      %s108 = sphi 0, %s92
    $region4: #{implicit_loss.3} parent=1 // loop_header_branch
      %13 = sbr.rel (%p11) target = $region8
    $region5: #{implicit_loss.3} parent=1 // loop_body
      %s15 = ssub.s32 %s10, 1
      %s16 = ssub.s32 %s10, 2
      %s17 = sadd.s32 %s10, 1
      %s18 = ssub.s32 %s10, %s17
      %p19 = scmp.eq.s32.totalorder %s18, 0
      %s21 = sadd.s32 %s20, 1
      %s22 = scalar_select %p19, %s20, %s21
      %p25 = pneg %p19
      %p26 = scmp.eq.s32.totalorder %s10, 1
      %p27 = por %p25, %p26
      %p28 = scmp.ne.s32.totalorder %s20, %s23
      %p29 = scmp.eq.s32.totalorder %s10, 0
      %p30 = por %p28, %p29
      %p31 = scmp.ne.s32.totalorder %s20, %s23
      %p32 = scmp.eq.s32.totalorder %s15, 1
      %p33 = por %p31, %p32
      %p34 = scmp.ne.s32.totalorder %s23, %s24
      %p35 = scmp.eq.s32.totalorder %s15, 0
      %p36 = por %p34, %p35
      %p37 = scmp.ne.s32.totalorder %s23, %s24
      %p38 = scmp.eq.s32.totalorder %s16, 1
      %p39 = por %p37, %p38
      %p41 = scmp.ne.s32.totalorder %s24, %s40
      %p42 = scmp.eq.s32.totalorder %s16, 0
      %p43 = por %p41, %p42
      %s45 = sadd.s32 %s44, 1
      %p48 = scmp.eq.s32.totalorder %s10, 1
      %p49 = scmp.ne.s32.totalorder %s44, %s46
      %p50 = scmp.eq.s32.totalorder %s10, 0
      %p51 = por %p49, %p50
      %p52 = scmp.ne.s32.totalorder %s44, %s46
      %p53 = scmp.eq.s32.totalorder %s15, 1
      %p54 = por %p52, %p53
      %p55 = scmp.ne.s32.totalorder %s46, %s47
      %p56 = scmp.eq.s32.totalorder %s15, 0
      %p57 = por %p55, %p56
      %p58 = scmp.ne.s32.totalorder %s46, %s47
      %p59 = scmp.eq.s32.totalorder %s16, 1
      %p60 = por %p58, %p59
      %p62 = scmp.ne.s32.totalorder %s47, %s61
      %p63 = scmp.eq.s32.totalorder %s16, 0
      %p64 = por %p62, %p63
      %s66 = sadd.s32 %s65, 1
      %p69 = scmp.eq.s32.totalorder %s10, 1
      %p70 = scmp.ne.s32.totalorder %s65, %s67
      %p71 = scmp.eq.s32.totalorder %s10, 0
      %p72 = por %p70, %p71
      %p73 = scmp.ne.s32.totalorder %s65, %s67
      %p74 = scmp.eq.s32.totalorder %s15, 1
      %p75 = por %p73, %p74
      %p76 = scmp.ne.s32.totalorder %s67, %s68
      %p77 = scmp.eq.s32.totalorder %s15, 0
      %p78 = por %p76, %p77
      %p79 = scmp.ne.s32.totalorder %s67, %s68
      %p80 = scmp.eq.s32.totalorder %s16, 1
      %p81 = por %p79, %p80
      %p83 = scmp.ne.s32.totalorder %s68, %s82
      %p84 = scmp.eq.s32.totalorder %s16, 0
      %p85 = por %p83, %p84
      %s86 = ssub.s32 %s10, %s17
      %p87 = scmp.eq.s32.totalorder %s86, 0
      %s89 = sadd.s32 %s88, 1
      %s90 = scalar_select %p87, %s88, %s89
      %p93 = pneg %p87
      %p94 = scmp.eq.s32.totalorder %s10, 1
      %p95 = por %p93, %p94
      %p96 = scmp.ne.s32.totalorder %s88, %s91
      %p97 = scmp.eq.s32.totalorder %s10, 0
      %p98 = por %p96, %p97
      %p99 = scmp.ne.s32.totalorder %s88, %s91
      %p100 = scmp.eq.s32.totalorder %s15, 1
      %p101 = por %p99, %p100
      %p102 = scmp.ne.s32.totalorder %s91, %s92
      %p103 = scmp.eq.s32.totalorder %s15, 0
      %p104 = por %p102, %p103
      %p105 = scmp.ne.s32.totalorder %s91, %s92
      %p106 = scmp.eq.s32.totalorder %s16, 1
      %p107 = por %p105, %p106
      %p109 = scmp.ne.s32.totalorder %s92, %s108
      %p110 = scmp.eq.s32.totalorder %s16, 0
      %p111 = por %p109, %p110
      %p112 = scmp.le.s32.totalorder 1, %s10
      %p113 = scmp.lt.s32.totalorder %s10, 3
      %p114 = pnand %p112, %p113
      %p115 = pneg %p114
      // Predicated region
      $region9: #{implicit_loss.3} parent=5 // pred_check
        _
      $region10: #{implicit_loss.3} parent=5 // pred_check_branch
        %117 = sbr.rel (%p114) target = $region12
      $region11: #{implicit_loss.3} parent=5 // pred_region
        %s118 = ssub.s32 %s10, 1
        // Predicated region
        $region13: #{implicit_loss.3} parent=11 // pred_check
          %p119 = pneg %p57
        $region14: #{implicit_loss.3} parent=11 // pred_check_branch
          %121 = sbr.rel (%p119) target = $region16
        $region15: #{implicit_loss.3} parent=11 // pred_region
          _
        $region16: #{implicit_loss.3} parent=11 // pred_fallthru
          _
        // Predicated region
        $region17: #{implicit_loss.3} parent=11 // pred_check
          %p122 = pneg %p78
        $region18: #{implicit_loss.3} parent=11 // pred_check_branch
          %124 = sbr.rel (%p122) target = $region20
        $region19: #{implicit_loss.3} parent=11 // pred_region
          %s126 = ssub.s32 16, 16
          %127 = vsyncadd [#allocation3], %s126
          %s129 = sshll.u32 [#allocation2], 4
          %s130 = int_to_ptr.vmem [resolvable:$true] %s129
          %132 = dma.hbm_to_vmem [thread:$0]  %s2, 16, %s130, [#allocation3]
        $region20: #{implicit_loss.3} parent=11 // pred_fallthru
          _
      $region12: #{implicit_loss.3} parent=5 // pred_fallthru
        _
      %p133 = scmp.lt.s32.totalorder %s10, 2
      // Predicated region
      $region21: #{implicit_loss.3} parent=5 // pred_check
        %p134 = pneg %p133
      $region22: #{implicit_loss.3} parent=5 // pred_check_branch
        %136 = sbr.rel (%p134) target = $region24
      $region23: #{implicit_loss.3} parent=5 // pred_region
        // Predicated region
        $region25: #{implicit_loss.3} parent=23 // pred_check
          %p137 = pneg %p30
        $region26: #{implicit_loss.3} parent=23 // pred_check_branch
          %139 = sbr.rel (%p137) target = $region28
        $region27: #{implicit_loss.3} parent=23 // pred_region
          %s140 = smul.u32 64, %s10
          %p141 = scmp.lt.s32.totalorder %s140, 127
          %s142 = scalar_select %p141, %s140, 127
          %s143 = smul.addr %s142, 4
          %s144 = scalar_lea.vmem %s0, %s143
          %s145 = smul.u32 64, %s10
        $region28: #{implicit_loss.3} parent=23 // pred_fallthru
          _
      $region24: #{implicit_loss.3} parent=5 // pred_fallthru
        _
      %p146 = scmp.le.s32.totalorder 1, %s10
      %p147 = scmp.lt.s32.totalorder %s10, 3
      %p148 = pnand %p146, %p147
      %p149 = pneg %p148
      // Predicated region
      $region29: #{implicit_loss.3} parent=5 // pred_check
        _
      $region30: #{implicit_loss.3} parent=5 // pred_check_branch
        %151 = sbr.rel (%p148) target = $region32
      $region31: #{implicit_loss.3} parent=5 // pred_region
        %s152 = ssub.s32 %s10, 1
        // Predicated region
        $region33: #{implicit_loss.3} parent=31 // pred_check
          %p153 = pneg %p78
        $region34: #{implicit_loss.3} parent=31 // pred_check_branch
          %155 = sbr.rel (%p153) target = $region36
        $region35: #{implicit_loss.3} parent=31 // pred_region
          %156 = dma.done [#allocation3], 16
        $region36: #{implicit_loss.3} parent=31 // pred_fallthru
          _
        %s157 = smul.u32 64, %s15
        %p158 = scmp.lt.s32.totalorder %s157, 127
        %s159 = scalar_select %p158, %s157, 127
        %s160 = smul.addr %s159, 4
        %s161 = scalar_lea.vmem %s0, %s160
        %p162 = pneg %p36
        %p163 = pneg %p33
        %p164 = pneg %p57
        %p165 = pneg %p54
        %p166 = pneg %p78
        %p167 = pneg %p75
        %p168 = pneg %p104
        %p169 = pneg %p101
        %s170 = smul.u32 64, %s15
        %p171 = scmp.lt.s32.totalorder %s170, 127
        %s172 = scalar_select %p171, %s170, 127
        %s173 = smul.addr %s172, 4
        %s174 = scalar_lea.vmem %s3, %s173
        %s175 = smul.u32 64, %s15
        %p176 = scmp.lt.s32.totalorder %s175, 127
        %s177 = scalar_select %p176, %s175, 127
        %s178 = smul.addr %s177, 4
        %s179 = scalar_lea.vmem %s0, %s178
        %s180 = smul.u32 64, %s15
        %s181 = smul.u32 64, %s15
        %p182 = scmp.lt.s32.totalorder %s181, 127
        %s183 = scalar_select %p182, %s181, 127
        %s184 = smul.addr %s183, 4
        %s185 = scalar_lea.vmem %s3, %s184
        %s186 = smul.u32 64, %s15
        %v188 = vld [vmem:[%s179] sm:$0xf]
        %v189 = vld [vmem:[%s179 + $0x4] sm:$0xf]
        %v190 = vld [vmem:[%s179 + $0x8] sm:$0xf]
        %v191 = vld [vmem:[%s179 + $0xc] sm:$0xf]
        %v192 = vld [vmem:[%s179 + $0x10] sm:$0xf]
        %v193 = vld [vmem:[%s179 + $0x14] sm:$0xf]
        %v194 = vld [vmem:[%s179 + $0x18] sm:$0xf]
        %v195 = vld [vmem:[%s179 + $0x1c] sm:$0xf]
        %v196 = vld [vmem:[%s179 + $0x20] sm:$0xf]
        %v197 = vld [vmem:[%s179 + $0x24] sm:$0xf]
        %v198 = vld [vmem:[%s179 + $0x28] sm:$0xf]
        %v199 = vld [vmem:[%s179 + $0x2c] sm:$0xf]
        %v200 = vld [vmem:[%s179 + $0x30] sm:$0xf]
        %v201 = vld [vmem:[%s179 + $0x34] sm:$0xf]
        %v202 = vld [vmem:[%s179 + $0x38] sm:$0xf]
        %v203 = vld [vmem:[%s179 + $0x3c] sm:$0xf]
        %v204 = vld [vmem:[%s179 + $0x40] sm:$0xf]
        %v205 = vld [vmem:[%s179 + $0x44] sm:$0xf]
        %v206 = vld [vmem:[%s179 + $0x48] sm:$0xf]
        %v207 = vld [vmem:[%s179 + $0x4c] sm:$0xf]
        %v208 = vld [vmem:[%s179 + $0x50] sm:$0xf]
        %v209 = vld [vmem:[%s179 + $0x54] sm:$0xf]
        %v210 = vld [vmem:[%s179 + $0x58] sm:$0xf]
        %v211 = vld [vmem:[%s179 + $0x5c] sm:$0xf]
        %v212 = vld [vmem:[%s179 + $0x60] sm:$0xf]
        %v213 = vld [vmem:[%s179 + $0x64] sm:$0xf]
        %v214 = vld [vmem:[%s179 + $0x68] sm:$0xf]
        %v215 = vld [vmem:[%s179 + $0x6c] sm:$0xf]
        %v216 = vld [vmem:[%s179 + $0x70] sm:$0xf]
        %v217 = vld [vmem:[%s179 + $0x74] sm:$0xf]
        %v218 = vld [vmem:[%s179 + $0x78] sm:$0xf]
        %v219 = vld [vmem:[%s179 + $0x7c] sm:$0xf]
        %v220 = vld [vmem:[%s179 + $0x80] sm:$0xf]
        %v221 = vld [vmem:[%s179 + $0x84] sm:$0xf]
        %v222 = vld [vmem:[%s179 + $0x88] sm:$0xf]
        %v223 = vld [vmem:[%s179 + $0x8c] sm:$0xf]
        %v224 = vld [vmem:[%s179 + $0x90] sm:$0xf]
        %v225 = vld [vmem:[%s179 + $0x94] sm:$0xf]
        %v226 = vld [vmem:[%s179 + $0x98] sm:$0xf]
        %v227 = vld [vmem:[%s179 + $0x9c] sm:$0xf]
        %v228 = vld [vmem:[%s179 + $0xa0] sm:$0xf]
        %v229 = vld [vmem:[%s179 + $0xa4] sm:$0xf]
        %v230 = vld [vmem:[%s179 + $0xa8] sm:$0xf]
        %v231 = vld [vmem:[%s179 + $0xac] sm:$0xf]
        %v232 = vld [vmem:[%s179 + $0xb0] sm:$0xf]
        %v233 = vld [vmem:[%s179 + $0xb4] sm:$0xf]
        %v234 = vld [vmem:[%s179 + $0xb8] sm:$0xf]
        %v235 = vld [vmem:[%s179 + $0xbc] sm:$0xf]
        %v236 = vld [vmem:[%s179 + $0xc0] sm:$0xf]
        %v237 = vld [vmem:[%s179 + $0xc4] sm:$0xf]
        %v238 = vld [vmem:[%s179 + $0xc8] sm:$0xf]
        %v239 = vld [vmem:[%s179 + $0xcc] sm:$0xf]
        %v240 = vld [vmem:[%s179 + $0xd0] sm:$0xf]
        %v241 = vld [vmem:[%s179 + $0xd4] sm:$0xf]
        %v242 = vld [vmem:[%s179 + $0xd8] sm:$0xf]
        %v243 = vld [vmem:[%s179 + $0xdc] sm:$0xf]
        %v244 = vld [vmem:[%s179 + $0xe0] sm:$0xf]
        %v245 = vld [vmem:[%s179 + $0xe4] sm:$0xf]
        %v246 = vld [vmem:[%s179 + $0xe8] sm:$0xf]
        %v247 = vld [vmem:[%s179 + $0xec] sm:$0xf]
        %v248 = vld [vmem:[%s179 + $0xf0] sm:$0xf]
        %v249 = vld [vmem:[%s179 + $0xf4] sm:$0xf]
        %v250 = vld [vmem:[%s179 + $0xf8] sm:$0xf]
        %v251 = vld [vmem:[%s179 + $0xfc] sm:$0xf]
        %v252 = vld [vmem:[%s1] sm:$0xf]
        %v253 = vld [vmem:[%s1 + $0x4] sm:$0xf]
        %v254 = vld [vmem:[%s1 + $0x8] sm:$0xf]
        %v255 = vld [vmem:[%s1 + $0xc] sm:$0xf]
        %v256 = vld [vmem:[%s1 + $0x10] sm:$0xf]
        %v257 = vld [vmem:[%s1 + $0x14] sm:$0xf]
        %v258 = vld [vmem:[%s1 + $0x18] sm:$0xf]
        %v259 = vld [vmem:[%s1 + $0x1c] sm:$0xf]
        %v260 = vld [vmem:[%s1 + $0x20] sm:$0xf]
        %v261 = vld [vmem:[%s1 + $0x24] sm:$0xf]
        %v262 = vld [vmem:[%s1 + $0x28] sm:$0xf]
        %v263 = vld [vmem:[%s1 + $0x2c] sm:$0xf]
        %v264 = vld [vmem:[%s1 + $0x30] sm:$0xf]
        %v265 = vld [vmem:[%s1 + $0x34] sm:$0xf]
        %v266 = vld [vmem:[%s1 + $0x38] sm:$0xf]
        %v267 = vld [vmem:[%s1 + $0x3c] sm:$0xf]
        %v268 = vld [vmem:[#allocation2] sm:$0x1]
        %v270 = vlaneseq
        %v271 = vshrl.u32 %v270, 7
        %v272 = vsub.s32 0, %v271
        %v273 = vrot.slane %v268, %v272
        %v339 = vunpack.c.l.b16 %v188
        %v340 = vunpack.c.l.b16 %v189
        %v341 = vunpack.c.l.b16 %v190
        %v342 = vunpack.c.l.b16 %v191
        %v343 = vunpack.c.l.b16 %v192
        %v344 = vunpack.c.l.b16 %v193
        %v345 = vunpack.c.l.b16 %v194
        %v346 = vunpack.c.l.b16 %v195
        %v347 = vunpack.c.l.b16 %v196
        %v348 = vunpack.c.l.b16 %v197
        %v349 = vunpack.c.l.b16 %v198
        %v350 = vunpack.c.l.b16 %v199
        %v351 = vunpack.c.l.b16 %v200
        %v352 = vunpack.c.l.b16 %v201
        %v353 = vunpack.c.l.b16 %v202
        %v354 = vunpack.c.l.b16 %v203
        %v355 = vunpack.c.l.b16 %v204
        %v356 = vunpack.c.l.b16 %v205
        %v357 = vunpack.c.l.b16 %v206
        %v358 = vunpack.c.l.b16 %v207
        %v359 = vunpack.c.l.b16 %v208
        %v360 = vunpack.c.l.b16 %v209
        %v361 = vunpack.c.l.b16 %v210
        %v362 = vunpack.c.l.b16 %v211
        %v363 = vunpack.c.l.b16 %v212
        %v364 = vunpack.c.l.b16 %v213
        %v365 = vunpack.c.l.b16 %v214
        %v366 = vunpack.c.l.b16 %v215
        %v367 = vunpack.c.l.b16 %v216
        %v368 = vunpack.c.l.b16 %v217
        %v369 = vunpack.c.l.b16 %v218
        %v370 = vunpack.c.l.b16 %v219
        %v371 = vunpack.c.l.b16 %v220
        %v372 = vunpack.c.l.b16 %v221
        %v373 = vunpack.c.l.b16 %v222
        %v374 = vunpack.c.l.b16 %v223
        %v375 = vunpack.c.l.b16 %v224
        %v376 = vunpack.c.l.b16 %v225
        %v377 = vunpack.c.l.b16 %v226
        %v378 = vunpack.c.l.b16 %v227
        %v379 = vunpack.c.l.b16 %v228
        %v380 = vunpack.c.l.b16 %v229
        %v381 = vunpack.c.l.b16 %v230
        %v382 = vunpack.c.l.b16 %v231
        %v383 = vunpack.c.l.b16 %v232
        %v384 = vunpack.c.l.b16 %v233
        %v385 = vunpack.c.l.b16 %v234
        %v386 = vunpack.c.l.b16 %v235
        %v387 = vunpack.c.l.b16 %v236
        %v388 = vunpack.c.l.b16 %v237
        %v389 = vunpack.c.l.b16 %v238
        %v390 = vunpack.c.l.b16 %v239
        %v391 = vunpack.c.l.b16 %v240
        %v392 = vunpack.c.l.b16 %v241
        %v393 = vunpack.c.l.b16 %v242
        %v394 = vunpack.c.l.b16 %v243
        %v395 = vunpack.c.l.b16 %v244
        %v396 = vunpack.c.l.b16 %v245
        %v397 = vunpack.c.l.b16 %v246
        %v398 = vunpack.c.l.b16 %v247
        %v399 = vunpack.c.l.b16 %v248
        %v400 = vunpack.c.l.b16 %v249
        %v401 = vunpack.c.l.b16 %v250
        %v402 = vunpack.c.l.b16 %v251
        %v403 = vpack.c.b16 %v340, %v339
        %v404 = vpack.c.b16 %v342, %v341
        %v405 = vpack.c.b16 %v344, %v343
        %v406 = vpack.c.b16 %v346, %v345
        %v407 = vpack.c.b16 %v348, %v347
        %v408 = vpack.c.b16 %v350, %v349
        %v409 = vpack.c.b16 %v352, %v351
        %v410 = vpack.c.b16 %v354, %v353
        %v411 = vpack.c.b16 %v356, %v355
        %v412 = vpack.c.b16 %v358, %v357
        %v413 = vpack.c.b16 %v360, %v359
        %v414 = vpack.c.b16 %v362, %v361
        %v415 = vpack.c.b16 %v364, %v363
        %v416 = vpack.c.b16 %v366, %v365
        %v417 = vpack.c.b16 %v368, %v367
        %v418 = vpack.c.b16 %v370, %v369
        %v419 = vpack.c.b16 %v372, %v371
        %v420 = vpack.c.b16 %v374, %v373
        %v421 = vpack.c.b16 %v376, %v375
        %v422 = vpack.c.b16 %v378, %v377
        %v423 = vpack.c.b16 %v380, %v379
        %v424 = vpack.c.b16 %v382, %v381
        %v425 = vpack.c.b16 %v384, %v383
        %v426 = vpack.c.b16 %v386, %v385
        %v427 = vpack.c.b16 %v388, %v387
        %v428 = vpack.c.b16 %v390, %v389
        %v429 = vpack.c.b16 %v392, %v391
        %v430 = vpack.c.b16 %v394, %v393
        %v431 = vpack.c.b16 %v396, %v395
        %v432 = vpack.c.b16 %v398, %v397
        %v433 = vpack.c.b16 %v400, %v399
        %v434 = vpack.c.b16 %v402, %v401
        %v483 = vunpack.c.l.b16 %v252
        %v484 = vunpack.c.l.b16 %v253
        %v485 = vunpack.c.l.b16 %v254
        %v486 = vunpack.c.l.b16 %v255
        %v487 = vunpack.c.l.b16 %v256
        %v488 = vunpack.c.l.b16 %v257
        %v489 = vunpack.c.l.b16 %v258
        %v490 = vunpack.c.l.b16 %v259
        %v491 = vunpack.c.l.b16 %v260
        %v492 = vunpack.c.l.b16 %v261
        %v493 = vunpack.c.l.b16 %v262
        %v494 = vunpack.c.l.b16 %v263
        %v495 = vunpack.c.l.b16 %v264
        %v496 = vunpack.c.l.b16 %v265
        %v497 = vunpack.c.l.b16 %v266
        %v498 = vunpack.c.l.b16 %v267
        %v499 = vpack.c.b16 %v484, %v483
        %v500 = vpack.c.b16 %v486, %v485
        %v501 = vpack.c.b16 %v488, %v487
        %v502 = vpack.c.b16 %v490, %v489
        %v503 = vpack.c.b16 %v492, %v491
        %v504 = vpack.c.b16 %v494, %v493
        %v505 = vpack.c.b16 %v496, %v495
        %v506 = vpack.c.b16 %v498, %v497
        %515 = vmatprep.subr.bf16.mxu0 0
        %516 = vmatpush1.bf16.msra.mxu0 %v499
        %517 = vmatprep.subr.bf16.mxu0 0
        %518 = vmatpush1.bf16.msra.mxu0 %v500
        %519 = vmatprep.subr.bf16.mxu0 0
        %520 = vmatpush1.bf16.msra.mxu0 %v501
        %521 = vmatprep.subr.bf16.mxu0 0
        %522 = vmatpush1.bf16.msra.mxu0 %v502
        %523 = vmatprep.subr.bf16.mxu0 0
        %524 = vmatpush1.bf16.msra.mxu0 %v503
        %525 = vmatprep.subr.bf16.mxu0 0
        %526 = vmatpush1.bf16.msra.mxu0 %v504
        %527 = vmatprep.subr.bf16.mxu0 0
        %528 = vmatpush1.bf16.msra.mxu0 %v505
        %529 = vmatprep.subr.bf16.mxu0 0
        %530 = vmatpush1.bf16.msra.mxu0 %v506
        %531 = vmatprep.subr.bf16.mxu0 0
        %532 = vmatpush1.bf16.msra.mxu0 0
        %533 = vmatprep.subr.bf16.mxu0 0
        %534 = vmatpush1.bf16.msra.mxu0 0
        %535 = vmatprep.subr.bf16.mxu0 0
        %536 = vmatpush1.bf16.msra.mxu0 0
        %537 = vmatprep.subr.bf16.mxu0 0
        %538 = vmatpush1.bf16.msra.mxu0 0
        %539 = vmatprep.subr.bf16.mxu0 0
        %540 = vmatpush1.bf16.msra.mxu0 0
        %541 = vmatprep.subr.bf16.mxu0 0
        %542 = vmatpush1.bf16.msra.mxu0 0
        %543 = vmatprep.subr.bf16.mxu0 0
        %544 = vmatpush1.bf16.msra.mxu0 0
        %545 = vmatprep.subr.bf16.mxu0 0
        %546 = vmatpush1.bf16.msra.mxu0 0
        %547 = vmatprep.mubr.bf16.mxu0 0
        %548 = vmatmul.mubr.bf16.gmra.mrb[0].mxu0 %v403
        %v549 = vpop.f32.mrb[0].mxu0
        %v550 = vadd.f32 %v273, %v549
        %v551 = vpop.f32.mrb[0].mxu0
        %v552 = vpop.f32.mrb[0].mxu0
        %v553 = vadd.f32 %v273, %v552
        %v554 = vpop.f32.mrb[0].mxu0
        %555 = vmatprep.mubr.bf16.mxu0 0
        %556 = vmatmul.mubr.bf16.gmra.mrb[0].mxu0 %v404
        %v557 = vpop.f32.mrb[0].mxu0
        %v558 = vadd.f32 %v273, %v557
        %v559 = vpop.f32.mrb[0].mxu0
        %v560 = vpop.f32.mrb[0].mxu0
        %v561 = vadd.f32 %v273, %v560
        %v562 = vpop.f32.mrb[0].mxu0
        %563 = vmatprep.mubr.bf16.mxu0 0
        %564 = vmatmul.mubr.bf16.gmra.mrb[0].mxu0 %v405
        %v565 = vpop.f32.mrb[0].mxu0
        %v566 = vadd.f32 %v273, %v565
        %v567 = vpop.f32.mrb[0].mxu0
        %v568 = vpop.f32.mrb[0].mxu0
        %v569 = vadd.f32 %v273, %v568
        %v570 = vpop.f32.mrb[0].mxu0
        %571 = vmatprep.mubr.bf16.mxu0 0
        %572 = vmatmul.mubr.bf16.gmra.mrb[0].mxu0 %v406
        %v573 = vpop.f32.mrb[0].mxu0
        %v574 = vadd.f32 %v273, %v573
        %v575 = vpop.f32.mrb[0].mxu0
        %v576 = vpop.f32.mrb[0].mxu0
        %v577 = vadd.f32 %v273, %v576
        %v578 = vpop.f32.mrb[0].mxu0
        %579 = vmatprep.mubr.bf16.mxu0 0
        %580 = vmatmul.mubr.bf16.gmra.mrb[0].mxu0 %v407
        %v581 = vpop.f32.mrb[0].mxu0
        %v582 = vadd.f32 %v273, %v581
        %v583 = vpop.f32.mrb[0].mxu0
        %v584 = vpop.f32.mrb[0].mxu0
        %v585 = vadd.f32 %v273, %v584
        %v586 = vpop.f32.mrb[0].mxu0
        %587 = vmatprep.mubr.bf16.mxu0 0
        %588 = vmatmul.mubr.bf16.gmra.mrb[0].mxu0 %v408
        %v589 = vpop.f32.mrb[0].mxu0
        %v590 = vadd.f32 %v273, %v589
        %v591 = vpop.f32.mrb[0].mxu0
        %v592 = vpop.f32.mrb[0].mxu0
        %v593 = vadd.f32 %v273, %v592
        %v594 = vpop.f32.mrb[0].mxu0
        %595 = vmatprep.mubr.bf16.mxu0 0
        %596 = vmatmul.mubr.bf16.gmra.mrb[0].mxu0 %v409
        %v597 = vpop.f32.mrb[0].mxu0
        %v598 = vadd.f32 %v273, %v597
        %v599 = vpop.f32.mrb[0].mxu0
        %v600 = vpop.f32.mrb[0].mxu0
        %v601 = vadd.f32 %v273, %v600
        %v602 = vpop.f32.mrb[0].mxu0
        %603 = vmatprep.mubr.bf16.mxu0 0
        %604 = vmatmul.mubr.bf16.gmra.mrb[0].mxu0 %v410
        %v605 = vpop.f32.mrb[0].mxu0
        %v606 = vadd.f32 %v273, %v605
        %v607 = vpop.f32.mrb[0].mxu0
        %v608 = vpop.f32.mrb[0].mxu0
        %v609 = vadd.f32 %v273, %v608
        %v610 = vpop.f32.mrb[0].mxu0
        %611 = vmatprep.mubr.bf16.mxu0 0
        %612 = vmatmul.mubr.bf16.gmra.mrb[0].mxu0 %v411
        %v613 = vpop.f32.mrb[0].mxu0
        %v614 = vadd.f32 %v273, %v613
        %v615 = vpop.f32.mrb[0].mxu0
        %v616 = vpop.f32.mrb[0].mxu0
        %v617 = vadd.f32 %v273, %v616
        %v618 = vpop.f32.mrb[0].mxu0
        %619 = vmatprep.mubr.bf16.mxu0 0
        %620 = vmatmul.mubr.bf16.gmra.mrb[0].mxu0 %v412
        %v621 = vpop.f32.mrb[0].mxu0
        %v622 = vadd.f32 %v273, %v621
        %v623 = vpop.f32.mrb[0].mxu0
        %v624 = vpop.f32.mrb[0].mxu0
        %v625 = vadd.f32 %v273, %v624
        %v626 = vpop.f32.mrb[0].mxu0
        %627 = vmatprep.mubr.bf16.mxu0 0
        %628 = vmatmul.mubr.bf16.gmra.mrb[0].mxu0 %v413
        %v629 = vpop.f32.mrb[0].mxu0
        %v630 = vadd.f32 %v273, %v629
        %v631 = vpop.f32.mrb[0].mxu0
        %v632 = vpop.f32.mrb[0].mxu0
        %v633 = vadd.f32 %v273, %v632
        %v634 = vpop.f32.mrb[0].mxu0
        %635 = vmatprep.mubr.bf16.mxu0 0
        %636 = vmatmul.mubr.bf16.gmra.mrb[0].mxu0 %v414
        %v637 = vpop.f32.mrb[0].mxu0
        %v638 = vadd.f32 %v273, %v637
        %v639 = vpop.f32.mrb[0].mxu0
        %v640 = vpop.f32.mrb[0].mxu0
        %v641 = vadd.f32 %v273, %v640
        %v642 = vpop.f32.mrb[0].mxu0
        %643 = vmatprep.mubr.bf16.mxu0 0
        %644 = vmatmul.mubr.bf16.gmra.mrb[0].mxu0 %v415
        %v645 = vpop.f32.mrb[0].mxu0
        %v646 = vadd.f32 %v273, %v645
        %v647 = vpop.f32.mrb[0].mxu0
        %v648 = vpop.f32.mrb[0].mxu0
        %v649 = vadd.f32 %v273, %v648
        %v650 = vpop.f32.mrb[0].mxu0
        %651 = vmatprep.mubr.bf16.mxu0 0
        %652 = vmatmul.mubr.bf16.gmra.mrb[0].mxu0 %v416
        %v653 = vpop.f32.mrb[0].mxu0
        %v654 = vadd.f32 %v273, %v653
        %v655 = vpop.f32.mrb[0].mxu0
        %v656 = vpop.f32.mrb[0].mxu0
        %v657 = vadd.f32 %v273, %v656
        %v658 = vpop.f32.mrb[0].mxu0
        %659 = vmatprep.mubr.bf16.mxu0 0
        %660 = vmatmul.mubr.bf16.gmra.mrb[0].mxu0 %v417
        %v661 = vpop.f32.mrb[0].mxu0
        %v662 = vadd.f32 %v273, %v661
        %v663 = vpop.f32.mrb[0].mxu0
        %v664 = vpop.f32.mrb[0].mxu0
        %v665 = vadd.f32 %v273, %v664
        %v666 = vpop.f32.mrb[0].mxu0
        %667 = vmatprep.mubr.bf16.mxu0 0
        %668 = vmatmul.mubr.bf16.gmra.mrb[0].mxu0 %v418
        %v669 = vpop.f32.mrb[0].mxu0
        %v670 = vadd.f32 %v273, %v669
        %v671 = vpop.f32.mrb[0].mxu0
        %v672 = vpop.f32.mrb[0].mxu0
        %v673 = vadd.f32 %v273, %v672
        %v674 = vpop.f32.mrb[0].mxu0
        %675 = vmatprep.mubr.bf16.mxu0 0
        %676 = vmatmul.mubr.bf16.gmra.mrb[0].mxu0 %v419
        %v677 = vpop.f32.mrb[0].mxu0
        %v678 = vadd.f32 %v273, %v677
        %v679 = vpop.f32.mrb[0].mxu0
        %v680 = vpop.f32.mrb[0].mxu0
        %v681 = vadd.f32 %v273, %v680
        %v682 = vpop.f32.mrb[0].mxu0
        %683 = vmatprep.mubr.bf16.mxu0 0
        %684 = vmatmul.mubr.bf16.gmra.mrb[0].mxu0 %v420
        %v685 = vpop.f32.mrb[0].mxu0
        %v686 = vadd.f32 %v273, %v685
        %v687 = vpop.f32.mrb[0].mxu0
        %v688 = vpop.f32.mrb[0].mxu0
        %v689 = vadd.f32 %v273, %v688
        %v690 = vpop.f32.mrb[0].mxu0
        %691 = vmatprep.mubr.bf16.mxu0 0
        %692 = vmatmul.mubr.bf16.gmra.mrb[0].mxu0 %v421
        %v693 = vpop.f32.mrb[0].mxu0
        %v694 = vadd.f32 %v273, %v693
        %v695 = vpop.f32.mrb[0].mxu0
        %v696 = vpop.f32.mrb[0].mxu0
        %v697 = vadd.f32 %v273, %v696
        %v698 = vpop.f32.mrb[0].mxu0
        %699 = vmatprep.mubr.bf16.mxu0 0
        %700 = vmatmul.mubr.bf16.gmra.mrb[0].mxu0 %v422
        %v701 = vpop.f32.mrb[0].mxu0
        %v702 = vadd.f32 %v273, %v701
        %v703 = vpop.f32.mrb[0].mxu0
        %v704 = vpop.f32.mrb[0].mxu0
        %v705 = vadd.f32 %v273, %v704
        %v706 = vpop.f32.mrb[0].mxu0
        %707 = vmatprep.mubr.bf16.mxu0 0
        %708 = vmatmul.mubr.bf16.gmra.mrb[0].mxu0 %v423
        %v709 = vpop.f32.mrb[0].mxu0
        %v710 = vadd.f32 %v273, %v709
        %v711 = vpop.f32.mrb[0].mxu0
        %v712 = vpop.f32.mrb[0].mxu0
        %v713 = vadd.f32 %v273, %v712
        %v714 = vpop.f32.mrb[0].mxu0
        %715 = vmatprep.mubr.bf16.mxu0 0
        %716 = vmatmul.mubr.bf16.gmra.mrb[0].mxu0 %v424
        %v717 = vpop.f32.mrb[0].mxu0
        %v718 = vadd.f32 %v273, %v717
        %v719 = vpop.f32.mrb[0].mxu0
        %v720 = vpop.f32.mrb[0].mxu0
        %v721 = vadd.f32 %v273, %v720
        %v722 = vpop.f32.mrb[0].mxu0
        %723 = vmatprep.mubr.bf16.mxu0 0
        %724 = vmatmul.mubr.bf16.gmra.mrb[0].mxu0 %v425
        %v725 = vpop.f32.mrb[0].mxu0
        %v726 = vadd.f32 %v273, %v725
        %v727 = vpop.f32.mrb[0].mxu0
        %v728 = vpop.f32.mrb[0].mxu0
        %v729 = vadd.f32 %v273, %v728
        %v730 = vpop.f32.mrb[0].mxu0
        %731 = vmatprep.mubr.bf16.mxu0 0
        %732 = vmatmul.mubr.bf16.gmra.mrb[0].mxu0 %v426
        %v733 = vpop.f32.mrb[0].mxu0
        %v734 = vadd.f32 %v273, %v733
        %v735 = vpop.f32.mrb[0].mxu0
        %v736 = vpop.f32.mrb[0].mxu0
        %v737 = vadd.f32 %v273, %v736
        %v738 = vpop.f32.mrb[0].mxu0
        %739 = vmatprep.mubr.bf16.mxu0 0
        %740 = vmatmul.mubr.bf16.gmra.mrb[0].mxu0 %v427
        %v741 = vpop.f32.mrb[0].mxu0
        %v742 = vadd.f32 %v273, %v741
        %v743 = vpop.f32.mrb[0].mxu0
        %v744 = vpop.f32.mrb[0].mxu0
        %v745 = vadd.f32 %v273, %v744
        %v746 = vpop.f32.mrb[0].mxu0
        %747 = vmatprep.mubr.bf16.mxu0 0
        %748 = vmatmul.mubr.bf16.gmra.mrb[0].mxu0 %v428
        %v749 = vpop.f32.mrb[0].mxu0
        %v750 = vadd.f32 %v273, %v749
        %v751 = vpop.f32.mrb[0].mxu0
        %v752 = vpop.f32.mrb[0].mxu0
        %v753 = vadd.f32 %v273, %v752
        %v754 = vpop.f32.mrb[0].mxu0
        %755 = vmatprep.mubr.bf16.mxu0 0
        %756 = vmatmul.mubr.bf16.gmra.mrb[0].mxu0 %v429
        %v757 = vpop.f32.mrb[0].mxu0
        %v758 = vadd.f32 %v273, %v757
        %v759 = vpop.f32.mrb[0].mxu0
        %v760 = vpop.f32.mrb[0].mxu0
        %v761 = vadd.f32 %v273, %v760
        %v762 = vpop.f32.mrb[0].mxu0
        %763 = vmatprep.mubr.bf16.mxu0 0
        %764 = vmatmul.mubr.bf16.gmra.mrb[0].mxu0 %v430
        %v765 = vpop.f32.mrb[0].mxu0
        %v766 = vadd.f32 %v273, %v765
        %v767 = vpop.f32.mrb[0].mxu0
        %v768 = vpop.f32.mrb[0].mxu0
        %v769 = vadd.f32 %v273, %v768
        %v770 = vpop.f32.mrb[0].mxu0
        %771 = vmatprep.mubr.bf16.mxu0 0
        %772 = vmatmul.mubr.bf16.gmra.mrb[0].mxu0 %v431
        %v773 = vpop.f32.mrb[0].mxu0
        %v774 = vadd.f32 %v273, %v773
        %v775 = vpop.f32.mrb[0].mxu0
        %v776 = vpop.f32.mrb[0].mxu0
        %v777 = vadd.f32 %v273, %v776
        %v778 = vpop.f32.mrb[0].mxu0
        %779 = vmatprep.mubr.bf16.mxu0 0
        %780 = vmatmul.mubr.bf16.gmra.mrb[0].mxu0 %v432
        %v781 = vpop.f32.mrb[0].mxu0
        %v782 = vadd.f32 %v273, %v781
        %v783 = vpop.f32.mrb[0].mxu0
        %v784 = vpop.f32.mrb[0].mxu0
        %v785 = vadd.f32 %v273, %v784
        %v786 = vpop.f32.mrb[0].mxu0
        %787 = vmatprep.mubr.bf16.mxu0 0
        %788 = vmatmul.mubr.bf16.gmra.mrb[0].mxu0 %v433
        %v789 = vpop.f32.mrb[0].mxu0
        %v790 = vadd.f32 %v273, %v789
        %v791 = vpop.f32.mrb[0].mxu0
        %v792 = vpop.f32.mrb[0].mxu0
        %v793 = vadd.f32 %v273, %v792
        %v794 = vpop.f32.mrb[0].mxu0
        %795 = vmatprep.mubr.bf16.mxu0 0
        %796 = vmatmul.mubr.bf16.gmra.mrb[0].mxu0 %v434
        %v797 = vpop.f32.mrb[0].mxu0
        %v798 = vadd.f32 %v273, %v797
        %v799 = vpop.f32.mrb[0].mxu0
        %v800 = vpop.f32.mrb[0].mxu0
        %v801 = vadd.f32 %v273, %v800
        %v802 = vpop.f32.mrb[0].mxu0
        %803 = vdwg.mxu0
        %v804 = vmax.f32 %v550, 0.0
        %v805 = vmax.f32 %v553, 0.0
        %v806 = vmax.f32 %v558, 0.0
        %v807 = vmax.f32 %v561, 0.0
        %v808 = vmax.f32 %v566, 0.0
        %v809 = vmax.f32 %v569, 0.0
        %v810 = vmax.f32 %v574, 0.0
        %v811 = vmax.f32 %v577, 0.0
        %v812 = vmax.f32 %v582, 0.0
        %v813 = vmax.f32 %v585, 0.0
        %v814 = vmax.f32 %v590, 0.0
        %v815 = vmax.f32 %v593, 0.0
        %v816 = vmax.f32 %v598, 0.0
        %v817 = vmax.f32 %v601, 0.0
        %v818 = vmax.f32 %v606, 0.0
        %v819 = vmax.f32 %v609, 0.0
        %v820 = vmax.f32 %v614, 0.0
        %v821 = vmax.f32 %v617, 0.0
        %v822 = vmax.f32 %v622, 0.0
        %v823 = vmax.f32 %v625, 0.0
        %v824 = vmax.f32 %v630, 0.0
        %v825 = vmax.f32 %v633, 0.0
        %v826 = vmax.f32 %v638, 0.0
        %v827 = vmax.f32 %v641, 0.0
        %v828 = vmax.f32 %v646, 0.0
        %v829 = vmax.f32 %v649, 0.0
        %v830 = vmax.f32 %v654, 0.0
        %v831 = vmax.f32 %v657, 0.0
        %v832 = vmax.f32 %v662, 0.0
        %v833 = vmax.f32 %v665, 0.0
        %v834 = vmax.f32 %v670, 0.0
        %v835 = vmax.f32 %v673, 0.0
        %v836 = vmax.f32 %v678, 0.0
        %v837 = vmax.f32 %v681, 0.0
        %v838 = vmax.f32 %v686, 0.0
        %v839 = vmax.f32 %v689, 0.0
        %v840 = vmax.f32 %v694, 0.0
        %v841 = vmax.f32 %v697, 0.0
        %v842 = vmax.f32 %v702, 0.0
        %v843 = vmax.f32 %v705, 0.0
        %v844 = vmax.f32 %v710, 0.0
        %v845 = vmax.f32 %v713, 0.0
        %v846 = vmax.f32 %v718, 0.0
        %v847 = vmax.f32 %v721, 0.0
        %v848 = vmax.f32 %v726, 0.0
        %v849 = vmax.f32 %v729, 0.0
        %v850 = vmax.f32 %v734, 0.0
        %v851 = vmax.f32 %v737, 0.0
        %v852 = vmax.f32 %v742, 0.0
        %v853 = vmax.f32 %v745, 0.0
        %v854 = vmax.f32 %v750, 0.0
        %v855 = vmax.f32 %v753, 0.0
        %v856 = vmax.f32 %v758, 0.0
        %v857 = vmax.f32 %v761, 0.0
        %v858 = vmax.f32 %v766, 0.0
        %v859 = vmax.f32 %v769, 0.0
        %v860 = vmax.f32 %v774, 0.0
        %v861 = vmax.f32 %v777, 0.0
        %v862 = vmax.f32 %v782, 0.0
        %v863 = vmax.f32 %v785, 0.0
        %v864 = vmax.f32 %v790, 0.0
        %v865 = vmax.f32 %v793, 0.0
        %v866 = vmax.f32 %v798, 0.0
        %v867 = vmax.f32 %v801, 0.0
        %v868 = vpack.c.bf16 %v805, %v804
        %v869 = vpack.c.bf16 %v807, %v806
        %v870 = vpack.c.bf16 %v809, %v808
        %v871 = vpack.c.bf16 %v811, %v810
        %v872 = vpack.c.bf16 %v813, %v812
        %v873 = vpack.c.bf16 %v815, %v814
        %v874 = vpack.c.bf16 %v817, %v816
        %v875 = vpack.c.bf16 %v819, %v818
        %v876 = vpack.c.bf16 %v821, %v820
        %v877 = vpack.c.bf16 %v823, %v822
        %v878 = vpack.c.bf16 %v825, %v824
        %v879 = vpack.c.bf16 %v827, %v826
        %v880 = vpack.c.bf16 %v829, %v828
        %v881 = vpack.c.bf16 %v831, %v830
        %v882 = vpack.c.bf16 %v833, %v832
        %v883 = vpack.c.bf16 %v835, %v834
        %v884 = vpack.c.bf16 %v837, %v836
        %v885 = vpack.c.bf16 %v839, %v838
        %v886 = vpack.c.bf16 %v841, %v840
        %v887 = vpack.c.bf16 %v843, %v842
        %v888 = vpack.c.bf16 %v845, %v844
        %v889 = vpack.c.bf16 %v847, %v846
        %v890 = vpack.c.bf16 %v849, %v848
        %v891 = vpack.c.bf16 %v851, %v850
        %v892 = vpack.c.bf16 %v853, %v852
        %v893 = vpack.c.bf16 %v855, %v854
        %v894 = vpack.c.bf16 %v857, %v856
        %v895 = vpack.c.bf16 %v859, %v858
        %v896 = vpack.c.bf16 %v861, %v860
        %v897 = vpack.c.bf16 %v863, %v862
        %v898 = vpack.c.bf16 %v865, %v864
        %v899 = vpack.c.bf16 %v867, %v866
        %v932 = vunpack.c.l.b16 %v868
        %v933 = vunpack.c.h.b16 %v868
        %v934 = vunpack.c.l.b16 %v869
        %v935 = vunpack.c.h.b16 %v869
        %v936 = vunpack.c.l.b16 %v870
        %v937 = vunpack.c.h.b16 %v870
        %v938 = vunpack.c.l.b16 %v871
        %v939 = vunpack.c.h.b16 %v871
        %v940 = vunpack.c.l.b16 %v872
        %v941 = vunpack.c.h.b16 %v872
        %v942 = vunpack.c.l.b16 %v873
        %v943 = vunpack.c.h.b16 %v873
        %v944 = vunpack.c.l.b16 %v874
        %v945 = vunpack.c.h.b16 %v874
        %v946 = vunpack.c.l.b16 %v875
        %v947 = vunpack.c.h.b16 %v875
        %v948 = vunpack.c.l.b16 %v876
        %v949 = vunpack.c.h.b16 %v876
        %v950 = vunpack.c.l.b16 %v877
        %v951 = vunpack.c.h.b16 %v877
        %v952 = vunpack.c.l.b16 %v878
        %v953 = vunpack.c.h.b16 %v878
        %v954 = vunpack.c.l.b16 %v879
        %v955 = vunpack.c.h.b16 %v879
        %v956 = vunpack.c.l.b16 %v880
        %v957 = vunpack.c.h.b16 %v880
        %v958 = vunpack.c.l.b16 %v881
        %v959 = vunpack.c.h.b16 %v881
        %v960 = vunpack.c.l.b16 %v882
        %v961 = vunpack.c.h.b16 %v882
        %v962 = vunpack.c.l.b16 %v883
        %v963 = vunpack.c.h.b16 %v883
        %v964 = vunpack.c.l.b16 %v884
        %v965 = vunpack.c.h.b16 %v884
        %v966 = vunpack.c.l.b16 %v885
        %v967 = vunpack.c.h.b16 %v885
        %v968 = vunpack.c.l.b16 %v886
        %v969 = vunpack.c.h.b16 %v886
        %v970 = vunpack.c.l.b16 %v887
        %v971 = vunpack.c.h.b16 %v887
        %v972 = vunpack.c.l.b16 %v888
        %v973 = vunpack.c.h.b16 %v888
        %v974 = vunpack.c.l.b16 %v889
        %v975 = vunpack.c.h.b16 %v889
        %v976 = vunpack.c.l.b16 %v890
        %v977 = vunpack.c.h.b16 %v890
        %v978 = vunpack.c.l.b16 %v891
        %v979 = vunpack.c.h.b16 %v891
        %v980 = vunpack.c.l.b16 %v892
        %v981 = vunpack.c.h.b16 %v892
        %v982 = vunpack.c.l.b16 %v893
        %v983 = vunpack.c.h.b16 %v893
        %v984 = vunpack.c.l.b16 %v894
        %v985 = vunpack.c.h.b16 %v894
        %v986 = vunpack.c.l.b16 %v895
        %v987 = vunpack.c.h.b16 %v895
        %v988 = vunpack.c.l.b16 %v896
        %v989 = vunpack.c.h.b16 %v896
        %v990 = vunpack.c.l.b16 %v897
        %v991 = vunpack.c.h.b16 %v897
        %v992 = vunpack.c.l.b16 %v898
        %v993 = vunpack.c.h.b16 %v898
        %v994 = vunpack.c.l.b16 %v899
        %v995 = vunpack.c.h.b16 %v899
        %v996 = vpack.c.b16 %v932, %v932
        %v997 = vpack.c.b16 %v933, %v933
        %v998 = vpack.c.b16 %v934, %v934
        %v999 = vpack.c.b16 %v935, %v935
        %v1000 = vpack.c.b16 %v936, %v936
        %v1001 = vpack.c.b16 %v937, %v937
        %v1002 = vpack.c.b16 %v938, %v938
        %v1003 = vpack.c.b16 %v939, %v939
        %v1004 = vpack.c.b16 %v940, %v940
        %v1005 = vpack.c.b16 %v941, %v941
        %v1006 = vpack.c.b16 %v942, %v942
        %v1007 = vpack.c.b16 %v943, %v943
        %v1008 = vpack.c.b16 %v944, %v944
        %v1009 = vpack.c.b16 %v945, %v945
        %v1010 = vpack.c.b16 %v946, %v946
        %v1011 = vpack.c.b16 %v947, %v947
        %v1012 = vpack.c.b16 %v948, %v948
        %v1013 = vpack.c.b16 %v949, %v949
        %v1014 = vpack.c.b16 %v950, %v950
        %v1015 = vpack.c.b16 %v951, %v951
        %v1016 = vpack.c.b16 %v952, %v952
        %v1017 = vpack.c.b16 %v953, %v953
        %v1018 = vpack.c.b16 %v954, %v954
        %v1019 = vpack.c.b16 %v955, %v955
        %v1020 = vpack.c.b16 %v956, %v956
        %v1021 = vpack.c.b16 %v957, %v957
        %v1022 = vpack.c.b16 %v958, %v958
        %v1023 = vpack.c.b16 %v959, %v959
        %v1024 = vpack.c.b16 %v960, %v960
        %v1025 = vpack.c.b16 %v961, %v961
        %v1026 = vpack.c.b16 %v962, %v962
        %v1027 = vpack.c.b16 %v963, %v963
        %v1028 = vpack.c.b16 %v964, %v964
        %v1029 = vpack.c.b16 %v965, %v965
        %v1030 = vpack.c.b16 %v966, %v966
        %v1031 = vpack.c.b16 %v967, %v967
        %v1032 = vpack.c.b16 %v968, %v968
        %v1033 = vpack.c.b16 %v969, %v969
        %v1034 = vpack.c.b16 %v970, %v970
        %v1035 = vpack.c.b16 %v971, %v971
        %v1036 = vpack.c.b16 %v972, %v972
        %v1037 = vpack.c.b16 %v973, %v973
        %v1038 = vpack.c.b16 %v974, %v974
        %v1039 = vpack.c.b16 %v975, %v975
        %v1040 = vpack.c.b16 %v976, %v976
        %v1041 = vpack.c.b16 %v977, %v977
        %v1042 = vpack.c.b16 %v978, %v978
        %v1043 = vpack.c.b16 %v979, %v979
        %v1044 = vpack.c.b16 %v980, %v980
        %v1045 = vpack.c.b16 %v981, %v981
        %v1046 = vpack.c.b16 %v982, %v982
        %v1047 = vpack.c.b16 %v983, %v983
        %v1048 = vpack.c.b16 %v984, %v984
        %v1049 = vpack.c.b16 %v985, %v985
        %v1050 = vpack.c.b16 %v986, %v986
        %v1051 = vpack.c.b16 %v987, %v987
        %v1052 = vpack.c.b16 %v988, %v988
        %v1053 = vpack.c.b16 %v989, %v989
        %v1054 = vpack.c.b16 %v990, %v990
        %v1055 = vpack.c.b16 %v991, %v991
        %v1056 = vpack.c.b16 %v992, %v992
        %v1057 = vpack.c.b16 %v993, %v993
        %v1058 = vpack.c.b16 %v994, %v994
        %v1059 = vpack.c.b16 %v995, %v995
        %vm1124 = vcmask 519168
        %1125 = vst.msk [vmem:[%s185] sm:$0xf] %vm1124, %v996
        %1126 = vst.msk [vmem:[%s185 + $0x4] sm:$0xf] %vm1124, %v997
        %1127 = vst.msk [vmem:[%s185 + $0x8] sm:$0xf] %vm1124, %v998
        %1128 = vst.msk [vmem:[%s185 + $0xc] sm:$0xf] %vm1124, %v999
        %1129 = vst.msk [vmem:[%s185 + $0x10] sm:$0xf] %vm1124, %v1000
        %1130 = vst.msk [vmem:[%s185 + $0x14] sm:$0xf] %vm1124, %v1001
        %1131 = vst.msk [vmem:[%s185 + $0x18] sm:$0xf] %vm1124, %v1002
        %1132 = vst.msk [vmem:[%s185 + $0x1c] sm:$0xf] %vm1124, %v1003
        %1133 = vst.msk [vmem:[%s185 + $0x20] sm:$0xf] %vm1124, %v1004
        %1134 = vst.msk [vmem:[%s185 + $0x24] sm:$0xf] %vm1124, %v1005
        %1135 = vst.msk [vmem:[%s185 + $0x28] sm:$0xf] %vm1124, %v1006
        %1136 = vst.msk [vmem:[%s185 + $0x2c] sm:$0xf] %vm1124, %v1007
        %1137 = vst.msk [vmem:[%s185 + $0x30] sm:$0xf] %vm1124, %v1008
        %1138 = vst.msk [vmem:[%s185 + $0x34] sm:$0xf] %vm1124, %v1009
        %1139 = vst.msk [vmem:[%s185 + $0x38] sm:$0xf] %vm1124, %v1010
        %1140 = vst.msk [vmem:[%s185 + $0x3c] sm:$0xf] %vm1124, %v1011
        %1141 = vst.msk [vmem:[%s185 + $0x40] sm:$0xf] %vm1124, %v1012
        %1142 = vst.msk [vmem:[%s185 + $0x44] sm:$0xf] %vm1124, %v1013
        %1143 = vst.msk [vmem:[%s185 + $0x48] sm:$0xf] %vm1124, %v1014
        %1144 = vst.msk [vmem:[%s185 + $0x4c] sm:$0xf] %vm1124, %v1015
        %1145 = vst.msk [vmem:[%s185 + $0x50] sm:$0xf] %vm1124, %v1016
        %1146 = vst.msk [vmem:[%s185 + $0x54] sm:$0xf] %vm1124, %v1017
        %1147 = vst.msk [vmem:[%s185 + $0x58] sm:$0xf] %vm1124, %v1018
        %1148 = vst.msk [vmem:[%s185 + $0x5c] sm:$0xf] %vm1124, %v1019
        %1149 = vst.msk [vmem:[%s185 + $0x60] sm:$0xf] %vm1124, %v1020
        %1150 = vst.msk [vmem:[%s185 + $0x64] sm:$0xf] %vm1124, %v1021
        %1151 = vst.msk [vmem:[%s185 + $0x68] sm:$0xf] %vm1124, %v1022
        %1152 = vst.msk [vmem:[%s185 + $0x6c] sm:$0xf] %vm1124, %v1023
        %1153 = vst.msk [vmem:[%s185 + $0x70] sm:$0xf] %vm1124, %v1024
        %1154 = vst.msk [vmem:[%s185 + $0x74] sm:$0xf] %vm1124, %v1025
        %1155 = vst.msk [vmem:[%s185 + $0x78] sm:$0xf] %vm1124, %v1026
        %1156 = vst.msk [vmem:[%s185 + $0x7c] sm:$0xf] %vm1124, %v1027
        %1157 = vst.msk [vmem:[%s185 + $0x80] sm:$0xf] %vm1124, %v1028
        %1158 = vst.msk [vmem:[%s185 + $0x84] sm:$0xf] %vm1124, %v1029
        %1159 = vst.msk [vmem:[%s185 + $0x88] sm:$0xf] %vm1124, %v1030
        %1160 = vst.msk [vmem:[%s185 + $0x8c] sm:$0xf] %vm1124, %v1031
        %1161 = vst.msk [vmem:[%s185 + $0x90] sm:$0xf] %vm1124, %v1032
        %1162 = vst.msk [vmem:[%s185 + $0x94] sm:$0xf] %vm1124, %v1033
        %1163 = vst.msk [vmem:[%s185 + $0x98] sm:$0xf] %vm1124, %v1034
        %1164 = vst.msk [vmem:[%s185 + $0x9c] sm:$0xf] %vm1124, %v1035
        %1165 = vst.msk [vmem:[%s185 + $0xa0] sm:$0xf] %vm1124, %v1036
        %1166 = vst.msk [vmem:[%s185 + $0xa4] sm:$0xf] %vm1124, %v1037
        %1167 = vst.msk [vmem:[%s185 + $0xa8] sm:$0xf] %vm1124, %v1038
        %1168 = vst.msk [vmem:[%s185 + $0xac] sm:$0xf] %vm1124, %v1039
        %1169 = vst.msk [vmem:[%s185 + $0xb0] sm:$0xf] %vm1124, %v1040
        %1170 = vst.msk [vmem:[%s185 + $0xb4] sm:$0xf] %vm1124, %v1041
        %1171 = vst.msk [vmem:[%s185 + $0xb8] sm:$0xf] %vm1124, %v1042
        %1172 = vst.msk [vmem:[%s185 + $0xbc] sm:$0xf] %vm1124, %v1043
        %1173 = vst.msk [vmem:[%s185 + $0xc0] sm:$0xf] %vm1124, %v1044
        %1174 = vst.msk [vmem:[%s185 + $0xc4] sm:$0xf] %vm1124, %v1045
        %1175 = vst.msk [vmem:[%s185 + $0xc8] sm:$0xf] %vm1124, %v1046
        %1176 = vst.msk [vmem:[%s185 + $0xcc] sm:$0xf] %vm1124, %v1047
        %1177 = vst.msk [vmem:[%s185 + $0xd0] sm:$0xf] %vm1124, %v1048
        %1178 = vst.msk [vmem:[%s185 + $0xd4] sm:$0xf] %vm1124, %v1049
        %1179 = vst.msk [vmem:[%s185 + $0xd8] sm:$0xf] %vm1124, %v1050
        %1180 = vst.msk [vmem:[%s185 + $0xdc] sm:$0xf] %vm1124, %v1051
        %1181 = vst.msk [vmem:[%s185 + $0xe0] sm:$0xf] %vm1124, %v1052
        %1182 = vst.msk [vmem:[%s185 + $0xe4] sm:$0xf] %vm1124, %v1053
        %1183 = vst.msk [vmem:[%s185 + $0xe8] sm:$0xf] %vm1124, %v1054
        %1184 = vst.msk [vmem:[%s185 + $0xec] sm:$0xf] %vm1124, %v1055
        %1185 = vst.msk [vmem:[%s185 + $0xf0] sm:$0xf] %vm1124, %v1056
        %1186 = vst.msk [vmem:[%s185 + $0xf4] sm:$0xf] %vm1124, %v1057
        %1187 = vst.msk [vmem:[%s185 + $0xf8] sm:$0xf] %vm1124, %v1058
        %1188 = vst.msk [vmem:[%s185 + $0xfc] sm:$0xf] %vm1124, %v1059
        %s1189 = smul.u32 64, %s15
        %p1190 = scmp.lt.s32.totalorder %s1189, 127
        %s1191 = scalar_select %p1190, %s1189, 127
        %s1192 = smul.addr %s1191, 4
        %s1193 = scalar_lea.vmem %s3, %s1192
        // Predicated region
        $region37: #{implicit_loss.3} parent=31 // pred_check
          %p1194 = pneg %p101
        $region38: #{implicit_loss.3} parent=31 // pred_check_branch
          %1196 = sbr.rel (%p1194) target = $region40
        $region39: #{implicit_loss.3} parent=31 // pred_region
          %s1197 = smul.u32 64, %s15
        $region40: #{implicit_loss.3} parent=31 // pred_fallthru
          _
      $region32: #{implicit_loss.3} parent=5 // pred_fallthru
        _
      %p1198 = scmp.le.s32.totalorder 2, %s10
      // Predicated region
      $region41: #{implicit_loss.3} parent=5 // pred_check
        %p1199 = pneg %p1198
      $region42: #{implicit_loss.3} parent=5 // pred_check_branch
        %1201 = sbr.rel (%p1199) target = $region44
      $region43: #{implicit_loss.3} parent=5 // pred_region
        %s1202 = ssub.s32 %s10, 2
        // Predicated region
        $region45: #{implicit_loss.3} parent=43 // pred_check
          %p1203 = pneg %p107
        $region46: #{implicit_loss.3} parent=43 // pred_check_branch
          %1205 = sbr.rel (%p1203) target = $region48
        $region47: #{implicit_loss.3} parent=43 // pred_region
          %s1206 = smul.u32 64, %s16
          %p1207 = scmp.lt.s32.totalorder %s1206, 127
          %s1208 = scalar_select %p1207, %s1206, 127
          %s1209 = smul.addr %s1208, 4
          %s1210 = scalar_lea.vmem %s3, %s1209
        $region48: #{implicit_loss.3} parent=43 // pred_fallthru
          _
      $region44: #{implicit_loss.3} parent=5 // pred_fallthru
        _
    $region6: #{implicit_loss.3} parent=1 // loop_footer
      %s14 = sadd.s32 1, %s10
    $region7: #{implicit_loss.3} parent=1 // loop_footer_branch
      %9 = sbr.rel target = $region3
    $region8: #{implicit_loss.3} parent=1 // loop_exit
      _
    %1211 = vsyncpa [#allocation3], 1
    %s1212 = scalar_lea.sflag [#allocation3], 1
    %1213 = vsyncpa %s1212, 1

// kernel: implicit_loss.4
$region0: #{implicit_loss.4}
  #allocation0 [shape = 'u32[]', space=smem, size = 0x4, offset = 0x4, fixed_abs, tag = 'smem constant byte address 0x4 - core index']
  #allocation1 [shape = 'u32[144,128]{1,0:T(1,128)}', space=vmem, size = 0x12000, scoped, tag = 'internal scratch']
  %s0 = inlined_call_operand.vmem [shape: bf16[1024,640], index: 0, kind: input, shape index: {}]
  %s1 = inlined_call_operand.vmem [shape: bf16[640,64], index: 1, kind: input, shape index: {}]
  %s2 = inlined_call_operand.vmem [shape: f32[1,64], index: 2, kind: input, shape index: {}]
  %s3 = inlined_call_operand.vmem [shape: bf16[1024,64], index: 3, kind: output, shape index: {}]
  %s4 = sld [smem:[#allocation0]]
  $region45: #{implicit_loss.4} parent=0
    _
  %s6 = ssub.s32 1, %s4
  %s7 = scalar_select 0, %s6, %s4
  loop: start=0, step=1, limit=4
  $region2: #{implicit_loss.4} parent=0 // loop_pre_header
    _
  $region3: #{implicit_loss.4} parent=0 // loop_header
    %s9 = sphi 0, %s13
    %p10 = scmp.ge.s32.totalorder %s9, 4
    %s19 = sphi 0, %s21
    %s22 = sphi 0, %s19
    %s23 = sphi 0, %s22
    %s39 = sphi 0, %s23
    %s43 = sphi 0, %s43
    %s45 = sphi 0, %s43
    %s46 = sphi 0, %s45
    %s60 = sphi 0, %s46
    %s64 = sphi 0, %s64
    %s66 = sphi 0, %s64
    %s67 = sphi 0, %s66
    %s81 = sphi 0, %s67
    %s87 = sphi 0, %s89
    %s90 = sphi 0, %s87
    %s91 = sphi 0, %s90
    %s107 = sphi 0, %s91
  $region4: #{implicit_loss.4} parent=0 // loop_header_branch
    %12 = sbr.rel (%p10) target = $region8
  $region5: #{implicit_loss.4} parent=0 // loop_body
    %s14 = ssub.s32 %s9, 1
    %s15 = ssub.s32 %s9, 2
    %s16 = sadd.s32 %s9, 1
    %s17 = ssub.s32 %s9, %s16
    %p18 = scmp.eq.s32.totalorder %s17, 0
    %s20 = sadd.s32 %s19, 1
    %s21 = scalar_select %p18, %s19, %s20
    %p24 = pneg %p18
    %p25 = scmp.eq.s32.totalorder %s9, 1
    %p26 = por %p24, %p25
    %p27 = scmp.ne.s32.totalorder %s19, %s22
    %p28 = scmp.eq.s32.totalorder %s9, 0
    %p29 = por %p27, %p28
    %p30 = scmp.ne.s32.totalorder %s19, %s22
    %p31 = scmp.eq.s32.totalorder %s14, 1
    %p32 = por %p30, %p31
    %p33 = scmp.ne.s32.totalorder %s22, %s23
    %p34 = scmp.eq.s32.totalorder %s14, 0
    %p35 = por %p33, %p34
    %p36 = scmp.ne.s32.totalorder %s22, %s23
    %p37 = scmp.eq.s32.totalorder %s15, 1
    %p38 = por %p36, %p37
    %p40 = scmp.ne.s32.totalorder %s23, %s39
    %p41 = scmp.eq.s32.totalorder %s15, 0
    %p42 = por %p40, %p41
    %s44 = sadd.s32 %s43, 1
    %p47 = scmp.eq.s32.totalorder %s9, 1
    %p48 = scmp.ne.s32.totalorder %s43, %s45
    %p49 = scmp.eq.s32.totalorder %s9, 0
    %p50 = por %p48, %p49
    %p51 = scmp.ne.s32.totalorder %s43, %s45
    %p52 = scmp.eq.s32.totalorder %s14, 1
    %p53 = por %p51, %p52
    %p54 = scmp.ne.s32.totalorder %s45, %s46
    %p55 = scmp.eq.s32.totalorder %s14, 0
    %p56 = por %p54, %p55
    %p57 = scmp.ne.s32.totalorder %s45, %s46
    %p58 = scmp.eq.s32.totalorder %s15, 1
    %p59 = por %p57, %p58
    %p61 = scmp.ne.s32.totalorder %s46, %s60
    %p62 = scmp.eq.s32.totalorder %s15, 0
    %p63 = por %p61, %p62
    %s65 = sadd.s32 %s64, 1
    %p68 = scmp.eq.s32.totalorder %s9, 1
    %p69 = scmp.ne.s32.totalorder %s64, %s66
    %p70 = scmp.eq.s32.totalorder %s9, 0
    %p71 = por %p69, %p70
    %p72 = scmp.ne.s32.totalorder %s64, %s66
    %p73 = scmp.eq.s32.totalorder %s14, 1
    %p74 = por %p72, %p73
    %p75 = scmp.ne.s32.totalorder %s66, %s67
    %p76 = scmp.eq.s32.totalorder %s14, 0
    %p77 = por %p75, %p76
    %p78 = scmp.ne.s32.totalorder %s66, %s67
    %p79 = scmp.eq.s32.totalorder %s15, 1
    %p80 = por %p78, %p79
    %p82 = scmp.ne.s32.totalorder %s67, %s81
    %p83 = scmp.eq.s32.totalorder %s15, 0
    %p84 = por %p82, %p83
    %s85 = ssub.s32 %s9, %s16
    %p86 = scmp.eq.s32.totalorder %s85, 0
    %s88 = sadd.s32 %s87, 1
    %s89 = scalar_select %p86, %s87, %s88
    %p92 = pneg %p86
    %p93 = scmp.eq.s32.totalorder %s9, 1
    %p94 = por %p92, %p93
    %p95 = scmp.ne.s32.totalorder %s87, %s90
    %p96 = scmp.eq.s32.totalorder %s9, 0
    %p97 = por %p95, %p96
    %p98 = scmp.ne.s32.totalorder %s87, %s90
    %p99 = scmp.eq.s32.totalorder %s14, 1
    %p100 = por %p98, %p99
    %p101 = scmp.ne.s32.totalorder %s90, %s91
    %p102 = scmp.eq.s32.totalorder %s14, 0
    %p103 = por %p101, %p102
    %p104 = scmp.ne.s32.totalorder %s90, %s91
    %p105 = scmp.eq.s32.totalorder %s15, 1
    %p106 = por %p104, %p105
    %p108 = scmp.ne.s32.totalorder %s91, %s107
    %p109 = scmp.eq.s32.totalorder %s15, 0
    %p110 = por %p108, %p109
    %p111 = scmp.le.s32.totalorder 1, %s9
    %p112 = scmp.lt.s32.totalorder %s9, 3
    %p113 = pnand %p111, %p112
    %p114 = pneg %p113
    // Predicated region
    $region9: #{implicit_loss.4} parent=5 // pred_check
      _
    $region10: #{implicit_loss.4} parent=5 // pred_check_branch
      %116 = sbr.rel (%p113) target = $region12
    $region11: #{implicit_loss.4} parent=5 // pred_region
      %s117 = ssub.s32 %s9, 1
      // Predicated region
      $region13: #{implicit_loss.4} parent=11 // pred_check
        %p118 = pneg %p56
      $region14: #{implicit_loss.4} parent=11 // pred_check_branch
        %120 = sbr.rel (%p118) target = $region16
      $region15: #{implicit_loss.4} parent=11 // pred_region
        _
      $region16: #{implicit_loss.4} parent=11 // pred_fallthru
        _
      // Predicated region
      $region17: #{implicit_loss.4} parent=11 // pred_check
        %p121 = pneg %p77
      $region18: #{implicit_loss.4} parent=11 // pred_check_branch
        %123 = sbr.rel (%p121) target = $region20
      $region19: #{implicit_loss.4} parent=11 // pred_region
        _
      $region20: #{implicit_loss.4} parent=11 // pred_fallthru
        _
    $region12: #{implicit_loss.4} parent=5 // pred_fallthru
      _
    %p124 = scmp.lt.s32.totalorder %s9, 2
    // Predicated region
    $region21: #{implicit_loss.4} parent=5 // pred_check
      %p125 = pneg %p124
    $region22: #{implicit_loss.4} parent=5 // pred_check_branch
      %127 = sbr.rel (%p125) target = $region24
    $region23: #{implicit_loss.4} parent=5 // pred_region
      // Predicated region
      $region25: #{implicit_loss.4} parent=23 // pred_check
        %p128 = pneg %p29
      $region26: #{implicit_loss.4} parent=23 // pred_check_branch
        %130 = sbr.rel (%p128) target = $region28
      $region27: #{implicit_loss.4} parent=23 // pred_region
        %s131 = smul.u32 64, %s9
        %p132 = scmp.lt.s32.totalorder %s131, 127
        %s133 = scalar_select %p132, %s131, 127
        %s134 = smul.addr %s133, 5
        %s135 = smul.addr %s134, 4
        %s136 = scalar_lea.vmem %s0, %s135
        %s137 = smul.u32 64, %s9
      $region28: #{implicit_loss.4} parent=23 // pred_fallthru
        _
    $region24: #{implicit_loss.4} parent=5 // pred_fallthru
      _
    %p138 = scmp.le.s32.totalorder 1, %s9
    %p139 = scmp.lt.s32.totalorder %s9, 3
    %p140 = pnand %p138, %p139
    %p141 = pneg %p140
    // Predicated region
    $region29: #{implicit_loss.4} parent=5 // pred_check
      _
    $region30: #{implicit_loss.4} parent=5 // pred_check_branch
      %143 = sbr.rel (%p140) target = $region32
    $region31: #{implicit_loss.4} parent=5 // pred_region
      %s144 = ssub.s32 %s9, 1
      %s145 = smul.u32 64, %s14
      %p146 = scmp.lt.s32.totalorder %s145, 127
      %s147 = scalar_select %p146, %s145, 127
      %s148 = smul.addr %s147, 5
      %s149 = smul.addr %s148, 4
      %s150 = scalar_lea.vmem %s0, %s149
      %p151 = pneg %p35
      %p152 = pneg %p32
      %p153 = pneg %p56
      %p154 = pneg %p53
      %p155 = pneg %p77
      %p156 = pneg %p74
      %p157 = pneg %p103
      %p158 = pneg %p100
      %s159 = smul.u32 64, %s14
      %p160 = scmp.lt.s32.totalorder %s159, 127
      %s161 = scalar_select %p160, %s159, 127
      %s162 = smul.addr %s161, 4
      %s163 = scalar_lea.vmem %s3, %s162
      %s164 = smul.u32 64, %s14
      %p165 = scmp.lt.s32.totalorder %s164, 127
      %s166 = scalar_select %p165, %s164, 127
      %s167 = smul.addr %s166, 5
      %s168 = smul.addr %s167, 4
      %s169 = scalar_lea.vmem %s0, %s168
      %s170 = smul.u32 64, %s14
      %s171 = smul.u32 64, %s14
      %p172 = scmp.lt.s32.totalorder %s171, 127
      %s173 = scalar_select %p172, %s171, 127
      %s174 = smul.addr %s173, 4
      %s175 = scalar_lea.vmem %s3, %s174
      %s176 = smul.u32 64, %s14
      %v178 = vld [vmem:[%s169] sm:$0xff]
      %v179 = vld [vmem:[%s169 + $0x8] sm:$0xff]
      %v180 = vld [vmem:[%s169 + $0x10] sm:$0xf]
      %v181 = vld [vmem:[%s169 + $0x14] sm:$0xff]
      %v182 = vld [vmem:[%s169 + $0x1c] sm:$0xff]
      %v183 = vld [vmem:[%s169 + $0x24] sm:$0xf]
      %v184 = vld [vmem:[%s169 + $0x28] sm:$0xff]
      %v185 = vld [vmem:[%s169 + $0x30] sm:$0xff]
      %v186 = vld [vmem:[%s169 + $0x38] sm:$0xf]
      %v187 = vld [vmem:[%s169 + $0x3c] sm:$0xff]
      %v188 = vld [vmem:[%s169 + $0x44] sm:$0xff]
      %v189 = vld [vmem:[%s169 + $0x4c] sm:$0xf]
      %v190 = vld [vmem:[%s169 + $0x50] sm:$0xff]
      %v191 = vld [vmem:[%s169 + $0x58] sm:$0xff]
      %v192 = vld [vmem:[%s169 + $0x60] sm:$0xf]
      %v193 = vld [vmem:[%s169 + $0x64] sm:$0xff]
      %v194 = vld [vmem:[%s169 + $0x6c] sm:$0xff]
      %v195 = vld [vmem:[%s169 + $0x74] sm:$0xf]
      %v196 = vld [vmem:[%s169 + $0x78] sm:$0xff]
      %v197 = vld [vmem:[%s169 + $0x80] sm:$0xff]
      %v198 = vld [vmem:[%s169 + $0x88] sm:$0xf]
      %v199 = vld [vmem:[%s169 + $0x8c] sm:$0xff]
      %v200 = vld [vmem:[%s169 + $0x94] sm:$0xff]
      %v201 = vld [vmem:[%s169 + $0x9c] sm:$0xf]
      %v202 = vld [vmem:[%s169 + $0xa0] sm:$0xff]
      %v203 = vld [vmem:[%s169 + $0xa8] sm:$0xff]
      %v204 = vld [vmem:[%s169 + $0xb0] sm:$0xf]
      %v205 = vld [vmem:[%s169 + $0xb4] sm:$0xff]
      %v206 = vld [vmem:[%s169 + $0xbc] sm:$0xff]
      %v207 = vld [vmem:[%s169 + $0xc4] sm:$0xf]
      %v208 = vld [vmem:[%s169 + $0xc8] sm:$0xff]
      %v209 = vld [vmem:[%s169 + $0xd0] sm:$0xff]
      %v210 = vld [vmem:[%s169 + $0xd8] sm:$0xf]
      %v211 = vld [vmem:[%s169 + $0xdc] sm:$0xff]
      %v212 = vld [vmem:[%s169 + $0xe4] sm:$0xff]
      %v213 = vld [vmem:[%s169 + $0xec] sm:$0xf]
      %v214 = vld [vmem:[%s169 + $0xf0] sm:$0xff]
      %v215 = vld [vmem:[%s169 + $0xf8] sm:$0xff]
      %v216 = vld [vmem:[%s169 + $0x100] sm:$0xf]
      %v217 = vld [vmem:[%s169 + $0x104] sm:$0xff]
      %v218 = vld [vmem:[%s169 + $0x10c] sm:$0xff]
      %v219 = vld [vmem:[%s169 + $0x114] sm:$0xf]
      %v220 = vld [vmem:[%s169 + $0x118] sm:$0xff]
      %v221 = vld [vmem:[%s169 + $0x120] sm:$0xff]
      %v222 = vld [vmem:[%s169 + $0x128] sm:$0xf]
      %v223 = vld [vmem:[%s169 + $0x12c] sm:$0xff]
      %v224 = vld [vmem:[%s169 + $0x134] sm:$0xff]
      %v225 = vld [vmem:[%s169 + $0x13c] sm:$0xf]
      %v226 = vld [vmem:[%s169 + $0x140] sm:$0xff]
      %v227 = vld [vmem:[%s169 + $0x148] sm:$0xff]
      %v228 = vld [vmem:[%s169 + $0x150] sm:$0xf]
      %v229 = vld [vmem:[%s169 + $0x154] sm:$0xff]
      %v230 = vld [vmem:[%s169 + $0x15c] sm:$0xff]
      %v231 = vld [vmem:[%s169 + $0x164] sm:$0xf]
      %v232 = vld [vmem:[%s169 + $0x168] sm:$0xff]
      %v233 = vld [vmem:[%s169 + $0x170] sm:$0xff]
      %v234 = vld [vmem:[%s169 + $0x178] sm:$0xf]
      %v235 = vld [vmem:[%s169 + $0x17c] sm:$0xff]
      %v236 = vld [vmem:[%s169 + $0x184] sm:$0xff]
      %v237 = vld [vmem:[%s169 + $0x18c] sm:$0xf]
      %v238 = vld [vmem:[%s169 + $0x190] sm:$0xff]
      %v239 = vld [vmem:[%s169 + $0x198] sm:$0xff]
      %v240 = vld [vmem:[%s169 + $0x1a0] sm:$0xf]
      %v241 = vld [vmem:[%s169 + $0x1a4] sm:$0xff]
      %v242 = vld [vmem:[%s169 + $0x1ac] sm:$0xff]
      %v243 = vld [vmem:[%s169 + $0x1b4] sm:$0xf]
      %v244 = vld [vmem:[%s169 + $0x1b8] sm:$0xff]
      %v245 = vld [vmem:[%s169 + $0x1c0] sm:$0xff]
      %v246 = vld [vmem:[%s169 + $0x1c8] sm:$0xf]
      %v247 = vld [vmem:[%s169 + $0x1cc] sm:$0xff]
      %v248 = vld [vmem:[%s169 + $0x1d4] sm:$0xff]
      %v249 = vld [vmem:[%s169 + $0x1dc] sm:$0xf]
      %v250 = vld [vmem:[%s169 + $0x1e0] sm:$0xff]
      %v251 = vld [vmem:[%s169 + $0x1e8] sm:$0xff]
      %v252 = vld [vmem:[%s169 + $0x1f0] sm:$0xf]
      %v253 = vld [vmem:[%s169 + $0x1f4] sm:$0xff]
      %v254 = vld [vmem:[%s169 + $0x1fc] sm:$0xff]
      %v255 = vld [vmem:[%s169 + $0x204] sm:$0xf]
      %v256 = vld [vmem:[%s169 + $0x208] sm:$0xff]
      %v257 = vld [vmem:[%s169 + $0x210] sm:$0xff]
      %v258 = vld [vmem:[%s169 + $0x218] sm:$0xf]
      %v259 = vld [vmem:[%s169 + $0x21c] sm:$0xff]
      %v260 = vld [vmem:[%s169 + $0x224] sm:$0xff]
      %v261 = vld [vmem:[%s169 + $0x22c] sm:$0xf]
      %v262 = vld [vmem:[%s169 + $0x230] sm:$0xff]
      %v263 = vld [vmem:[%s169 + $0x238] sm:$0xff]
      %v264 = vld [vmem:[%s169 + $0x240] sm:$0xf]
      %v265 = vld [vmem:[%s169 + $0x244] sm:$0xff]
      %v266 = vld [vmem:[%s169 + $0x24c] sm:$0xff]
      %v267 = vld [vmem:[%s169 + $0x254] sm:$0xf]
      %v268 = vld [vmem:[%s169 + $0x258] sm:$0xff]
      %v269 = vld [vmem:[%s169 + $0x260] sm:$0xff]
      %v270 = vld [vmem:[%s169 + $0x268] sm:$0xf]
      %v271 = vld [vmem:[%s169 + $0x26c] sm:$0xff]
      %v272 = vld [vmem:[%s169 + $0x274] sm:$0xff]
      %v273 = vld [vmem:[%s169 + $0x27c] sm:$0xf]
      %v274 = vld [vmem:[%s169 + $0x280] sm:$0xff]
      %v275 = vld [vmem:[%s169 + $0x288] sm:$0xff]
      %v276 = vld [vmem:[%s169 + $0x290] sm:$0xf]
      %v277 = vld [vmem:[%s169 + $0x294] sm:$0xff]
      %v278 = vld [vmem:[%s169 + $0x29c] sm:$0xff]
      %v279 = vld [vmem:[%s169 + $0x2a4] sm:$0xf]
      %v280 = vld [vmem:[%s169 + $0x2a8] sm:$0xff]
      %v281 = vld [vmem:[%s169 + $0x2b0] sm:$0xff]
      %v282 = vld [vmem:[%s169 + $0x2b8] sm:$0xf]
      %v283 = vld [vmem:[%s169 + $0x2bc] sm:$0xff]
      %v284 = vld [vmem:[%s169 + $0x2c4] sm:$0xff]
      %v285 = vld [vmem:[%s169 + $0x2cc] sm:$0xf]
      %v286 = vld [vmem:[%s169 + $0x2d0] sm:$0xff]
      %v287 = vld [vmem:[%s169 + $0x2d8] sm:$0xff]
      %v288 = vld [vmem:[%s169 + $0x2e0] sm:$0xf]
      %v289 = vld [vmem:[%s169 + $0x2e4] sm:$0xff]
      %v290 = vld [vmem:[%s169 + $0x2ec] sm:$0xff]
      %v291 = vld [vmem:[%s169 + $0x2f4] sm:$0xf]
      %v292 = vld [vmem:[%s169 + $0x2f8] sm:$0xff]
      %v293 = vld [vmem:[%s169 + $0x300] sm:$0xff]
      %v294 = vld [vmem:[%s169 + $0x308] sm:$0xf]
      %v295 = vld [vmem:[%s169 + $0x30c] sm:$0xff]
      %v296 = vld [vmem:[%s169 + $0x314] sm:$0xff]
      %v297 = vld [vmem:[%s169 + $0x31c] sm:$0xf]
      %v298 = vld [vmem:[%s169 + $0x320] sm:$0xff]
      %v299 = vld [vmem:[%s169 + $0x328] sm:$0xff]
      %v300 = vld [vmem:[%s169 + $0x330] sm:$0xf]
      %v301 = vld [vmem:[%s169 + $0x334] sm:$0xff]
      %v302 = vld [vmem:[%s169 + $0x33c] sm:$0xff]
      %v303 = vld [vmem:[%s169 + $0x344] sm:$0xf]
      %v304 = vld [vmem:[%s169 + $0x348] sm:$0xff]
      %v305 = vld [vmem:[%s169 + $0x350] sm:$0xff]
      %v306 = vld [vmem:[%s169 + $0x358] sm:$0xf]
      %v307 = vld [vmem:[%s169 + $0x35c] sm:$0xff]
      %v308 = vld [vmem:[%s169 + $0x364] sm:$0xff]
      %v309 = vld [vmem:[%s169 + $0x36c] sm:$0xf]
      %v310 = vld [vmem:[%s169 + $0x370] sm:$0xff]
      %v311 = vld [vmem:[%s169 + $0x378] sm:$0xff]
      %v312 = vld [vmem:[%s169 + $0x380] sm:$0xf]
      %v313 = vld [vmem:[%s169 + $0x384] sm:$0xff]
      %v314 = vld [vmem:[%s169 + $0x38c] sm:$0xff]
      %v315 = vld [vmem:[%s169 + $0x394] sm:$0xf]
      %v316 = vld [vmem:[%s169 + $0x398] sm:$0xff]
      %v317 = vld [vmem:[%s169 + $0x3a0] sm:$0xff]
      %v318 = vld [vmem:[%s169 + $0x3a8] sm:$0xf]
      %v319 = vld [vmem:[%s169 + $0x3ac] sm:$0xff]
      %v320 = vld [vmem:[%s169 + $0x3b4] sm:$0xff]
      %v321 = vld [vmem:[%s169 + $0x3bc] sm:$0xf]
      %v322 = vld [vmem:[%s169 + $0x3c0] sm:$0xff]
      %v323 = vld [vmem:[%s169 + $0x3c8] sm:$0xff]
      %v324 = vld [vmem:[%s169 + $0x3d0] sm:$0xf]
      %v325 = vld [vmem:[%s169 + $0x3d4] sm:$0xff]
      %v326 = vld [vmem:[%s169 + $0x3dc] sm:$0xff]
      %v327 = vld [vmem:[%s169 + $0x3e4] sm:$0xf]
      %v328 = vld [vmem:[%s169 + $0x3e8] sm:$0xff]
      %v329 = vld [vmem:[%s169 + $0x3f0] sm:$0xff]
      %v330 = vld [vmem:[%s169 + $0x3f8] sm:$0xf]
      %v331 = vld [vmem:[%s169 + $0x3fc] sm:$0xff]
      %v332 = vld [vmem:[%s169 + $0x404] sm:$0xff]
      %v333 = vld [vmem:[%s169 + $0x40c] sm:$0xf]
      %v334 = vld [vmem:[%s169 + $0x410] sm:$0xff]
      %v335 = vld [vmem:[%s169 + $0x418] sm:$0xff]
      %v336 = vld [vmem:[%s169 + $0x420] sm:$0xf]
      %v337 = vld [vmem:[%s169 + $0x424] sm:$0xff]
      %v338 = vld [vmem:[%s169 + $0x42c] sm:$0xff]
      %v339 = vld [vmem:[%s169 + $0x434] sm:$0xf]
      %v340 = vld [vmem:[%s169 + $0x438] sm:$0xff]
      %v341 = vld [vmem:[%s169 + $0x440] sm:$0xff]
      %v342 = vld [vmem:[%s169 + $0x448] sm:$0xf]
      %v343 = vld [vmem:[%s169 + $0x44c] sm:$0xff]
      %v344 = vld [vmem:[%s169 + $0x454] sm:$0xff]
      %v345 = vld [vmem:[%s169 + $0x45c] sm:$0xf]
      %v346 = vld [vmem:[%s169 + $0x460] sm:$0xff]
      %v347 = vld [vmem:[%s169 + $0x468] sm:$0xff]
      %v348 = vld [vmem:[%s169 + $0x470] sm:$0xf]
      %v349 = vld [vmem:[%s169 + $0x474] sm:$0xff]
      %v350 = vld [vmem:[%s169 + $0x47c] sm:$0xff]
      %v351 = vld [vmem:[%s169 + $0x484] sm:$0xf]
      %v352 = vld [vmem:[%s169 + $0x488] sm:$0xff]
      %v353 = vld [vmem:[%s169 + $0x490] sm:$0xff]
      %v354 = vld [vmem:[%s169 + $0x498] sm:$0xf]
      %v355 = vld [vmem:[%s169 + $0x49c] sm:$0xff]
      %v356 = vld [vmem:[%s169 + $0x4a4] sm:$0xff]
      %v357 = vld [vmem:[%s169 + $0x4ac] sm:$0xf]
      %v358 = vld [vmem:[%s169 + $0x4b0] sm:$0xff]
      %v359 = vld [vmem:[%s169 + $0x4b8] sm:$0xff]
      %v360 = vld [vmem:[%s169 + $0x4c0] sm:$0xf]
      %v361 = vld [vmem:[%s169 + $0x4c4] sm:$0xff]
      %v362 = vld [vmem:[%s169 + $0x4cc] sm:$0xff]
      %v363 = vld [vmem:[%s169 + $0x4d4] sm:$0xf]
      %v364 = vld [vmem:[%s169 + $0x4d8] sm:$0xff]
      %v365 = vld [vmem:[%s169 + $0x4e0] sm:$0xff]
      %v366 = vld [vmem:[%s169 + $0x4e8] sm:$0xf]
      %v367 = vld [vmem:[%s169 + $0x4ec] sm:$0xff]
      %v368 = vld [vmem:[%s169 + $0x4f4] sm:$0xff]
      %v369 = vld [vmem:[%s169 + $0x4fc] sm:$0xf]
      %v370 = vld [vmem:[%s1] sm:$0xf]
      %v371 = vld [vmem:[%s1 + $0x4] sm:$0xf]
      %v372 = vld [vmem:[%s1 + $0x8] sm:$0xf]
      %v373 = vld [vmem:[%s1 + $0xc] sm:$0xf]
      %v374 = vld [vmem:[%s1 + $0x10] sm:$0xf]
      %v375 = vld [vmem:[%s1 + $0x14] sm:$0xf]
      %v376 = vld [vmem:[%s1 + $0x18] sm:$0xf]
      %v377 = vld [vmem:[%s1 + $0x1c] sm:$0xf]
      %v378 = vld [vmem:[%s1 + $0x20] sm:$0xf]
      %v379 = vld [vmem:[%s1 + $0x24] sm:$0xf]
      %v380 = vld [vmem:[%s1 + $0x28] sm:$0xf]
      %v381 = vld [vmem:[%s1 + $0x2c] sm:$0xf]
      %v382 = vld [vmem:[%s1 + $0x30] sm:$0xf]
      %v383 = vld [vmem:[%s1 + $0x34] sm:$0xf]
      %v384 = vld [vmem:[%s1 + $0x38] sm:$0xf]
      %v385 = vld [vmem:[%s1 + $0x3c] sm:$0xf]
      %v386 = vld [vmem:[%s1 + $0x40] sm:$0xf]
      %v387 = vld [vmem:[%s1 + $0x44] sm:$0xf]
      %v388 = vld [vmem:[%s1 + $0x48] sm:$0xf]
      %v389 = vld [vmem:[%s1 + $0x4c] sm:$0xf]
      %v390 = vld [vmem:[%s1 + $0x50] sm:$0xf]
      %v391 = vld [vmem:[%s1 + $0x54] sm:$0xf]
      %v392 = vld [vmem:[%s1 + $0x58] sm:$0xf]
      %v393 = vld [vmem:[%s1 + $0x5c] sm:$0xf]
      %v394 = vld [vmem:[%s1 + $0x60] sm:$0xf]
      %v395 = vld [vmem:[%s1 + $0x64] sm:$0xf]
      %v396 = vld [vmem:[%s1 + $0x68] sm:$0xf]
      %v397 = vld [vmem:[%s1 + $0x6c] sm:$0xf]
      %v398 = vld [vmem:[%s1 + $0x70] sm:$0xf]
      %v399 = vld [vmem:[%s1 + $0x74] sm:$0xf]
      %v400 = vld [vmem:[%s1 + $0x78] sm:$0xf]
      %v401 = vld [vmem:[%s1 + $0x7c] sm:$0xf]
      %v402 = vld [vmem:[%s1 + $0x80] sm:$0xf]
      %v403 = vld [vmem:[%s1 + $0x84] sm:$0xf]
      %v404 = vld [vmem:[%s1 + $0x88] sm:$0xf]
      %v405 = vld [vmem:[%s1 + $0x8c] sm:$0xf]
      %v406 = vld [vmem:[%s1 + $0x90] sm:$0xf]
      %v407 = vld [vmem:[%s1 + $0x94] sm:$0xf]
      %v408 = vld [vmem:[%s1 + $0x98] sm:$0xf]
      %v409 = vld [vmem:[%s1 + $0x9c] sm:$0xf]
      %v410 = vld [vmem:[%s1 + $0xa0] sm:$0xf]
      %v411 = vld [vmem:[%s1 + $0xa4] sm:$0xf]
      %v412 = vld [vmem:[%s1 + $0xa8] sm:$0xf]
      %v413 = vld [vmem:[%s1 + $0xac] sm:$0xf]
      %v414 = vld [vmem:[%s1 + $0xb0] sm:$0xf]
      %v415 = vld [vmem:[%s1 + $0xb4] sm:$0xf]
      %v416 = vld [vmem:[%s1 + $0xb8] sm:$0xf]
      %v417 = vld [vmem:[%s1 + $0xbc] sm:$0xf]
      %v418 = vld [vmem:[%s1 + $0xc0] sm:$0xf]
      %v419 = vld [vmem:[%s1 + $0xc4] sm:$0xf]
      %v420 = vld [vmem:[%s1 + $0xc8] sm:$0xf]
      %v421 = vld [vmem:[%s1 + $0xcc] sm:$0xf]
      %v422 = vld [vmem:[%s1 + $0xd0] sm:$0xf]
      %v423 = vld [vmem:[%s1 + $0xd4] sm:$0xf]
      %v424 = vld [vmem:[%s1 + $0xd8] sm:$0xf]
      %v425 = vld [vmem:[%s1 + $0xdc] sm:$0xf]
      %v426 = vld [vmem:[%s1 + $0xe0] sm:$0xf]
      %v427 = vld [vmem:[%s1 + $0xe4] sm:$0xf]
      %v428 = vld [vmem:[%s1 + $0xe8] sm:$0xf]
      %v429 = vld [vmem:[%s1 + $0xec] sm:$0xf]
      %v430 = vld [vmem:[%s1 + $0xf0] sm:$0xf]
      %v431 = vld [vmem:[%s1 + $0xf4] sm:$0xf]
      %v432 = vld [vmem:[%s1 + $0xf8] sm:$0xf]
      %v433 = vld [vmem:[%s1 + $0xfc] sm:$0xf]
      %v434 = vld [vmem:[%s1 + $0x100] sm:$0xf]
      %v435 = vld [vmem:[%s1 + $0x104] sm:$0xf]
      %v436 = vld [vmem:[%s1 + $0x108] sm:$0xf]
      %v437 = vld [vmem:[%s1 + $0x10c] sm:$0xf]
      %v438 = vld [vmem:[%s1 + $0x110] sm:$0xf]
      %v439 = vld [vmem:[%s1 + $0x114] sm:$0xf]
      %v440 = vld [vmem:[%s1 + $0x118] sm:$0xf]
      %v441 = vld [vmem:[%s1 + $0x11c] sm:$0xf]
      %v442 = vld [vmem:[%s1 + $0x120] sm:$0xf]
      %v443 = vld [vmem:[%s1 + $0x124] sm:$0xf]
      %v444 = vld [vmem:[%s1 + $0x128] sm:$0xf]
      %v445 = vld [vmem:[%s1 + $0x12c] sm:$0xf]
      %v446 = vld [vmem:[%s1 + $0x130] sm:$0xf]
      %v447 = vld [vmem:[%s1 + $0x134] sm:$0xf]
      %v448 = vld [vmem:[%s1 + $0x138] sm:$0xf]
      %v449 = vld [vmem:[%s1 + $0x13c] sm:$0xf]
      %v450 = vld [vmem:[%s2] sm:$0x1]
      %v452 = vlaneseq
      %v453 = vshrl.u32 %v452, 7
      %v454 = vsub.s32 0, %v453
      %v455 = vrot.slane %v450, %v454
      %v649 = vunpack.c.l.b16 %v178
      %v650 = vunpack.c.h.b16 %v178
      %v651 = vunpack.c.l.b16 %v179
      %v652 = vunpack.c.h.b16 %v179
      %v653 = vunpack.c.l.b16 %v180
      %v654 = vunpack.c.l.b16 %v181
      %v655 = vunpack.c.h.b16 %v181
      %v656 = vunpack.c.l.b16 %v182
      %v657 = vunpack.c.h.b16 %v182
      %v658 = vunpack.c.l.b16 %v183
      %v659 = vunpack.c.l.b16 %v184
      %v660 = vunpack.c.h.b16 %v184
      %v661 = vunpack.c.l.b16 %v185
      %v662 = vunpack.c.h.b16 %v185
      %v663 = vunpack.c.l.b16 %v186
      %v664 = vunpack.c.l.b16 %v187
      %v665 = vunpack.c.h.b16 %v187
      %v666 = vunpack.c.l.b16 %v188
      %v667 = vunpack.c.h.b16 %v188
      %v668 = vunpack.c.l.b16 %v189
      %v669 = vunpack.c.l.b16 %v190
      %v670 = vunpack.c.h.b16 %v190
      %v671 = vunpack.c.l.b16 %v191
      %v672 = vunpack.c.h.b16 %v191
      %v673 = vunpack.c.l.b16 %v192
      %v674 = vunpack.c.l.b16 %v193
      %v675 = vunpack.c.h.b16 %v193
      %v676 = vunpack.c.l.b16 %v194
      %v677 = vunpack.c.h.b16 %v194
      %v678 = vunpack.c.l.b16 %v195
      %v679 = vunpack.c.l.b16 %v196
      %v680 = vunpack.c.h.b16 %v196
      %v681 = vunpack.c.l.b16 %v197
      %v682 = vunpack.c.h.b16 %v197
      %v683 = vunpack.c.l.b16 %v198
      %v684 = vunpack.c.l.b16 %v199
      %v685 = vunpack.c.h.b16 %v199
      %v686 = vunpack.c.l.b16 %v200
      %v687 = vunpack.c.h.b16 %v200
      %v688 = vunpack.c.l.b16 %v201
      %v689 = vunpack.c.l.b16 %v202
      %v690 = vunpack.c.h.b16 %v202
      %v691 = vunpack.c.l.b16 %v203
      %v692 = vunpack.c.h.b16 %v203
      %v693 = vunpack.c.l.b16 %v204
      %v694 = vunpack.c.l.b16 %v205
      %v695 = vunpack.c.h.b16 %v205
      %v696 = vunpack.c.l.b16 %v206
      %v697 = vunpack.c.h.b16 %v206
      %v698 = vunpack.c.l.b16 %v207
      %v699 = vunpack.c.l.b16 %v208
      %v700 = vunpack.c.h.b16 %v208
      %v701 = vunpack.c.l.b16 %v209
      %v702 = vunpack.c.h.b16 %v209
      %v703 = vunpack.c.l.b16 %v210
      %v704 = vunpack.c.l.b16 %v211
      %v705 = vunpack.c.h.b16 %v211
      %v706 = vunpack.c.l.b16 %v212
      %v707 = vunpack.c.h.b16 %v212
      %v708 = vunpack.c.l.b16 %v213
      %v709 = vunpack.c.l.b16 %v214
      %v710 = vunpack.c.h.b16 %v214
      %v711 = vunpack.c.l.b16 %v215
      %v712 = vunpack.c.h.b16 %v215
      %v713 = vunpack.c.l.b16 %v216
      %v714 = vunpack.c.l.b16 %v217
      %v715 = vunpack.c.h.b16 %v217
      %v716 = vunpack.c.l.b16 %v218
      %v717 = vunpack.c.h.b16 %v218
      %v718 = vunpack.c.l.b16 %v219
      %v719 = vunpack.c.l.b16 %v220
      %v720 = vunpack.c.h.b16 %v220
      %v721 = vunpack.c.l.b16 %v221
      %v722 = vunpack.c.h.b16 %v221
      %v723 = vunpack.c.l.b16 %v222
      %v724 = vunpack.c.l.b16 %v223
      %v725 = vunpack.c.h.b16 %v223
      %v726 = vunpack.c.l.b16 %v224
      %v727 = vunpack.c.h.b16 %v224
      %v728 = vunpack.c.l.b16 %v225
      %v729 = vunpack.c.l.b16 %v226
      %v730 = vunpack.c.h.b16 %v226
      %v731 = vunpack.c.l.b16 %v227
      %v732 = vunpack.c.h.b16 %v227
      %v733 = vunpack.c.l.b16 %v228
      %v734 = vunpack.c.l.b16 %v229
      %v735 = vunpack.c.h.b16 %v229
      %v736 = vunpack.c.l.b16 %v230
      %v737 = vunpack.c.h.b16 %v230
      %v738 = vunpack.c.l.b16 %v231
      %v739 = vunpack.c.l.b16 %v232
      %v740 = vunpack.c.h.b16 %v232
      %v741 = vunpack.c.l.b16 %v233
      %v742 = vunpack.c.h.b16 %v233
      %v743 = vunpack.c.l.b16 %v234
      %v744 = vunpack.c.l.b16 %v235
      %v745 = vunpack.c.h.b16 %v235
      %v746 = vunpack.c.l.b16 %v236
      %v747 = vunpack.c.h.b16 %v236
      %v748 = vunpack.c.l.b16 %v237
      %v749 = vunpack.c.l.b16 %v238
      %v750 = vunpack.c.h.b16 %v238
      %v751 = vunpack.c.l.b16 %v239
      %v752 = vunpack.c.h.b16 %v239
      %v753 = vunpack.c.l.b16 %v240
      %v754 = vunpack.c.l.b16 %v241
      %v755 = vunpack.c.h.b16 %v241
      %v756 = vunpack.c.l.b16 %v242
      %v757 = vunpack.c.h.b16 %v242
      %v758 = vunpack.c.l.b16 %v243
      %v759 = vunpack.c.l.b16 %v244
      %v760 = vunpack.c.h.b16 %v244
      %v761 = vunpack.c.l.b16 %v245
      %v762 = vunpack.c.h.b16 %v245
      %v763 = vunpack.c.l.b16 %v246
      %v764 = vunpack.c.l.b16 %v247
      %v765 = vunpack.c.h.b16 %v247
      %v766 = vunpack.c.l.b16 %v248
      %v767 = vunpack.c.h.b16 %v248
      %v768 = vunpack.c.l.b16 %v249
      %v769 = vunpack.c.l.b16 %v250
      %v770 = vunpack.c.h.b16 %v250
      %v771 = vunpack.c.l.b16 %v251
      %v772 = vunpack.c.h.b16 %v251
      %v773 = vunpack.c.l.b16 %v252
      %v774 = vunpack.c.l.b16 %v253
      %v775 = vunpack.c.h.b16 %v253
      %v776 = vunpack.c.l.b16 %v254
      %v777 = vunpack.c.h.b16 %v254
      %v778 = vunpack.c.l.b16 %v255
      %v779 = vunpack.c.l.b16 %v256
      %v780 = vunpack.c.h.b16 %v256
      %v781 = vunpack.c.l.b16 %v257
      %v782 = vunpack.c.h.b16 %v257
      %v783 = vunpack.c.l.b16 %v258
      %v784 = vunpack.c.l.b16 %v259
      %v785 = vunpack.c.h.b16 %v259
      %v786 = vunpack.c.l.b16 %v260
      %v787 = vunpack.c.h.b16 %v260
      %v788 = vunpack.c.l.b16 %v261
      %v789 = vunpack.c.l.b16 %v262
      %v790 = vunpack.c.h.b16 %v262
      %v791 = vunpack.c.l.b16 %v263
      %v792 = vunpack.c.h.b16 %v263
      %v793 = vunpack.c.l.b16 %v264
      %v794 = vunpack.c.l.b16 %v265
      %v795 = vunpack.c.h.b16 %v265
      %v796 = vunpack.c.l.b16 %v266
      %v797 = vunpack.c.h.b16 %v266
      %v798 = vunpack.c.l.b16 %v267
      %v799 = vunpack.c.l.b16 %v268
      %v800 = vunpack.c.h.b16 %v268
      %v801 = vunpack.c.l.b16 %v269
      %v802 = vunpack.c.h.b16 %v269
      %v803 = vunpack.c.l.b16 %v270
      %v804 = vunpack.c.l.b16 %v271
      %v805 = vunpack.c.h.b16 %v271
      %v806 = vunpack.c.l.b16 %v272
      %v807 = vunpack.c.h.b16 %v272
      %v808 = vunpack.c.l.b16 %v273
      %v809 = vunpack.c.l.b16 %v274
      %v810 = vunpack.c.h.b16 %v274
      %v811 = vunpack.c.l.b16 %v275
      %v812 = vunpack.c.h.b16 %v275
      %v813 = vunpack.c.l.b16 %v276
      %v814 = vunpack.c.l.b16 %v277
      %v815 = vunpack.c.h.b16 %v277
      %v816 = vunpack.c.l.b16 %v278
      %v817 = vunpack.c.h.b16 %v278
      %v818 = vunpack.c.l.b16 %v279
      %v819 = vunpack.c.l.b16 %v280
      %v820 = vunpack.c.h.b16 %v280
      %v821 = vunpack.c.l.b16 %v281
      %v822 = vunpack.c.h.b16 %v281
      %v823 = vunpack.c.l.b16 %v282
      %v824 = vunpack.c.l.b16 %v283
      %v825 = vunpack.c.h.b16 %v283
      %v826 = vunpack.c.l.b16 %v284
      %v827 = vunpack.c.h.b16 %v284
      %v828 = vunpack.c.l.b16 %v285
      %v829 = vunpack.c.l.b16 %v286
      %v830 = vunpack.c.h.b16 %v286
      %v831 = vunpack.c.l.b16 %v287
      %v832 = vunpack.c.h.b16 %v287
      %v833 = vunpack.c.l.b16 %v288
      %v834 = vunpack.c.l.b16 %v289
      %v835 = vunpack.c.h.b16 %v289
      %v836 = vunpack.c.l.b16 %v290
      %v837 = vunpack.c.h.b16 %v290
      %v838 = vunpack.c.l.b16 %v291
      %v839 = vunpack.c.l.b16 %v292
      %v840 = vunpack.c.h.b16 %v292
      %v841 = vunpack.c.l.b16 %v293
      %v842 = vunpack.c.h.b16 %v293
      %v843 = vunpack.c.l.b16 %v294
      %v844 = vunpack.c.l.b16 %v295
      %v845 = vunpack.c.h.b16 %v295
      %v846 = vunpack.c.l.b16 %v296
      %v847 = vunpack.c.h.b16 %v296
      %v848 = vunpack.c.l.b16 %v297
      %v849 = vunpack.c.l.b16 %v298
      %v850 = vunpack.c.h.b16 %v298
      %v851 = vunpack.c.l.b16 %v299
      %v852 = vunpack.c.h.b16 %v299
      %v853 = vunpack.c.l.b16 %v300
      %v854 = vunpack.c.l.b16 %v301
      %v855 = vunpack.c.h.b16 %v301
      %v856 = vunpack.c.l.b16 %v302
      %v857 = vunpack.c.h.b16 %v302
      %v858 = vunpack.c.l.b16 %v303
      %v859 = vunpack.c.l.b16 %v304
      %v860 = vunpack.c.h.b16 %v304
      %v861 = vunpack.c.l.b16 %v305
      %v862 = vunpack.c.h.b16 %v305
      %v863 = vunpack.c.l.b16 %v306
      %v864 = vunpack.c.l.b16 %v307
      %v865 = vunpack.c.h.b16 %v307
      %v866 = vunpack.c.l.b16 %v308
      %v867 = vunpack.c.h.b16 %v308
      %v868 = vunpack.c.l.b16 %v309
      %v869 = vunpack.c.l.b16 %v310
      %v870 = vunpack.c.h.b16 %v310
      %v871 = vunpack.c.l.b16 %v311
      %v872 = vunpack.c.h.b16 %v311
      %v873 = vunpack.c.l.b16 %v312
      %v874 = vunpack.c.l.b16 %v313
      %v875 = vunpack.c.h.b16 %v313
      %v876 = vunpack.c.l.b16 %v314
      %v877 = vunpack.c.h.b16 %v314
      %v878 = vunpack.c.l.b16 %v315
      %v879 = vunpack.c.l.b16 %v316
      %v880 = vunpack.c.h.b16 %v316
      %v881 = vunpack.c.l.b16 %v317
      %v882 = vunpack.c.h.b16 %v317
      %v883 = vunpack.c.l.b16 %v318
      %v884 = vunpack.c.l.b16 %v319
      %v885 = vunpack.c.h.b16 %v319
      %v886 = vunpack.c.l.b16 %v320
      %v887 = vunpack.c.h.b16 %v320
      %v888 = vunpack.c.l.b16 %v321
      %v889 = vunpack.c.l.b16 %v322
      %v890 = vunpack.c.h.b16 %v322
      %v891 = vunpack.c.l.b16 %v323
      %v892 = vunpack.c.h.b16 %v323
      %v893 = vunpack.c.l.b16 %v324
      %v894 = vunpack.c.l.b16 %v325
      %v895 = vunpack.c.h.b16 %v325
      %v896 = vunpack.c.l.b16 %v326
      %v897 = vunpack.c.h.b16 %v326
      %v898 = vunpack.c.l.b16 %v327
      %v899 = vunpack.c.l.b16 %v328
      %v900 = vunpack.c.h.b16 %v328
      %v901 = vunpack.c.l.b16 %v329
      %v902 = vunpack.c.h.b16 %v329
      %v903 = vunpack.c.l.b16 %v330
      %v904 = vunpack.c.l.b16 %v331
      %v905 = vunpack.c.h.b16 %v331
      %v906 = vunpack.c.l.b16 %v332
      %v907 = vunpack.c.h.b16 %v332
      %v908 = vunpack.c.l.b16 %v333
      %v909 = vunpack.c.l.b16 %v334
      %v910 = vunpack.c.h.b16 %v334
      %v911 = vunpack.c.l.b16 %v335
      %v912 = vunpack.c.h.b16 %v335
      %v913 = vunpack.c.l.b16 %v336
      %v914 = vunpack.c.l.b16 %v337
      %v915 = vunpack.c.h.b16 %v337
      %v916 = vunpack.c.l.b16 %v338
      %v917 = vunpack.c.h.b16 %v338
      %v918 = vunpack.c.l.b16 %v339
      %v919 = vunpack.c.l.b16 %v340
      %v920 = vunpack.c.h.b16 %v340
      %v921 = vunpack.c.l.b16 %v341
      %v922 = vunpack.c.h.b16 %v341
      %v923 = vunpack.c.l.b16 %v342
      %v924 = vunpack.c.l.b16 %v343
      %v925 = vunpack.c.h.b16 %v343
      %v926 = vunpack.c.l.b16 %v344
      %v927 = vunpack.c.h.b16 %v344
      %v928 = vunpack.c.l.b16 %v345
      %v929 = vunpack.c.l.b16 %v346
      %v930 = vunpack.c.h.b16 %v346
      %v931 = vunpack.c.l.b16 %v347
      %v932 = vunpack.c.h.b16 %v347
      %v933 = vunpack.c.l.b16 %v348
      %v934 = vunpack.c.l.b16 %v349
      %v935 = vunpack.c.h.b16 %v349
      %v936 = vunpack.c.l.b16 %v350
      %v937 = vunpack.c.h.b16 %v350
      %v938 = vunpack.c.l.b16 %v351
      %v939 = vunpack.c.l.b16 %v352
      %v940 = vunpack.c.h.b16 %v352
      %v941 = vunpack.c.l.b16 %v353
      %v942 = vunpack.c.h.b16 %v353
      %v943 = vunpack.c.l.b16 %v354
      %v944 = vunpack.c.l.b16 %v355
      %v945 = vunpack.c.h.b16 %v355
      %v946 = vunpack.c.l.b16 %v356
      %v947 = vunpack.c.h.b16 %v356
      %v948 = vunpack.c.l.b16 %v357
      %v949 = vunpack.c.l.b16 %v358
      %v950 = vunpack.c.h.b16 %v358
      %v951 = vunpack.c.l.b16 %v359
      %v952 = vunpack.c.h.b16 %v359
      %v953 = vunpack.c.l.b16 %v360
      %v954 = vunpack.c.l.b16 %v361
      %v955 = vunpack.c.h.b16 %v361
      %v956 = vunpack.c.l.b16 %v362
      %v957 = vunpack.c.h.b16 %v362
      %v958 = vunpack.c.l.b16 %v363
      %v959 = vunpack.c.l.b16 %v364
      %v960 = vunpack.c.h.b16 %v364
      %v961 = vunpack.c.l.b16 %v365
      %v962 = vunpack.c.h.b16 %v365
      %v963 = vunpack.c.l.b16 %v366
      %v964 = vunpack.c.l.b16 %v367
      %v965 = vunpack.c.h.b16 %v367
      %v966 = vunpack.c.l.b16 %v368
      %v967 = vunpack.c.h.b16 %v368
      %v968 = vunpack.c.l.b16 %v369
      %v969 = vpack.c.b16 %v654, %v649
      %v970 = vpack.c.b16 %v655, %v650
      %v971 = vpack.c.b16 %v656, %v651
      %v972 = vpack.c.b16 %v657, %v652
      %v973 = vpack.c.b16 %v658, %v653
      %v974 = vpack.c.b16 %v664, %v659
      %v975 = vpack.c.b16 %v665, %v660
      %v976 = vpack.c.b16 %v666, %v661
      %v977 = vpack.c.b16 %v667, %v662
      %v978 = vpack.c.b16 %v668, %v663
      %v979 = vpack.c.b16 %v674, %v669
      %v980 = vpack.c.b16 %v675, %v670
      %v981 = vpack.c.b16 %v676, %v671
      %v982 = vpack.c.b16 %v677, %v672
      %v983 = vpack.c.b16 %v678, %v673
      %v984 = vpack.c.b16 %v684, %v679
      %v985 = vpack.c.b16 %v685, %v680
      %v986 = vpack.c.b16 %v686, %v681
      %v987 = vpack.c.b16 %v687, %v682
      %v988 = vpack.c.b16 %v688, %v683
      %v989 = vpack.c.b16 %v694, %v689
      %v990 = vpack.c.b16 %v695, %v690
      %v991 = vpack.c.b16 %v696, %v691
      %v992 = vpack.c.b16 %v697, %v692
      %v993 = vpack.c.b16 %v698, %v693
      %v994 = vpack.c.b16 %v704, %v699
      %v995 = vpack.c.b16 %v705, %v700
      %v996 = vpack.c.b16 %v706, %v701
      %v997 = vpack.c.b16 %v707, %v702
      %v998 = vpack.c.b16 %v708, %v703
      %v999 = vpack.c.b16 %v714, %v709
      %v1000 = vpack.c.b16 %v715, %v710
      %v1001 = vpack.c.b16 %v716, %v711
      %v1002 = vpack.c.b16 %v717, %v712
      %v1003 = vpack.c.b16 %v718, %v713
      %v1004 = vpack.c.b16 %v724, %v719
      %v1005 = vpack.c.b16 %v725, %v720
      %v1006 = vpack.c.b16 %v726, %v721
      %v1007 = vpack.c.b16 %v727, %v722
      %v1008 = vpack.c.b16 %v728, %v723
      %v1009 = vpack.c.b16 %v734, %v729
      %v1010 = vpack.c.b16 %v735, %v730
      %v1011 = vpack.c.b16 %v736, %v731
      %v1012 = vpack.c.b16 %v737, %v732
      %v1013 = vpack.c.b16 %v738, %v733
      %v1014 = vpack.c.b16 %v744, %v739
      %v1015 = vpack.c.b16 %v745, %v740
      %v1016 = vpack.c.b16 %v746, %v741
      %v1017 = vpack.c.b16 %v747, %v742
      %v1018 = vpack.c.b16 %v748, %v743
      %v1019 = vpack.c.b16 %v754, %v749
      %v1020 = vpack.c.b16 %v755, %v750
      %v1021 = vpack.c.b16 %v756, %v751
      %v1022 = vpack.c.b16 %v757, %v752
      %v1023 = vpack.c.b16 %v758, %v753
      %v1024 = vpack.c.b16 %v764, %v759
      %v1025 = vpack.c.b16 %v765, %v760
      %v1026 = vpack.c.b16 %v766, %v761
      %v1027 = vpack.c.b16 %v767, %v762
      %v1028 = vpack.c.b16 %v768, %v763
      %v1029 = vpack.c.b16 %v774, %v769
      %v1030 = vpack.c.b16 %v775, %v770
      %v1031 = vpack.c.b16 %v776, %v771
      %v1032 = vpack.c.b16 %v777, %v772
      %v1033 = vpack.c.b16 %v778, %v773
      %v1034 = vpack.c.b16 %v784, %v779
      %v1035 = vpack.c.b16 %v785, %v780
      %v1036 = vpack.c.b16 %v786, %v781
      %v1037 = vpack.c.b16 %v787, %v782
      %v1038 = vpack.c.b16 %v788, %v783
      %v1039 = vpack.c.b16 %v794, %v789
      %v1040 = vpack.c.b16 %v795, %v790
      %v1041 = vpack.c.b16 %v796, %v791
      %v1042 = vpack.c.b16 %v797, %v792
      %v1043 = vpack.c.b16 %v798, %v793
      %v1044 = vpack.c.b16 %v804, %v799
      %v1045 = vpack.c.b16 %v805, %v800
      %v1046 = vpack.c.b16 %v806, %v801
      %v1047 = vpack.c.b16 %v807, %v802
      %v1048 = vpack.c.b16 %v808, %v803
      %v1049 = vpack.c.b16 %v814, %v809
      %v1050 = vpack.c.b16 %v815, %v810
      %v1051 = vpack.c.b16 %v816, %v811
      %v1052 = vpack.c.b16 %v817, %v812
      %v1053 = vpack.c.b16 %v818, %v813
      %v1054 = vpack.c.b16 %v824, %v819
      %v1055 = vpack.c.b16 %v825, %v820
      %v1056 = vpack.c.b16 %v826, %v821
      %v1057 = vpack.c.b16 %v827, %v822
      %v1058 = vpack.c.b16 %v828, %v823
      %v1059 = vpack.c.b16 %v834, %v829
      %v1060 = vpack.c.b16 %v835, %v830
      %v1061 = vpack.c.b16 %v836, %v831
      %v1062 = vpack.c.b16 %v837, %v832
      %v1063 = vpack.c.b16 %v838, %v833
      %v1064 = vpack.c.b16 %v844, %v839
      %v1065 = vpack.c.b16 %v845, %v840
      %v1066 = vpack.c.b16 %v846, %v841
      %v1067 = vpack.c.b16 %v847, %v842
      %v1068 = vpack.c.b16 %v848, %v843
      %v1069 = vpack.c.b16 %v854, %v849
      %v1070 = vpack.c.b16 %v855, %v850
      %v1071 = vpack.c.b16 %v856, %v851
      %v1072 = vpack.c.b16 %v857, %v852
      %v1073 = vpack.c.b16 %v858, %v853
      %v1074 = vpack.c.b16 %v864, %v859
      %v1075 = vpack.c.b16 %v865, %v860
      %v1076 = vpack.c.b16 %v866, %v861
      %v1077 = vpack.c.b16 %v867, %v862
      %v1078 = vpack.c.b16 %v868, %v863
      %v1079 = vpack.c.b16 %v874, %v869
      %v1080 = vpack.c.b16 %v875, %v870
      %v1081 = vpack.c.b16 %v876, %v871
      %v1082 = vpack.c.b16 %v877, %v872
      %v1083 = vpack.c.b16 %v878, %v873
      %v1084 = vpack.c.b16 %v884, %v879
      %v1085 = vpack.c.b16 %v885, %v880
      %v1086 = vpack.c.b16 %v886, %v881
      %v1087 = vpack.c.b16 %v887, %v882
      %v1088 = vpack.c.b16 %v888, %v883
      %v1089 = vpack.c.b16 %v894, %v889
      %v1090 = vpack.c.b16 %v895, %v890
      %v1091 = vpack.c.b16 %v896, %v891
      %v1092 = vpack.c.b16 %v897, %v892
      %v1093 = vpack.c.b16 %v898, %v893
      %v1094 = vpack.c.b16 %v904, %v899
      %v1095 = vpack.c.b16 %v905, %v900
      %v1096 = vpack.c.b16 %v906, %v901
      %v1097 = vpack.c.b16 %v907, %v902
      %v1098 = vpack.c.b16 %v908, %v903
      %v1099 = vpack.c.b16 %v914, %v909
      %v1100 = vpack.c.b16 %v915, %v910
      %v1101 = vpack.c.b16 %v916, %v911
      %v1102 = vpack.c.b16 %v917, %v912
      %v1103 = vpack.c.b16 %v918, %v913
      %v1104 = vpack.c.b16 %v924, %v919
      %v1105 = vpack.c.b16 %v925, %v920
      %v1106 = vpack.c.b16 %v926, %v921
      %v1107 = vpack.c.b16 %v927, %v922
      %v1108 = vpack.c.b16 %v928, %v923
      %v1109 = vpack.c.b16 %v934, %v929
      %v1110 = vpack.c.b16 %v935, %v930
      %v1111 = vpack.c.b16 %v936, %v931
      %v1112 = vpack.c.b16 %v937, %v932
      %v1113 = vpack.c.b16 %v938, %v933
      %v1114 = vpack.c.b16 %v944, %v939
      %v1115 = vpack.c.b16 %v945, %v940
      %v1116 = vpack.c.b16 %v946, %v941
      %v1117 = vpack.c.b16 %v947, %v942
      %v1118 = vpack.c.b16 %v948, %v943
      %v1119 = vpack.c.b16 %v954, %v949
      %v1120 = vpack.c.b16 %v955, %v950
      %v1121 = vpack.c.b16 %v956, %v951
      %v1122 = vpack.c.b16 %v957, %v952
      %v1123 = vpack.c.b16 %v958, %v953
      %v1124 = vpack.c.b16 %v964, %v959
      %v1125 = vpack.c.b16 %v965, %v960
      %v1126 = vpack.c.b16 %v966, %v961
      %v1127 = vpack.c.b16 %v967, %v962
      %v1128 = vpack.c.b16 %v968, %v963
      %v1369 = vunpack.c.l.b16 %v370
      %v1370 = vunpack.c.l.b16 %v371
      %v1371 = vunpack.c.l.b16 %v372
      %v1372 = vunpack.c.l.b16 %v373
      %v1373 = vunpack.c.l.b16 %v374
      %v1374 = vunpack.c.l.b16 %v375
      %v1375 = vunpack.c.l.b16 %v376
      %v1376 = vunpack.c.l.b16 %v377
      %v1377 = vunpack.c.l.b16 %v378
      %v1378 = vunpack.c.l.b16 %v379
      %v1379 = vunpack.c.l.b16 %v380
      %v1380 = vunpack.c.l.b16 %v381
      %v1381 = vunpack.c.l.b16 %v382
      %v1382 = vunpack.c.l.b16 %v383
      %v1383 = vunpack.c.l.b16 %v384
      %v1384 = vunpack.c.l.b16 %v385
      %v1385 = vunpack.c.l.b16 %v386
      %v1386 = vunpack.c.l.b16 %v387
      %v1387 = vunpack.c.l.b16 %v388
      %v1388 = vunpack.c.l.b16 %v389
      %v1389 = vunpack.c.l.b16 %v390
      %v1390 = vunpack.c.l.b16 %v391
      %v1391 = vunpack.c.l.b16 %v392
      %v1392 = vunpack.c.l.b16 %v393
      %v1393 = vunpack.c.l.b16 %v394
      %v1394 = vunpack.c.l.b16 %v395
      %v1395 = vunpack.c.l.b16 %v396
      %v1396 = vunpack.c.l.b16 %v397
      %v1397 = vunpack.c.l.b16 %v398
      %v1398 = vunpack.c.l.b16 %v399
      %v1399 = vunpack.c.l.b16 %v400
      %v1400 = vunpack.c.l.b16 %v401
      %v1401 = vunpack.c.l.b16 %v402
      %v1402 = vunpack.c.l.b16 %v403
      %v1403 = vunpack.c.l.b16 %v404
      %v1404 = vunpack.c.l.b16 %v405
      %v1405 = vunpack.c.l.b16 %v406
      %v1406 = vunpack.c.l.b16 %v407
      %v1407 = vunpack.c.l.b16 %v408
      %v1408 = vunpack.c.l.b16 %v409
      %v1409 = vunpack.c.l.b16 %v410
      %v1410 = vunpack.c.l.b16 %v411
      %v1411 = vunpack.c.l.b16 %v412
      %v1412 = vunpack.c.l.b16 %v413
      %v1413 = vunpack.c.l.b16 %v414
      %v1414 = vunpack.c.l.b16 %v415
      %v1415 = vunpack.c.l.b16 %v416
      %v1416 = vunpack.c.l.b16 %v417
      %v1417 = vunpack.c.l.b16 %v418
      %v1418 = vunpack.c.l.b16 %v419
      %v1419 = vunpack.c.l.b16 %v420
      %v1420 = vunpack.c.l.b16 %v421
      %v1421 = vunpack.c.l.b16 %v422
      %v1422 = vunpack.c.l.b16 %v423
      %v1423 = vunpack.c.l.b16 %v424
      %v1424 = vunpack.c.l.b16 %v425
      %v1425 = vunpack.c.l.b16 %v426
      %v1426 = vunpack.c.l.b16 %v427
      %v1427 = vunpack.c.l.b16 %v428
      %v1428 = vunpack.c.l.b16 %v429
      %v1429 = vunpack.c.l.b16 %v430
      %v1430 = vunpack.c.l.b16 %v431
      %v1431 = vunpack.c.l.b16 %v432
      %v1432 = vunpack.c.l.b16 %v433
      %v1433 = vunpack.c.l.b16 %v434
      %v1434 = vunpack.c.l.b16 %v435
      %v1435 = vunpack.c.l.b16 %v436
      %v1436 = vunpack.c.l.b16 %v437
      %v1437 = vunpack.c.l.b16 %v438
      %v1438 = vunpack.c.l.b16 %v439
      %v1439 = vunpack.c.l.b16 %v440
      %v1440 = vunpack.c.l.b16 %v441
      %v1441 = vunpack.c.l.b16 %v442
      %v1442 = vunpack.c.l.b16 %v443
      %v1443 = vunpack.c.l.b16 %v444
      %v1444 = vunpack.c.l.b16 %v445
      %v1445 = vunpack.c.l.b16 %v446
      %v1446 = vunpack.c.l.b16 %v447
      %v1447 = vunpack.c.l.b16 %v448
      %v1448 = vunpack.c.l.b16 %v449
      %v1449 = vpack.c.b16 %v1370, %v1369
      %v1450 = vpack.c.b16 %v1372, %v1371
      %v1451 = vpack.c.b16 %v1374, %v1373
      %v1452 = vpack.c.b16 %v1376, %v1375
      %v1453 = vpack.c.b16 %v1378, %v1377
      %v1454 = vpack.c.b16 %v1380, %v1379
      %v1455 = vpack.c.b16 %v1382, %v1381
      %v1456 = vpack.c.b16 %v1384, %v1383
      %v1457 = vpack.c.b16 %v1386, %v1385
      %v1458 = vpack.c.b16 %v1388, %v1387
      %v1459 = vpack.c.b16 %v1390, %v1389
      %v1460 = vpack.c.b16 %v1392, %v1391
      %v1461 = vpack.c.b16 %v1394, %v1393
      %v1462 = vpack.c.b16 %v1396, %v1395
      %v1463 = vpack.c.b16 %v1398, %v1397
      %v1464 = vpack.c.b16 %v1400, %v1399
      %v1465 = vpack.c.b16 %v1402, %v1401
      %v1466 = vpack.c.b16 %v1404, %v1403
      %v1467 = vpack.c.b16 %v1406, %v1405
      %v1468 = vpack.c.b16 %v1408, %v1407
      %v1469 = vpack.c.b16 %v1410, %v1409
      %v1470 = vpack.c.b16 %v1412, %v1411
      %v1471 = vpack.c.b16 %v1414, %v1413
      %v1472 = vpack.c.b16 %v1416, %v1415
      %v1473 = vpack.c.b16 %v1418, %v1417
      %v1474 = vpack.c.b16 %v1420, %v1419
      %v1475 = vpack.c.b16 %v1422, %v1421
      %v1476 = vpack.c.b16 %v1424, %v1423
      %v1477 = vpack.c.b16 %v1426, %v1425
      %v1478 = vpack.c.b16 %v1428, %v1427
      %v1479 = vpack.c.b16 %v1430, %v1429
      %v1480 = vpack.c.b16 %v1432, %v1431
      %v1481 = vpack.c.b16 %v1434, %v1433
      %v1482 = vpack.c.b16 %v1436, %v1435
      %v1483 = vpack.c.b16 %v1438, %v1437
      %v1484 = vpack.c.b16 %v1440, %v1439
      %v1485 = vpack.c.b16 %v1442, %v1441
      %v1486 = vpack.c.b16 %v1444, %v1443
      %v1487 = vpack.c.b16 %v1446, %v1445
      %v1488 = vpack.c.b16 %v1448, %v1447
      %1529 = vmatprep.subr.bf16.mxu0 0
      %1530 = vmatpush1.bf16.msra.mxu0 %v1449
      %1531 = vmatprep.subr.bf16.mxu0 0
      %1532 = vmatpush1.bf16.msra.mxu0 %v1450
      %1533 = vmatprep.subr.bf16.mxu0 0
      %1534 = vmatpush1.bf16.msra.mxu0 %v1451
      %1535 = vmatprep.subr.bf16.mxu0 0
      %1536 = vmatpush1.bf16.msra.mxu0 %v1452
      %1537 = vmatprep.subr.bf16.mxu0 0
      %1538 = vmatpush1.bf16.msra.mxu0 %v1453
      %1539 = vmatprep.subr.bf16.mxu0 0
      %1540 = vmatpush1.bf16.msra.mxu0 %v1454
      %1541 = vmatprep.subr.bf16.mxu0 0
      %1542 = vmatpush1.bf16.msra.mxu0 %v1455
      %1543 = vmatprep.subr.bf16.mxu0 0
      %1544 = vmatpush1.bf16.msra.mxu0 %v1456
      %1545 = vmatprep.subr.bf16.mxu0 0
      %1546 = vmatpush1.bf16.msra.mxu0 %v1457
      %1547 = vmatprep.subr.bf16.mxu0 0
      %1548 = vmatpush1.bf16.msra.mxu0 %v1458
      %1549 = vmatprep.subr.bf16.mxu0 0
      %1550 = vmatpush1.bf16.msra.mxu0 %v1459
      %1551 = vmatprep.subr.bf16.mxu0 0
      %1552 = vmatpush1.bf16.msra.mxu0 %v1460
      %1553 = vmatprep.subr.bf16.mxu0 0
      %1554 = vmatpush1.bf16.msra.mxu0 %v1461
      %1555 = vmatprep.subr.bf16.mxu0 0
      %1556 = vmatpush1.bf16.msra.mxu0 %v1462
      %1557 = vmatprep.subr.bf16.mxu0 0
      %1558 = vmatpush1.bf16.msra.mxu0 %v1463
      %1559 = vmatprep.subr.bf16.mxu0 0
      %1560 = vmatpush1.bf16.msra.mxu0 %v1464
      %1561 = vmatprep.mubr.bf16.mxu0 %v970
      %1562 = vmatmul.mubr.bf16.gmra.mrb[0].mxu0 %v969
      %v1563 = vpop.f32.mrb[0].mxu0
      %v1564 = vadd.f32 %v455, %v1563
      %v1565 = vpop.f32.mrb[0].mxu0
      %v1566 = vpop.f32.mrb[0].mxu0
      %v1567 = vadd.f32 %v455, %v1566
      %v1568 = vpop.f32.mrb[0].mxu0
      %1569 = vmatprep.mubr.bf16.mxu0 %v975
      %1570 = vmatmul.mubr.bf16.gmra.mrb[0].mxu0 %v974
      %v1571 = vpop.f32.mrb[0].mxu0
      %v1572 = vadd.f32 %v455, %v1571
      %v1573 = vpop.f32.mrb[0].mxu0
      %v1574 = vpop.f32.mrb[0].mxu0
      %v1575 = vadd.f32 %v455, %v1574
      %v1576 = vpop.f32.mrb[0].mxu0
      %1577 = vmatprep.mubr.bf16.mxu0 %v980
      %1578 = vmatmul.mubr.bf16.gmra.mrb[0].mxu0 %v979
      %v1579 = vpop.f32.mrb[0].mxu0
      %v1580 = vadd.f32 %v455, %v1579
      %v1581 = vpop.f32.mrb[0].mxu0
      %v1582 = vpop.f32.mrb[0].mxu0
      %v1583 = vadd.f32 %v455, %v1582
      %v1584 = vpop.f32.mrb[0].mxu0
      %1585 = vmatprep.mubr.bf16.mxu0 %v985
      %1586 = vmatmul.mubr.bf16.gmra.mrb[0].mxu0 %v984
      %v1587 = vpop.f32.mrb[0].mxu0
      %v1588 = vadd.f32 %v455, %v1587
      %v1589 = vpop.f32.mrb[0].mxu0
      %v1590 = vpop.f32.mrb[0].mxu0
      %v1591 = vadd.f32 %v455, %v1590
      %v1592 = vpop.f32.mrb[0].mxu0
      %1593 = vmatprep.mubr.bf16.mxu0 %v990
      %1594 = vmatmul.mubr.bf16.gmra.mrb[0].mxu0 %v989
      %v1595 = vpop.f32.mrb[0].mxu0
      %v1596 = vadd.f32 %v455, %v1595
      %v1597 = vpop.f32.mrb[0].mxu0
      %v1598 = vpop.f32.mrb[0].mxu0
      %v1599 = vadd.f32 %v455, %v1598
      %v1600 = vpop.f32.mrb[0].mxu0
      %1601 = vmatprep.mubr.bf16.mxu0 %v995
      %1602 = vmatmul.mubr.bf16.gmra.mrb[0].mxu0 %v994
      %v1603 = vpop.f32.mrb[0].mxu0
      %v1604 = vadd.f32 %v455, %v1603
      %v1605 = vpop.f32.mrb[0].mxu0
      %v1606 = vpop.f32.mrb[0].mxu0
      %v1607 = vadd.f32 %v455, %v1606
      %v1608 = vpop.f32.mrb[0].mxu0
      %1609 = vmatprep.mubr.bf16.mxu0 %v1000
      %1610 = vmatmul.mubr.bf16.gmra.mrb[0].mxu0 %v999
      %v1611 = vpop.f32.mrb[0].mxu0
      %v1612 = vadd.f32 %v455, %v1611
      %v1613 = vpop.f32.mrb[0].mxu0
      %v1614 = vpop.f32.mrb[0].mxu0
      %v1615 = vadd.f32 %v455, %v1614
      %v1616 = vpop.f32.mrb[0].mxu0
      %1617 = vmatprep.mubr.bf16.mxu0 %v1005
      %1618 = vmatmul.mubr.bf16.gmra.mrb[0].mxu0 %v1004
      %v1619 = vpop.f32.mrb[0].mxu0
      %v1620 = vadd.f32 %v455, %v1619
      %v1621 = vpop.f32.mrb[0].mxu0
      %v1622 = vpop.f32.mrb[0].mxu0
      %v1623 = vadd.f32 %v455, %v1622
      %v1624 = vpop.f32.mrb[0].mxu0
      %1625 = vmatprep.mubr.bf16.mxu0 %v1010
      %1626 = vmatmul.mubr.bf16.gmra.mrb[0].mxu0 %v1009
      %v1627 = vpop.f32.mrb[0].mxu0
      %v1628 = vadd.f32 %v455, %v1627
      %v1629 = vpop.f32.mrb[0].mxu0
      %v1630 = vpop.f32.mrb[0].mxu0
      %v1631 = vadd.f32 %v455, %v1630
      %v1632 = vpop.f32.mrb[0].mxu0
      %1633 = vmatprep.mubr.bf16.mxu0 %v1015
      %1634 = vmatmul.mubr.bf16.gmra.mrb[0].mxu0 %v1014
      %v1635 = vpop.f32.mrb[0].mxu0
      %v1636 = vadd.f32 %v455, %v1635
      %v1637 = vpop.f32.mrb[0].mxu0
      %v1638 = vpop.f32.mrb[0].mxu0
      %v1639 = vadd.f32 %v455, %v1638
      %v1640 = vpop.f32.mrb[0].mxu0
      %1641 = vmatprep.mubr.bf16.mxu0 %v1020
      %1642 = vmatmul.mubr.bf16.gmra.mrb[0].mxu0 %v1019
      %v1643 = vpop.f32.mrb[0].mxu0
      %v1644 = vadd.f32 %v455, %v1643
      %v1645 = vpop.f32.mrb[0].mxu0
      %v1646 = vpop.f32.mrb[0].mxu0
      %v1647 = vadd.f32 %v455, %v1646
      %v1648 = vpop.f32.mrb[0].mxu0
      %1649 = vmatprep.mubr.bf16.mxu0 %v1025
      %1650 = vmatmul.mubr.bf16.gmra.mrb[0].mxu0 %v1024
      %v1651 = vpop.f32.mrb[0].mxu0
      %v1652 = vadd.f32 %v455, %v1651
      %v1653 = vpop.f32.mrb[0].mxu0
      %v1654 = vpop.f32.mrb[0].mxu0
      %v1655 = vadd.f32 %v455, %v1654
      %v1656 = vpop.f32.mrb[0].mxu0
      %1657 = vmatprep.mubr.bf16.mxu0 %v1030
      %1658 = vmatmul.mubr.bf16.gmra.mrb[0].mxu0 %v1029
      %v1659 = vpop.f32.mrb[0].mxu0
      %v1660 = vadd.f32 %v455, %v1659
      %v1661 = vpop.f32.mrb[0].mxu0
      %v1662 = vpop.f32.mrb[0].mxu0
      %v1663 = vadd.f32 %v455, %v1662
      %v1664 = vpop.f32.mrb[0].mxu0
      %1665 = vmatprep.mubr.bf16.mxu0 %v1035
      %1666 = vmatmul.mubr.bf16.gmra.mrb[0].mxu0 %v1034
      %v1667 = vpop.f32.mrb[0].mxu0
      %v1668 = vadd.f32 %v455, %v1667
      %v1669 = vpop.f32.mrb[0].mxu0
      %v1670 = vpop.f32.mrb[0].mxu0
      %v1671 = vadd.f32 %v455, %v1670
      %v1672 = vpop.f32.mrb[0].mxu0
      %1673 = vmatprep.mubr.bf16.mxu0 %v1040
      %1674 = vmatmul.mubr.bf16.gmra.mrb[0].mxu0 %v1039
      %v1675 = vpop.f32.mrb[0].mxu0
      %v1676 = vadd.f32 %v455, %v1675
      %v1677 = vpop.f32.mrb[0].mxu0
      %v1678 = vpop.f32.mrb[0].mxu0
      %v1679 = vadd.f32 %v455, %v1678
      %v1680 = vpop.f32.mrb[0].mxu0
      %1681 = vmatprep.mubr.bf16.mxu0 %v1045
      %1682 = vmatmul.mubr.bf16.gmra.mrb[0].mxu0 %v1044
      %v1683 = vpop.f32.mrb[0].mxu0
      %v1684 = vadd.f32 %v455, %v1683
      %v1685 = vpop.f32.mrb[0].mxu0
      %v1686 = vpop.f32.mrb[0].mxu0
      %v1687 = vadd.f32 %v455, %v1686
      %v1688 = vpop.f32.mrb[0].mxu0
      %1689 = vmatprep.mubr.bf16.mxu0 %v1050
      %1690 = vmatmul.mubr.bf16.gmra.mrb[0].mxu0 %v1049
      %v1691 = vpop.f32.mrb[0].mxu0
      %v1692 = vadd.f32 %v455, %v1691
      %v1693 = vpop.f32.mrb[0].mxu0
      %v1694 = vpop.f32.mrb[0].mxu0
      %v1695 = vadd.f32 %v455, %v1694
      %v1696 = vpop.f32.mrb[0].mxu0
      %1697 = vmatprep.mubr.bf16.mxu0 %v1055
      %1698 = vmatmul.mubr.bf16.gmra.mrb[0].mxu0 %v1054
      %v1699 = vpop.f32.mrb[0].mxu0
      %v1700 = vadd.f32 %v455, %v1699
      %v1701 = vpop.f32.mrb[0].mxu0
      %v1702 = vpop.f32.mrb[0].mxu0
      %v1703 = vadd.f32 %v455, %v1702
      %v1704 = vpop.f32.mrb[0].mxu0
      %1705 = vmatprep.mubr.bf16.mxu0 %v1060
      %1706 = vmatmul.mubr.bf16.gmra.mrb[0].mxu0 %v1059
      %v1707 = vpop.f32.mrb[0].mxu0
      %v1708 = vadd.f32 %v455, %v1707
      %v1709 = vpop.f32.mrb[0].mxu0
      %v1710 = vpop.f32.mrb[0].mxu0
      %v1711 = vadd.f32 %v455, %v1710
      %v1712 = vpop.f32.mrb[0].mxu0
      %1713 = vmatprep.mubr.bf16.mxu0 %v1065
      %1714 = vmatmul.mubr.bf16.gmra.mrb[0].mxu0 %v1064
      %v1715 = vpop.f32.mrb[0].mxu0
      %v1716 = vadd.f32 %v455, %v1715
      %v1717 = vpop.f32.mrb[0].mxu0
      %v1718 = vpop.f32.mrb[0].mxu0
      %v1719 = vadd.f32 %v455, %v1718
      %v1720 = vpop.f32.mrb[0].mxu0
      %1721 = vmatprep.mubr.bf16.mxu0 %v1070
      %1722 = vmatmul.mubr.bf16.gmra.mrb[0].mxu0 %v1069
      %v1723 = vpop.f32.mrb[0].mxu0
      %v1724 = vadd.f32 %v455, %v1723
      %v1725 = vpop.f32.mrb[0].mxu0
      %v1726 = vpop.f32.mrb[0].mxu0
      %v1727 = vadd.f32 %v455, %v1726
      %v1728 = vpop.f32.mrb[0].mxu0
      %1729 = vmatprep.mubr.bf16.mxu0 %v1075
      %1730 = vmatmul.mubr.bf16.gmra.mrb[0].mxu0 %v1074
      %v1731 = vpop.f32.mrb[0].mxu0
      %v1732 = vadd.f32 %v455, %v1731
      %v1733 = vpop.f32.mrb[0].mxu0
      %v1734 = vpop.f32.mrb[0].mxu0
      %v1735 = vadd.f32 %v455, %v1734
      %v1736 = vpop.f32.mrb[0].mxu0
      %1737 = vmatprep.mubr.bf16.mxu0 %v1080
      %1738 = vmatmul.mubr.bf16.gmra.mrb[0].mxu0 %v1079
      %v1739 = vpop.f32.mrb[0].mxu0
      %v1740 = vadd.f32 %v455, %v1739
      %v1741 = vpop.f32.mrb[0].mxu0
      %v1742 = vpop.f32.mrb[0].mxu0
      %v1743 = vadd.f32 %v455, %v1742
      %v1744 = vpop.f32.mrb[0].mxu0
      %1745 = vmatprep.mubr.bf16.mxu0 %v1085
      %1746 = vmatmul.mubr.bf16.gmra.mrb[0].mxu0 %v1084
      %v1747 = vpop.f32.mrb[0].mxu0
      %v1748 = vadd.f32 %v455, %v1747
      %v1749 = vpop.f32.mrb[0].mxu0
      %v1750 = vpop.f32.mrb[0].mxu0
      %v1751 = vadd.f32 %v455, %v1750
      %v1752 = vpop.f32.mrb[0].mxu0
      %1753 = vmatprep.mubr.bf16.mxu0 %v1090
      %1754 = vmatmul.mubr.bf16.gmra.mrb[0].mxu0 %v1089
      %v1755 = vpop.f32.mrb[0].mxu0
      %v1756 = vadd.f32 %v455, %v1755
      %v1757 = vpop.f32.mrb[0].mxu0
      %v1758 = vpop.f32.mrb[0].mxu0
      %v1759 = vadd.f32 %v455, %v1758
      %v1760 = vpop.f32.mrb[0].mxu0
      %1761 = vmatprep.mubr.bf16.mxu0 %v1095
      %1762 = vmatmul.mubr.bf16.gmra.mrb[0].mxu0 %v1094
      %v1763 = vpop.f32.mrb[0].mxu0
      %v1764 = vadd.f32 %v455, %v1763
      %v1765 = vpop.f32.mrb[0].mxu0
      %v1766 = vpop.f32.mrb[0].mxu0
      %v1767 = vadd.f32 %v455, %v1766
      %v1768 = vpop.f32.mrb[0].mxu0
      %1769 = vmatprep.mubr.bf16.mxu0 %v1100
      %1770 = vmatmul.mubr.bf16.gmra.mrb[0].mxu0 %v1099
      %v1771 = vpop.f32.mrb[0].mxu0
      %v1772 = vadd.f32 %v455, %v1771
      %v1773 = vpop.f32.mrb[0].mxu0
      %v1774 = vpop.f32.mrb[0].mxu0
      %v1775 = vadd.f32 %v455, %v1774
      %v1776 = vpop.f32.mrb[0].mxu0
      %1777 = vmatprep.mubr.bf16.mxu0 %v1105
      %1778 = vmatmul.mubr.bf16.gmra.mrb[0].mxu0 %v1104
      %v1779 = vpop.f32.mrb[0].mxu0
      %v1780 = vadd.f32 %v455, %v1779
      %v1781 = vpop.f32.mrb[0].mxu0
      %v1782 = vpop.f32.mrb[0].mxu0
      %v1783 = vadd.f32 %v455, %v1782
      %v1784 = vpop.f32.mrb[0].mxu0
      %1785 = vmatprep.mubr.bf16.mxu0 %v1110
      %1786 = vmatmul.mubr.bf16.gmra.mrb[0].mxu0 %v1109
      %v1787 = vpop.f32.mrb[0].mxu0
      %v1788 = vadd.f32 %v455, %v1787
      %v1789 = vpop.f32.mrb[0].mxu0
      %v1790 = vpop.f32.mrb[0].mxu0
      %v1791 = vadd.f32 %v455, %v1790
      %v1792 = vpop.f32.mrb[0].mxu0
      %1793 = vmatprep.mubr.bf16.mxu0 %v1115
      %1794 = vmatmul.mubr.bf16.gmra.mrb[0].mxu0 %v1114
      %v1795 = vpop.f32.mrb[0].mxu0
      %v1796 = vadd.f32 %v455, %v1795
      %v1797 = vpop.f32.mrb[0].mxu0
      %v1798 = vpop.f32.mrb[0].mxu0
      %v1799 = vadd.f32 %v455, %v1798
      %v1800 = vpop.f32.mrb[0].mxu0
      %1801 = vmatprep.mubr.bf16.mxu0 %v1120
      %1802 = vmatmul.mubr.bf16.gmra.mrb[0].mxu0 %v1119
      %v1803 = vpop.f32.mrb[0].mxu0
      %v1804 = vadd.f32 %v455, %v1803
      %v1805 = vpop.f32.mrb[0].mxu0
      %v1806 = vpop.f32.mrb[0].mxu0
      %v1807 = vadd.f32 %v455, %v1806
      %v1808 = vpop.f32.mrb[0].mxu0
      %1809 = vmatprep.mubr.bf16.mxu0 %v1125
      %1810 = vmatmul.mubr.bf16.gmra.mrb[0].mxu0 %v1124
      %v1811 = vpop.f32.mrb[0].mxu0
      %v1812 = vadd.f32 %v455, %v1811
      %v1813 = vpop.f32.mrb[0].mxu0
      %v1814 = vpop.f32.mrb[0].mxu0
      %v1815 = vadd.f32 %v455, %v1814
      %v1816 = vpop.f32.mrb[0].mxu0
      %1817 = vdwg.mxu0
      %1818 = vmatprep.subr.bf16.mxu0 0
      %1819 = vmatpush1.bf16.msra.mxu0 %v1465
      %1820 = vmatprep.subr.bf16.mxu0 0
      %1821 = vmatpush1.bf16.msra.mxu0 %v1466
      %1822 = vmatprep.subr.bf16.mxu0 0
      %1823 = vmatpush1.bf16.msra.mxu0 %v1467
      %1824 = vmatprep.subr.bf16.mxu0 0
      %1825 = vmatpush1.bf16.msra.mxu0 %v1468
      %1826 = vmatprep.subr.bf16.mxu0 0
      %1827 = vmatpush1.bf16.msra.mxu0 %v1469
      %1828 = vmatprep.subr.bf16.mxu0 0
      %1829 = vmatpush1.bf16.msra.mxu0 %v1470
      %1830 = vmatprep.subr.bf16.mxu0 0
      %1831 = vmatpush1.bf16.msra.mxu0 %v1471
      %1832 = vmatprep.subr.bf16.mxu0 0
      %1833 = vmatpush1.bf16.msra.mxu0 %v1472
      %1834 = vmatprep.subr.bf16.mxu0 0
      %1835 = vmatpush1.bf16.msra.mxu0 %v1473
      %1836 = vmatprep.subr.bf16.mxu0 0
      %1837 = vmatpush1.bf16.msra.mxu0 %v1474
      %1838 = vmatprep.subr.bf16.mxu0 0
      %1839 = vmatpush1.bf16.msra.mxu0 %v1475
      %1840 = vmatprep.subr.bf16.mxu0 0
      %1841 = vmatpush1.bf16.msra.mxu0 %v1476
      %1842 = vmatprep.subr.bf16.mxu0 0
      %1843 = vmatpush1.bf16.msra.mxu0 %v1477
      %1844 = vmatprep.subr.bf16.mxu0 0
      %1845 = vmatpush1.bf16.msra.mxu0 %v1478
      %1846 = vmatprep.subr.bf16.mxu0 0
      %1847 = vmatpush1.bf16.msra.mxu0 %v1479
      %1848 = vmatprep.subr.bf16.mxu0 0
      %1849 = vmatpush1.bf16.msra.mxu0 %v1480
      %1850 = vmatprep.mubr.bf16.mxu0 %v972
      %1851 = vmatmul.mubr.bf16.gmra.mrb[0].mxu0 %v971
      %v1852 = vpop.f32.mrb[0].mxu0
      %v1853 = vadd.f32 %v1564, %v1852
      %v1854 = vpop.f32.mrb[0].mxu0
      %v1855 = vpop.f32.mrb[0].mxu0
      %v1856 = vadd.f32 %v1567, %v1855
      %v1857 = vpop.f32.mrb[0].mxu0
      %1858 = vmatprep.mubr.bf16.mxu0 %v977
      %1859 = vmatmul.mubr.bf16.gmra.mrb[0].mxu0 %v976
      %v1860 = vpop.f32.mrb[0].mxu0
      %v1861 = vadd.f32 %v1572, %v1860
      %v1862 = vpop.f32.mrb[0].mxu0
      %v1863 = vpop.f32.mrb[0].mxu0
      %v1864 = vadd.f32 %v1575, %v1863
      %v1865 = vpop.f32.mrb[0].mxu0
      %1866 = vmatprep.mubr.bf16.mxu0 %v982
      %1867 = vmatmul.mubr.bf16.gmra.mrb[0].mxu0 %v981
      %v1868 = vpop.f32.mrb[0].mxu0
      %v1869 = vadd.f32 %v1580, %v1868
      %v1870 = vpop.f32.mrb[0].mxu0
      %v1871 = vpop.f32.mrb[0].mxu0
      %v1872 = vadd.f32 %v1583, %v1871
      %v1873 = vpop.f32.mrb[0].mxu0
      %1874 = vmatprep.mubr.bf16.mxu0 %v987
      %1875 = vmatmul.mubr.bf16.gmra.mrb[0].mxu0 %v986
      %v1876 = vpop.f32.mrb[0].mxu0
      %v1877 = vadd.f32 %v1588, %v1876
      %v1878 = vpop.f32.mrb[0].mxu0
      %v1879 = vpop.f32.mrb[0].mxu0
      %v1880 = vadd.f32 %v1591, %v1879
      %v1881 = vpop.f32.mrb[0].mxu0
      %1882 = vmatprep.mubr.bf16.mxu0 %v992
      %1883 = vmatmul.mubr.bf16.gmra.mrb[0].mxu0 %v991
      %v1884 = vpop.f32.mrb[0].mxu0
      %v1885 = vadd.f32 %v1596, %v1884
      %v1886 = vpop.f32.mrb[0].mxu0
      %v1887 = vpop.f32.mrb[0].mxu0
      %v1888 = vadd.f32 %v1599, %v1887
      %v1889 = vpop.f32.mrb[0].mxu0
      %1890 = vmatprep.mubr.bf16.mxu0 %v997
      %1891 = vmatmul.mubr.bf16.gmra.mrb[0].mxu0 %v996
      %v1892 = vpop.f32.mrb[0].mxu0
      %v1893 = vadd.f32 %v1604, %v1892
      %v1894 = vpop.f32.mrb[0].mxu0
      %v1895 = vpop.f32.mrb[0].mxu0
      %v1896 = vadd.f32 %v1607, %v1895
      %v1897 = vpop.f32.mrb[0].mxu0
      %1898 = vmatprep.mubr.bf16.mxu0 %v1002
      %1899 = vmatmul.mubr.bf16.gmra.mrb[0].mxu0 %v1001
      %v1900 = vpop.f32.mrb[0].mxu0
      %v1901 = vadd.f32 %v1612, %v1900
      %v1902 = vpop.f32.mrb[0].mxu0
      %v1903 = vpop.f32.mrb[0].mxu0
      %v1904 = vadd.f32 %v1615, %v1903
      %v1905 = vpop.f32.mrb[0].mxu0
      %1906 = vmatprep.mubr.bf16.mxu0 %v1007
      %1907 = vmatmul.mubr.bf16.gmra.mrb[0].mxu0 %v1006
      %v1908 = vpop.f32.mrb[0].mxu0
      %v1909 = vadd.f32 %v1620, %v1908
      %v1910 = vpop.f32.mrb[0].mxu0
      %v1911 = vpop.f32.mrb[0].mxu0
      %v1912 = vadd.f32 %v1623, %v1911
      %v1913 = vpop.f32.mrb[0].mxu0
      %1914 = vmatprep.mubr.bf16.mxu0 %v1012
      %1915 = vmatmul.mubr.bf16.gmra.mrb[0].mxu0 %v1011
      %v1916 = vpop.f32.mrb[0].mxu0
      %v1917 = vadd.f32 %v1628, %v1916
      %v1918 = vpop.f32.mrb[0].mxu0
      %v1919 = vpop.f32.mrb[0].mxu0
      %v1920 = vadd.f32 %v1631, %v1919
      %v1921 = vpop.f32.mrb[0].mxu0
      %1922 = vmatprep.mubr.bf16.mxu0 %v1017
      %1923 = vmatmul.mubr.bf16.gmra.mrb[0].mxu0 %v1016
      %v1924 = vpop.f32.mrb[0].mxu0
      %v1925 = vadd.f32 %v1636, %v1924
      %v1926 = vpop.f32.mrb[0].mxu0
      %v1927 = vpop.f32.mrb[0].mxu0
      %v1928 = vadd.f32 %v1639, %v1927
      %v1929 = vpop.f32.mrb[0].mxu0
      %1930 = vmatprep.mubr.bf16.mxu0 %v1022
      %1931 = vmatmul.mubr.bf16.gmra.mrb[0].mxu0 %v1021
      %v1932 = vpop.f32.mrb[0].mxu0
      %v1933 = vadd.f32 %v1644, %v1932
      %v1934 = vpop.f32.mrb[0].mxu0
      %v1935 = vpop.f32.mrb[0].mxu0
      %v1936 = vadd.f32 %v1647, %v1935
      %v1937 = vpop.f32.mrb[0].mxu0
      %1938 = vmatprep.mubr.bf16.mxu0 %v1027
      %1939 = vmatmul.mubr.bf16.gmra.mrb[0].mxu0 %v1026
      %v1940 = vpop.f32.mrb[0].mxu0
      %v1941 = vadd.f32 %v1652, %v1940
      %v1942 = vpop.f32.mrb[0].mxu0
      %v1943 = vpop.f32.mrb[0].mxu0
      %v1944 = vadd.f32 %v1655, %v1943
      %v1945 = vpop.f32.mrb[0].mxu0
      %1946 = vmatprep.mubr.bf16.mxu0 %v1032
      %1947 = vmatmul.mubr.bf16.gmra.mrb[0].mxu0 %v1031
      %v1948 = vpop.f32.mrb[0].mxu0
      %v1949 = vadd.f32 %v1660, %v1948
      %v1950 = vpop.f32.mrb[0].mxu0
      %v1951 = vpop.f32.mrb[0].mxu0
      %v1952 = vadd.f32 %v1663, %v1951
      %v1953 = vpop.f32.mrb[0].mxu0
      %1954 = vmatprep.mubr.bf16.mxu0 %v1037
      %1955 = vmatmul.mubr.bf16.gmra.mrb[0].mxu0 %v1036
      %v1956 = vpop.f32.mrb[0].mxu0
      %v1957 = vadd.f32 %v1668, %v1956
      %v1958 = vpop.f32.mrb[0].mxu0
      %v1959 = vpop.f32.mrb[0].mxu0
      %v1960 = vadd.f32 %v1671, %v1959
      %v1961 = vpop.f32.mrb[0].mxu0
      %1962 = vmatprep.mubr.bf16.mxu0 %v1042
      %1963 = vmatmul.mubr.bf16.gmra.mrb[0].mxu0 %v1041
      %v1964 = vpop.f32.mrb[0].mxu0
      %v1965 = vadd.f32 %v1676, %v1964
      %v1966 = vpop.f32.mrb[0].mxu0
      %v1967 = vpop.f32.mrb[0].mxu0
      %v1968 = vadd.f32 %v1679, %v1967
      %v1969 = vpop.f32.mrb[0].mxu0
      %1970 = vmatprep.mubr.bf16.mxu0 %v1047
      %1971 = vmatmul.mubr.bf16.gmra.mrb[0].mxu0 %v1046
      %v1972 = vpop.f32.mrb[0].mxu0
      %v1973 = vadd.f32 %v1684, %v1972
      %v1974 = vpop.f32.mrb[0].mxu0
      %v1975 = vpop.f32.mrb[0].mxu0
      %v1976 = vadd.f32 %v1687, %v1975
      %v1977 = vpop.f32.mrb[0].mxu0
      %1978 = vmatprep.mubr.bf16.mxu0 %v1052
      %1979 = vmatmul.mubr.bf16.gmra.mrb[0].mxu0 %v1051
      %v1980 = vpop.f32.mrb[0].mxu0
      %v1981 = vadd.f32 %v1692, %v1980
      %v1982 = vpop.f32.mrb[0].mxu0
      %v1983 = vpop.f32.mrb[0].mxu0
      %v1984 = vadd.f32 %v1695, %v1983
      %v1985 = vpop.f32.mrb[0].mxu0
      %1986 = vmatprep.mubr.bf16.mxu0 %v1057
      %1987 = vmatmul.mubr.bf16.gmra.mrb[0].mxu0 %v1056
      %v1988 = vpop.f32.mrb[0].mxu0
      %v1989 = vadd.f32 %v1700, %v1988
      %v1990 = vpop.f32.mrb[0].mxu0
      %v1991 = vpop.f32.mrb[0].mxu0
      %v1992 = vadd.f32 %v1703, %v1991
      %v1993 = vpop.f32.mrb[0].mxu0
      %1994 = vmatprep.mubr.bf16.mxu0 %v1062
      %1995 = vmatmul.mubr.bf16.gmra.mrb[0].mxu0 %v1061
      %v1996 = vpop.f32.mrb[0].mxu0
      %v1997 = vadd.f32 %v1708, %v1996
      %v1998 = vpop.f32.mrb[0].mxu0
      %v1999 = vpop.f32.mrb[0].mxu0
      %v2000 = vadd.f32 %v1711, %v1999
      %v2001 = vpop.f32.mrb[0].mxu0
      %2002 = vmatprep.mubr.bf16.mxu0 %v1067
      %2003 = vmatmul.mubr.bf16.gmra.mrb[0].mxu0 %v1066
      %v2004 = vpop.f32.mrb[0].mxu0
      %v2005 = vadd.f32 %v1716, %v2004
      %v2006 = vpop.f32.mrb[0].mxu0
      %v2007 = vpop.f32.mrb[0].mxu0
      %v2008 = vadd.f32 %v1719, %v2007
      %v2009 = vpop.f32.mrb[0].mxu0
      %2010 = vmatprep.mubr.bf16.mxu0 %v1072
      %2011 = vmatmul.mubr.bf16.gmra.mrb[0].mxu0 %v1071
      %v2012 = vpop.f32.mrb[0].mxu0
      %v2013 = vadd.f32 %v1724, %v2012
      %v2014 = vpop.f32.mrb[0].mxu0
      %v2015 = vpop.f32.mrb[0].mxu0
      %v2016 = vadd.f32 %v1727, %v2015
      %v2017 = vpop.f32.mrb[0].mxu0
      %2018 = vmatprep.mubr.bf16.mxu0 %v1077
      %2019 = vmatmul.mubr.bf16.gmra.mrb[0].mxu0 %v1076
      %v2020 = vpop.f32.mrb[0].mxu0
      %v2021 = vadd.f32 %v1732, %v2020
      %v2022 = vpop.f32.mrb[0].mxu0
      %v2023 = vpop.f32.mrb[0].mxu0
      %v2024 = vadd.f32 %v1735, %v2023
      %v2025 = vpop.f32.mrb[0].mxu0
      %2026 = vmatprep.mubr.bf16.mxu0 %v1082
      %2027 = vmatmul.mubr.bf16.gmra.mrb[0].mxu0 %v1081
      %v2028 = vpop.f32.mrb[0].mxu0
      %v2029 = vadd.f32 %v1740, %v2028
      %v2030 = vpop.f32.mrb[0].mxu0
      %v2031 = vpop.f32.mrb[0].mxu0
      %v2032 = vadd.f32 %v1743, %v2031
      %v2033 = vpop.f32.mrb[0].mxu0
      %2034 = vmatprep.mubr.bf16.mxu0 %v1087
      %2035 = vmatmul.mubr.bf16.gmra.mrb[0].mxu0 %v1086
      %v2036 = vpop.f32.mrb[0].mxu0
      %v2037 = vadd.f32 %v1748, %v2036
      %v2038 = vpop.f32.mrb[0].mxu0
      %v2039 = vpop.f32.mrb[0].mxu0
      %v2040 = vadd.f32 %v1751, %v2039
      %v2041 = vpop.f32.mrb[0].mxu0
      %2042 = vmatprep.mubr.bf16.mxu0 %v1092
      %2043 = vmatmul.mubr.bf16.gmra.mrb[0].mxu0 %v1091
      %v2044 = vpop.f32.mrb[0].mxu0
      %v2045 = vadd.f32 %v1756, %v2044
      %v2046 = vpop.f32.mrb[0].mxu0
      %v2047 = vpop.f32.mrb[0].mxu0
      %v2048 = vadd.f32 %v1759, %v2047
      %v2049 = vpop.f32.mrb[0].mxu0
      %2050 = vmatprep.mubr.bf16.mxu0 %v1097
      %2051 = vmatmul.mubr.bf16.gmra.mrb[0].mxu0 %v1096
      %v2052 = vpop.f32.mrb[0].mxu0
      %v2053 = vadd.f32 %v1764, %v2052
      %v2054 = vpop.f32.mrb[0].mxu0
      %v2055 = vpop.f32.mrb[0].mxu0
      %v2056 = vadd.f32 %v1767, %v2055
      %v2057 = vpop.f32.mrb[0].mxu0
      %2058 = vmatprep.mubr.bf16.mxu0 %v1102
      %2059 = vmatmul.mubr.bf16.gmra.mrb[0].mxu0 %v1101
      %v2060 = vpop.f32.mrb[0].mxu0
      %v2061 = vadd.f32 %v1772, %v2060
      %v2062 = vpop.f32.mrb[0].mxu0
      %v2063 = vpop.f32.mrb[0].mxu0
      %v2064 = vadd.f32 %v1775, %v2063
      %v2065 = vpop.f32.mrb[0].mxu0
      %2066 = vmatprep.mubr.bf16.mxu0 %v1107
      %2067 = vmatmul.mubr.bf16.gmra.mrb[0].mxu0 %v1106
      %v2068 = vpop.f32.mrb[0].mxu0
      %v2069 = vadd.f32 %v1780, %v2068
      %v2070 = vpop.f32.mrb[0].mxu0
      %v2071 = vpop.f32.mrb[0].mxu0
      %v2072 = vadd.f32 %v1783, %v2071
      %v2073 = vpop.f32.mrb[0].mxu0
      %2074 = vmatprep.mubr.bf16.mxu0 %v1112
      %2075 = vmatmul.mubr.bf16.gmra.mrb[0].mxu0 %v1111
      %v2076 = vpop.f32.mrb[0].mxu0
      %v2077 = vadd.f32 %v1788, %v2076
      %v2078 = vpop.f32.mrb[0].mxu0
      %v2079 = vpop.f32.mrb[0].mxu0
      %v2080 = vadd.f32 %v1791, %v2079
      %v2081 = vpop.f32.mrb[0].mxu0
      %2082 = vmatprep.mubr.bf16.mxu0 %v1117
      %2083 = vmatmul.mubr.bf16.gmra.mrb[0].mxu0 %v1116
      %v2084 = vpop.f32.mrb[0].mxu0
      %v2085 = vadd.f32 %v1796, %v2084
      %v2086 = vpop.f32.mrb[0].mxu0
      %v2087 = vpop.f32.mrb[0].mxu0
      %v2088 = vadd.f32 %v1799, %v2087
      %v2089 = vpop.f32.mrb[0].mxu0
      %2090 = vmatprep.mubr.bf16.mxu0 %v1122
      %2091 = vmatmul.mubr.bf16.gmra.mrb[0].mxu0 %v1121
      %v2092 = vpop.f32.mrb[0].mxu0
      %v2093 = vadd.f32 %v1804, %v2092
      %v2094 = vpop.f32.mrb[0].mxu0
      %v2095 = vpop.f32.mrb[0].mxu0
      %v2096 = vadd.f32 %v1807, %v2095
      %v2097 = vpop.f32.mrb[0].mxu0
      %2098 = vmatprep.mubr.bf16.mxu0 %v1127
      %2099 = vmatmul.mubr.bf16.gmra.mrb[0].mxu0 %v1126
      %v2100 = vpop.f32.mrb[0].mxu0
      %v2101 = vadd.f32 %v1812, %v2100
      %v2102 = vpop.f32.mrb[0].mxu0
      %v2103 = vpop.f32.mrb[0].mxu0
      %v2104 = vadd.f32 %v1815, %v2103
      %v2105 = vpop.f32.mrb[0].mxu0
      %2106 = vdwg.mxu0
      %2107 = vmatprep.subr.bf16.mxu0 0
      %2108 = vmatpush1.bf16.msra.mxu0 %v1481
      %2109 = vmatprep.subr.bf16.mxu0 0
      %2110 = vmatpush1.bf16.msra.mxu0 %v1482
      %2111 = vmatprep.subr.bf16.mxu0 0
      %2112 = vmatpush1.bf16.msra.mxu0 %v1483
      %2113 = vmatprep.subr.bf16.mxu0 0
      %2114 = vmatpush1.bf16.msra.mxu0 %v1484
      %2115 = vmatprep.subr.bf16.mxu0 0
      %2116 = vmatpush1.bf16.msra.mxu0 %v1485
      %2117 = vmatprep.subr.bf16.mxu0 0
      %2118 = vmatpush1.bf16.msra.mxu0 %v1486
      %2119 = vmatprep.subr.bf16.mxu0 0
      %2120 = vmatpush1.bf16.msra.mxu0 %v1487
      %2121 = vmatprep.subr.bf16.mxu0 0
      %2122 = vmatpush1.bf16.msra.mxu0 %v1488
      %2123 = vmatprep.subr.bf16.mxu0 0
      %2124 = vmatpush1.bf16.msra.mxu0 0
      %2125 = vmatprep.subr.bf16.mxu0 0
      %2126 = vmatpush1.bf16.msra.mxu0 0
      %2127 = vmatprep.subr.bf16.mxu0 0
      %2128 = vmatpush1.bf16.msra.mxu0 0
      %2129 = vmatprep.subr.bf16.mxu0 0
      %2130 = vmatpush1.bf16.msra.mxu0 0
      %2131 = vmatprep.subr.bf16.mxu0 0
      %2132 = vmatpush1.bf16.msra.mxu0 0
      %2133 = vmatprep.subr.bf16.mxu0 0
      %2134 = vmatpush1.bf16.msra.mxu0 0
      %2135 = vmatprep.subr.bf16.mxu0 0
      %2136 = vmatpush1.bf16.msra.mxu0 0
      %2137 = vmatprep.subr.bf16.mxu0 0
      %2138 = vmatpush1.bf16.msra.mxu0 0
      %2139 = vmatprep.mubr.bf16.mxu0 0
      %2140 = vmatmul.mubr.bf16.gmra.mrb[0].mxu0 %v973
      %v2141 = vpop.f32.mrb[0].mxu0
      %v2142 = vadd.f32 %v1853, %v2141
      %v2143 = vpop.f32.mrb[0].mxu0
      %v2144 = vpop.f32.mrb[0].mxu0
      %v2145 = vadd.f32 %v1856, %v2144
      %v2146 = vpop.f32.mrb[0].mxu0
      %2147 = vmatprep.mubr.bf16.mxu0 0
      %2148 = vmatmul.mubr.bf16.gmra.mrb[0].mxu0 %v978
      %v2149 = vpop.f32.mrb[0].mxu0
      %v2150 = vadd.f32 %v1861, %v2149
      %v2151 = vpop.f32.mrb[0].mxu0
      %v2152 = vpop.f32.mrb[0].mxu0
      %v2153 = vadd.f32 %v1864, %v2152
      %v2154 = vpop.f32.mrb[0].mxu0
      %2155 = vmatprep.mubr.bf16.mxu0 0
      %2156 = vmatmul.mubr.bf16.gmra.mrb[0].mxu0 %v983
      %v2157 = vpop.f32.mrb[0].mxu0
      %v2158 = vadd.f32 %v1869, %v2157
      %v2159 = vpop.f32.mrb[0].mxu0
      %v2160 = vpop.f32.mrb[0].mxu0
      %v2161 = vadd.f32 %v1872, %v2160
      %v2162 = vpop.f32.mrb[0].mxu0
      %2163 = vmatprep.mubr.bf16.mxu0 0
      %2164 = vmatmul.mubr.bf16.gmra.mrb[0].mxu0 %v988
      %v2165 = vpop.f32.mrb[0].mxu0
      %v2166 = vadd.f32 %v1877, %v2165
      %v2167 = vpop.f32.mrb[0].mxu0
      %v2168 = vpop.f32.mrb[0].mxu0
      %v2169 = vadd.f32 %v1880, %v2168
      %v2170 = vpop.f32.mrb[0].mxu0
      %2171 = vmatprep.mubr.bf16.mxu0 0
      %2172 = vmatmul.mubr.bf16.gmra.mrb[0].mxu0 %v993
      %v2173 = vpop.f32.mrb[0].mxu0
      %v2174 = vadd.f32 %v1885, %v2173
      %v2175 = vpop.f32.mrb[0].mxu0
      %v2176 = vpop.f32.mrb[0].mxu0
      %v2177 = vadd.f32 %v1888, %v2176
      %v2178 = vpop.f32.mrb[0].mxu0
      %2179 = vmatprep.mubr.bf16.mxu0 0
      %2180 = vmatmul.mubr.bf16.gmra.mrb[0].mxu0 %v998
      %v2181 = vpop.f32.mrb[0].mxu0
      %v2182 = vadd.f32 %v1893, %v2181
      %v2183 = vpop.f32.mrb[0].mxu0
      %v2184 = vpop.f32.mrb[0].mxu0
      %v2185 = vadd.f32 %v1896, %v2184
      %v2186 = vpop.f32.mrb[0].mxu0
      %2187 = vmatprep.mubr.bf16.mxu0 0
      %2188 = vmatmul.mubr.bf16.gmra.mrb[0].mxu0 %v1003
      %v2189 = vpop.f32.mrb[0].mxu0
      %v2190 = vadd.f32 %v1901, %v2189
      %v2191 = vpop.f32.mrb[0].mxu0
      %v2192 = vpop.f32.mrb[0].mxu0
      %v2193 = vadd.f32 %v1904, %v2192
      %v2194 = vpop.f32.mrb[0].mxu0
      %2195 = vmatprep.mubr.bf16.mxu0 0
      %2196 = vmatmul.mubr.bf16.gmra.mrb[0].mxu0 %v1008
      %v2197 = vpop.f32.mrb[0].mxu0
      %v2198 = vadd.f32 %v1909, %v2197
      %v2199 = vpop.f32.mrb[0].mxu0
      %v2200 = vpop.f32.mrb[0].mxu0
      %v2201 = vadd.f32 %v1912, %v2200
      %v2202 = vpop.f32.mrb[0].mxu0
      %2203 = vmatprep.mubr.bf16.mxu0 0
      %2204 = vmatmul.mubr.bf16.gmra.mrb[0].mxu0 %v1013
      %v2205 = vpop.f32.mrb[0].mxu0
      %v2206 = vadd.f32 %v1917, %v2205
      %v2207 = vpop.f32.mrb[0].mxu0
      %v2208 = vpop.f32.mrb[0].mxu0
      %v2209 = vadd.f32 %v1920, %v2208
      %v2210 = vpop.f32.mrb[0].mxu0
      %2211 = vmatprep.mubr.bf16.mxu0 0
      %2212 = vmatmul.mubr.bf16.gmra.mrb[0].mxu0 %v1018
      %v2213 = vpop.f32.mrb[0].mxu0
      %v2214 = vadd.f32 %v1925, %v2213
      %v2215 = vpop.f32.mrb[0].mxu0
      %v2216 = vpop.f32.mrb[0].mxu0
      %v2217 = vadd.f32 %v1928, %v2216
      %v2218 = vpop.f32.mrb[0].mxu0
      %2219 = vmatprep.mubr.bf16.mxu0 0
      %2220 = vmatmul.mubr.bf16.gmra.mrb[0].mxu0 %v1023
      %v2221 = vpop.f32.mrb[0].mxu0
      %v2222 = vadd.f32 %v1933, %v2221
      %v2223 = vpop.f32.mrb[0].mxu0
      %v2224 = vpop.f32.mrb[0].mxu0
      %v2225 = vadd.f32 %v1936, %v2224
      %v2226 = vpop.f32.mrb[0].mxu0
      %2227 = vmatprep.mubr.bf16.mxu0 0
      %2228 = vmatmul.mubr.bf16.gmra.mrb[0].mxu0 %v1028
      %v2229 = vpop.f32.mrb[0].mxu0
      %v2230 = vadd.f32 %v1941, %v2229
      %v2231 = vpop.f32.mrb[0].mxu0
      %v2232 = vpop.f32.mrb[0].mxu0
      %v2233 = vadd.f32 %v1944, %v2232
      %v2234 = vpop.f32.mrb[0].mxu0
      %2235 = vmatprep.mubr.bf16.mxu0 0
      %2236 = vmatmul.mubr.bf16.gmra.mrb[0].mxu0 %v1033
      %v2237 = vpop.f32.mrb[0].mxu0
      %v2238 = vadd.f32 %v1949, %v2237
      %v2239 = vpop.f32.mrb[0].mxu0
      %v2240 = vpop.f32.mrb[0].mxu0
      %v2241 = vadd.f32 %v1952, %v2240
      %v2242 = vpop.f32.mrb[0].mxu0
      %2243 = vmatprep.mubr.bf16.mxu0 0
      %2244 = vmatmul.mubr.bf16.gmra.mrb[0].mxu0 %v1038
      %v2245 = vpop.f32.mrb[0].mxu0
      %v2246 = vadd.f32 %v1957, %v2245
      %v2247 = vpop.f32.mrb[0].mxu0
      %v2248 = vpop.f32.mrb[0].mxu0
      %v2249 = vadd.f32 %v1960, %v2248
      %v2250 = vpop.f32.mrb[0].mxu0
      %2251 = vmatprep.mubr.bf16.mxu0 0
      %2252 = vmatmul.mubr.bf16.gmra.mrb[0].mxu0 %v1043
      %v2253 = vpop.f32.mrb[0].mxu0
      %v2254 = vadd.f32 %v1965, %v2253
      %v2255 = vpop.f32.mrb[0].mxu0
      %v2256 = vpop.f32.mrb[0].mxu0
      %v2257 = vadd.f32 %v1968, %v2256
      %v2258 = vpop.f32.mrb[0].mxu0
      %2259 = vmatprep.mubr.bf16.mxu0 0
      %2260 = vmatmul.mubr.bf16.gmra.mrb[0].mxu0 %v1048
      %v2261 = vpop.f32.mrb[0].mxu0
      %v2262 = vadd.f32 %v1973, %v2261
      %v2263 = vpop.f32.mrb[0].mxu0
      %v2264 = vpop.f32.mrb[0].mxu0
      %v2265 = vadd.f32 %v1976, %v2264
      %v2266 = vpop.f32.mrb[0].mxu0
      %2267 = vmatprep.mubr.bf16.mxu0 0
      %2268 = vmatmul.mubr.bf16.gmra.mrb[0].mxu0 %v1053
      %v2269 = vpop.f32.mrb[0].mxu0
      %v2270 = vadd.f32 %v1981, %v2269
      %v2271 = vpop.f32.mrb[0].mxu0
      %v2272 = vpop.f32.mrb[0].mxu0
      %v2273 = vadd.f32 %v1984, %v2272
      %v2274 = vpop.f32.mrb[0].mxu0
      %2275 = vmatprep.mubr.bf16.mxu0 0
      %2276 = vmatmul.mubr.bf16.gmra.mrb[0].mxu0 %v1058
      %v2277 = vpop.f32.mrb[0].mxu0
      %v2278 = vadd.f32 %v1989, %v2277
      %v2279 = vpop.f32.mrb[0].mxu0
      %v2280 = vpop.f32.mrb[0].mxu0
      %v2281 = vadd.f32 %v1992, %v2280
      %v2282 = vpop.f32.mrb[0].mxu0
      %2283 = vmatprep.mubr.bf16.mxu0 0
      %2284 = vmatmul.mubr.bf16.gmra.mrb[0].mxu0 %v1063
      %v2285 = vpop.f32.mrb[0].mxu0
      %v2286 = vadd.f32 %v1997, %v2285
      %v2287 = vpop.f32.mrb[0].mxu0
      %v2288 = vpop.f32.mrb[0].mxu0
      %v2289 = vadd.f32 %v2000, %v2288
      %v2290 = vpop.f32.mrb[0].mxu0
      %2291 = vmatprep.mubr.bf16.mxu0 0
      %2292 = vmatmul.mubr.bf16.gmra.mrb[0].mxu0 %v1068
      %v2293 = vpop.f32.mrb[0].mxu0
      %v2294 = vadd.f32 %v2005, %v2293
      %v2295 = vpop.f32.mrb[0].mxu0
      %v2296 = vpop.f32.mrb[0].mxu0
      %v2297 = vadd.f32 %v2008, %v2296
      %v2298 = vpop.f32.mrb[0].mxu0
      %2299 = vmatprep.mubr.bf16.mxu0 0
      %2300 = vmatmul.mubr.bf16.gmra.mrb[0].mxu0 %v1073
      %v2301 = vpop.f32.mrb[0].mxu0
      %v2302 = vadd.f32 %v2013, %v2301
      %v2303 = vpop.f32.mrb[0].mxu0
      %v2304 = vpop.f32.mrb[0].mxu0
      %v2305 = vadd.f32 %v2016, %v2304
      %v2306 = vpop.f32.mrb[0].mxu0
      %2307 = vmatprep.mubr.bf16.mxu0 0
      %2308 = vmatmul.mubr.bf16.gmra.mrb[0].mxu0 %v1078
      %v2309 = vpop.f32.mrb[0].mxu0
      %v2310 = vadd.f32 %v2021, %v2309
      %v2311 = vpop.f32.mrb[0].mxu0
      %v2312 = vpop.f32.mrb[0].mxu0
      %v2313 = vadd.f32 %v2024, %v2312
      %v2314 = vpop.f32.mrb[0].mxu0
      %2315 = vmatprep.mubr.bf16.mxu0 0
      %2316 = vmatmul.mubr.bf16.gmra.mrb[0].mxu0 %v1083
      %v2317 = vpop.f32.mrb[0].mxu0
      %v2318 = vadd.f32 %v2029, %v2317
      %v2319 = vpop.f32.mrb[0].mxu0
      %v2320 = vpop.f32.mrb[0].mxu0
      %v2321 = vadd.f32 %v2032, %v2320
      %v2322 = vpop.f32.mrb[0].mxu0
      %2323 = vmatprep.mubr.bf16.mxu0 0
      %2324 = vmatmul.mubr.bf16.gmra.mrb[0].mxu0 %v1088
      %v2325 = vpop.f32.mrb[0].mxu0
      %v2326 = vadd.f32 %v2037, %v2325
      %v2327 = vpop.f32.mrb[0].mxu0
      %v2328 = vpop.f32.mrb[0].mxu0
      %v2329 = vadd.f32 %v2040, %v2328
      %v2330 = vpop.f32.mrb[0].mxu0
      %2331 = vmatprep.mubr.bf16.mxu0 0
      %2332 = vmatmul.mubr.bf16.gmra.mrb[0].mxu0 %v1093
      %v2333 = vpop.f32.mrb[0].mxu0
      %v2334 = vadd.f32 %v2045, %v2333
      %v2335 = vpop.f32.mrb[0].mxu0
      %v2336 = vpop.f32.mrb[0].mxu0
      %v2337 = vadd.f32 %v2048, %v2336
      %v2338 = vpop.f32.mrb[0].mxu0
      %2339 = vmatprep.mubr.bf16.mxu0 0
      %2340 = vmatmul.mubr.bf16.gmra.mrb[0].mxu0 %v1098
      %v2341 = vpop.f32.mrb[0].mxu0
      %v2342 = vadd.f32 %v2053, %v2341
      %v2343 = vpop.f32.mrb[0].mxu0
      %v2344 = vpop.f32.mrb[0].mxu0
      %v2345 = vadd.f32 %v2056, %v2344
      %v2346 = vpop.f32.mrb[0].mxu0
      %2347 = vmatprep.mubr.bf16.mxu0 0
      %2348 = vmatmul.mubr.bf16.gmra.mrb[0].mxu0 %v1103
      %v2349 = vpop.f32.mrb[0].mxu0
      %v2350 = vadd.f32 %v2061, %v2349
      %v2351 = vpop.f32.mrb[0].mxu0
      %v2352 = vpop.f32.mrb[0].mxu0
      %v2353 = vadd.f32 %v2064, %v2352
      %v2354 = vpop.f32.mrb[0].mxu0
      %2355 = vmatprep.mubr.bf16.mxu0 0
      %2356 = vmatmul.mubr.bf16.gmra.mrb[0].mxu0 %v1108
      %v2357 = vpop.f32.mrb[0].mxu0
      %v2358 = vadd.f32 %v2069, %v2357
      %v2359 = vpop.f32.mrb[0].mxu0
      %v2360 = vpop.f32.mrb[0].mxu0
      %v2361 = vadd.f32 %v2072, %v2360
      %v2362 = vpop.f32.mrb[0].mxu0
      %2363 = vmatprep.mubr.bf16.mxu0 0
      %2364 = vmatmul.mubr.bf16.gmra.mrb[0].mxu0 %v1113
      %v2365 = vpop.f32.mrb[0].mxu0
      %v2366 = vadd.f32 %v2077, %v2365
      %v2367 = vpop.f32.mrb[0].mxu0
      %v2368 = vpop.f32.mrb[0].mxu0
      %v2369 = vadd.f32 %v2080, %v2368
      %v2370 = vpop.f32.mrb[0].mxu0
      %2371 = vmatprep.mubr.bf16.mxu0 0
      %2372 = vmatmul.mubr.bf16.gmra.mrb[0].mxu0 %v1118
      %v2373 = vpop.f32.mrb[0].mxu0
      %v2374 = vadd.f32 %v2085, %v2373
      %v2375 = vpop.f32.mrb[0].mxu0
      %v2376 = vpop.f32.mrb[0].mxu0
      %v2377 = vadd.f32 %v2088, %v2376
      %v2378 = vpop.f32.mrb[0].mxu0
      %2379 = vmatprep.mubr.bf16.mxu0 0
      %2380 = vmatmul.mubr.bf16.gmra.mrb[0].mxu0 %v1123
      %v2381 = vpop.f32.mrb[0].mxu0
      %v2382 = vadd.f32 %v2093, %v2381
      %v2383 = vpop.f32.mrb[0].mxu0
      %v2384 = vpop.f32.mrb[0].mxu0
      %v2385 = vadd.f32 %v2096, %v2384
      %v2386 = vpop.f32.mrb[0].mxu0
      %2387 = vmatprep.mubr.bf16.mxu0 0
      %2388 = vmatmul.mubr.bf16.gmra.mrb[0].mxu0 %v1128
      %v2389 = vpop.f32.mrb[0].mxu0
      %v2390 = vadd.f32 %v2101, %v2389
      %v2391 = vpop.f32.mrb[0].mxu0
      %v2392 = vpop.f32.mrb[0].mxu0
      %v2393 = vadd.f32 %v2104, %v2392
      %v2394 = vpop.f32.mrb[0].mxu0
      %2395 = vdwg.mxu0
      %v2396 = vmax.f32 %v2142, 0.0
      %v2397 = vmax.f32 %v2145, 0.0
      %v2398 = vmax.f32 %v2150, 0.0
      %v2399 = vmax.f32 %v2153, 0.0
      %v2400 = vmax.f32 %v2158, 0.0
      %v2401 = vmax.f32 %v2161, 0.0
      %v2402 = vmax.f32 %v2166, 0.0
      %v2403 = vmax.f32 %v2169, 0.0
      %v2404 = vmax.f32 %v2174, 0.0
      %v2405 = vmax.f32 %v2177, 0.0
      %v2406 = vmax.f32 %v2182, 0.0
      %v2407 = vmax.f32 %v2185, 0.0
      %v2408 = vmax.f32 %v2190, 0.0
      %v2409 = vmax.f32 %v2193, 0.0
      %v2410 = vmax.f32 %v2198, 0.0
      %v2411 = vmax.f32 %v2201, 0.0
      %v2412 = vmax.f32 %v2206, 0.0
      %v2413 = vmax.f32 %v2209, 0.0
      %v2414 = vmax.f32 %v2214, 0.0
      %v2415 = vmax.f32 %v2217, 0.0
      %v2416 = vmax.f32 %v2222, 0.0
      %v2417 = vmax.f32 %v2225, 0.0
      %v2418 = vmax.f32 %v2230, 0.0
      %v2419 = vmax.f32 %v2233, 0.0
      %v2420 = vmax.f32 %v2238, 0.0
      %v2421 = vmax.f32 %v2241, 0.0
      %v2422 = vmax.f32 %v2246, 0.0
      %v2423 = vmax.f32 %v2249, 0.0
      %v2424 = vmax.f32 %v2254, 0.0
      %v2425 = vmax.f32 %v2257, 0.0
      %v2426 = vmax.f32 %v2262, 0.0
      %v2427 = vmax.f32 %v2265, 0.0
      %v2428 = vmax.f32 %v2270, 0.0
      %v2429 = vmax.f32 %v2273, 0.0
      %v2430 = vmax.f32 %v2278, 0.0
      %v2431 = vmax.f32 %v2281, 0.0
      %v2432 = vmax.f32 %v2286, 0.0
      %v2433 = vmax.f32 %v2289, 0.0
      %v2434 = vmax.f32 %v2294, 0.0
      %v2435 = vmax.f32 %v2297, 0.0
      %v2436 = vmax.f32 %v2302, 0.0
      %v2437 = vmax.f32 %v2305, 0.0
      %v2438 = vmax.f32 %v2310, 0.0
      %v2439 = vmax.f32 %v2313, 0.0
      %v2440 = vmax.f32 %v2318, 0.0
      %v2441 = vmax.f32 %v2321, 0.0
      %v2442 = vmax.f32 %v2326, 0.0
      %v2443 = vmax.f32 %v2329, 0.0
      %v2444 = vmax.f32 %v2334, 0.0
      %v2445 = vmax.f32 %v2337, 0.0
      %v2446 = vmax.f32 %v2342, 0.0
      %v2447 = vmax.f32 %v2345, 0.0
      %v2448 = vmax.f32 %v2350, 0.0
      %v2449 = vmax.f32 %v2353, 0.0
      %v2450 = vmax.f32 %v2358, 0.0
      %v2451 = vmax.f32 %v2361, 0.0
      %v2452 = vmax.f32 %v2366, 0.0
      %v2453 = vmax.f32 %v2369, 0.0
      %v2454 = vmax.f32 %v2374, 0.0
      %v2455 = vmax.f32 %v2377, 0.0
      %v2456 = vmax.f32 %v2382, 0.0
      %v2457 = vmax.f32 %v2385, 0.0
      %v2458 = vmax.f32 %v2390, 0.0
      %v2459 = vmax.f32 %v2393, 0.0
      %v2460 = vpack.c.bf16 %v2397, %v2396
      %v2461 = vpack.c.bf16 %v2399, %v2398
      %v2462 = vpack.c.bf16 %v2401, %v2400
      %v2463 = vpack.c.bf16 %v2403, %v2402
      %v2464 = vpack.c.bf16 %v2405, %v2404
      %v2465 = vpack.c.bf16 %v2407, %v2406
      %v2466 = vpack.c.bf16 %v2409, %v2408
      %v2467 = vpack.c.bf16 %v2411, %v2410
      %v2468 = vpack.c.bf16 %v2413, %v2412
      %v2469 = vpack.c.bf16 %v2415, %v2414
      %v2470 = vpack.c.bf16 %v2417, %v2416
      %v2471 = vpack.c.bf16 %v2419, %v2418
      %v2472 = vpack.c.bf16 %v2421, %v2420
      %v2473 = vpack.c.bf16 %v2423, %v2422
      %v2474 = vpack.c.bf16 %v2425, %v2424
      %v2475 = vpack.c.bf16 %v2427, %v2426
      %v2476 = vpack.c.bf16 %v2429, %v2428
      %v2477 = vpack.c.bf16 %v2431, %v2430
      %v2478 = vpack.c.bf16 %v2433, %v2432
      %v2479 = vpack.c.bf16 %v2435, %v2434
      %v2480 = vpack.c.bf16 %v2437, %v2436
      %v2481 = vpack.c.bf16 %v2439, %v2438
      %v2482 = vpack.c.bf16 %v2441, %v2440
      %v2483 = vpack.c.bf16 %v2443, %v2442
      %v2484 = vpack.c.bf16 %v2445, %v2444
      %v2485 = vpack.c.bf16 %v2447, %v2446
      %v2486 = vpack.c.bf16 %v2449, %v2448
      %v2487 = vpack.c.bf16 %v2451, %v2450
      %v2488 = vpack.c.bf16 %v2453, %v2452
      %v2489 = vpack.c.bf16 %v2455, %v2454
      %v2490 = vpack.c.bf16 %v2457, %v2456
      %v2491 = vpack.c.bf16 %v2459, %v2458
      %v2524 = vunpack.c.l.b16 %v2460
      %v2525 = vunpack.c.h.b16 %v2460
      %v2526 = vunpack.c.l.b16 %v2461
      %v2527 = vunpack.c.h.b16 %v2461
      %v2528 = vunpack.c.l.b16 %v2462
      %v2529 = vunpack.c.h.b16 %v2462
      %v2530 = vunpack.c.l.b16 %v2463
      %v2531 = vunpack.c.h.b16 %v2463
      %v2532 = vunpack.c.l.b16 %v2464
      %v2533 = vunpack.c.h.b16 %v2464
      %v2534 = vunpack.c.l.b16 %v2465
      %v2535 = vunpack.c.h.b16 %v2465
      %v2536 = vunpack.c.l.b16 %v2466
      %v2537 = vunpack.c.h.b16 %v2466
      %v2538 = vunpack.c.l.b16 %v2467
      %v2539 = vunpack.c.h.b16 %v2467
      %v2540 = vunpack.c.l.b16 %v2468
      %v2541 = vunpack.c.h.b16 %v2468
      %v2542 = vunpack.c.l.b16 %v2469
      %v2543 = vunpack.c.h.b16 %v2469
      %v2544 = vunpack.c.l.b16 %v2470
      %v2545 = vunpack.c.h.b16 %v2470
      %v2546 = vunpack.c.l.b16 %v2471
      %v2547 = vunpack.c.h.b16 %v2471
      %v2548 = vunpack.c.l.b16 %v2472
      %v2549 = vunpack.c.h.b16 %v2472
      %v2550 = vunpack.c.l.b16 %v2473
      %v2551 = vunpack.c.h.b16 %v2473
      %v2552 = vunpack.c.l.b16 %v2474
      %v2553 = vunpack.c.h.b16 %v2474
      %v2554 = vunpack.c.l.b16 %v2475
      %v2555 = vunpack.c.h.b16 %v2475
      %v2556 = vunpack.c.l.b16 %v2476
      %v2557 = vunpack.c.h.b16 %v2476
      %v2558 = vunpack.c.l.b16 %v2477
      %v2559 = vunpack.c.h.b16 %v2477
      %v2560 = vunpack.c.l.b16 %v2478
      %v2561 = vunpack.c.h.b16 %v2478
      %v2562 = vunpack.c.l.b16 %v2479
      %v2563 = vunpack.c.h.b16 %v2479
      %v2564 = vunpack.c.l.b16 %v2480
      %v2565 = vunpack.c.h.b16 %v2480
      %v2566 = vunpack.c.l.b16 %v2481
      %v2567 = vunpack.c.h.b16 %v2481
      %v2568 = vunpack.c.l.b16 %v2482
      %v2569 = vunpack.c.h.b16 %v2482
      %v2570 = vunpack.c.l.b16 %v2483
      %v2571 = vunpack.c.h.b16 %v2483
      %v2572 = vunpack.c.l.b16 %v2484
      %v2573 = vunpack.c.h.b16 %v2484
      %v2574 = vunpack.c.l.b16 %v2485
      %v2575 = vunpack.c.h.b16 %v2485
      %v2576 = vunpack.c.l.b16 %v2486
      %v2577 = vunpack.c.h.b16 %v2486
      %v2578 = vunpack.c.l.b16 %v2487
      %v2579 = vunpack.c.h.b16 %v2487
      %v2580 = vunpack.c.l.b16 %v2488
      %v2581 = vunpack.c.h.b16 %v2488
      %v2582 = vunpack.c.l.b16 %v2489
      %v2583 = vunpack.c.h.b16 %v2489
      %v2584 = vunpack.c.l.b16 %v2490
      %v2585 = vunpack.c.h.b16 %v2490
      %v2586 = vunpack.c.l.b16 %v2491
      %v2587 = vunpack.c.h.b16 %v2491
      %v2588 = vpack.c.b16 %v2524, %v2524
      %v2589 = vpack.c.b16 %v2525, %v2525
      %v2590 = vpack.c.b16 %v2526, %v2526
      %v2591 = vpack.c.b16 %v2527, %v2527
      %v2592 = vpack.c.b16 %v2528, %v2528
      %v2593 = vpack.c.b16 %v2529, %v2529
      %v2594 = vpack.c.b16 %v2530, %v2530
      %v2595 = vpack.c.b16 %v2531, %v2531
      %v2596 = vpack.c.b16 %v2532, %v2532
      %v2597 = vpack.c.b16 %v2533, %v2533
      %v2598 = vpack.c.b16 %v2534, %v2534
      %v2599 = vpack.c.b16 %v2535, %v2535
      %v2600 = vpack.c.b16 %v2536, %v2536
      %v2601 = vpack.c.b16 %v2537, %v2537
      %v2602 = vpack.c.b16 %v2538, %v2538
      %v2603 = vpack.c.b16 %v2539, %v2539
      %v2604 = vpack.c.b16 %v2540, %v2540
      %v2605 = vpack.c.b16 %v2541, %v2541
      %v2606 = vpack.c.b16 %v2542, %v2542
      %v2607 = vpack.c.b16 %v2543, %v2543
      %v2608 = vpack.c.b16 %v2544, %v2544
      %v2609 = vpack.c.b16 %v2545, %v2545
      %v2610 = vpack.c.b16 %v2546, %v2546
      %v2611 = vpack.c.b16 %v2547, %v2547
      %v2612 = vpack.c.b16 %v2548, %v2548
      %v2613 = vpack.c.b16 %v2549, %v2549
      %v2614 = vpack.c.b16 %v2550, %v2550
      %v2615 = vpack.c.b16 %v2551, %v2551
      %v2616 = vpack.c.b16 %v2552, %v2552
      %v2617 = vpack.c.b16 %v2553, %v2553
      %v2618 = vpack.c.b16 %v2554, %v2554
      %v2619 = vpack.c.b16 %v2555, %v2555
      %v2620 = vpack.c.b16 %v2556, %v2556
      %v2621 = vpack.c.b16 %v2557, %v2557
      %v2622 = vpack.c.b16 %v2558, %v2558
      %v2623 = vpack.c.b16 %v2559, %v2559
      %v2624 = vpack.c.b16 %v2560, %v2560
      %v2625 = vpack.c.b16 %v2561, %v2561
      %v2626 = vpack.c.b16 %v2562, %v2562
      %v2627 = vpack.c.b16 %v2563, %v2563
      %v2628 = vpack.c.b16 %v2564, %v2564
      %v2629 = vpack.c.b16 %v2565, %v2565
      %v2630 = vpack.c.b16 %v2566, %v2566
      %v2631 = vpack.c.b16 %v2567, %v2567
      %v2632 = vpack.c.b16 %v2568, %v2568
      %v2633 = vpack.c.b16 %v2569, %v2569
      %v2634 = vpack.c.b16 %v2570, %v2570
      %v2635 = vpack.c.b16 %v2571, %v2571
      %v2636 = vpack.c.b16 %v2572, %v2572
      %v2637 = vpack.c.b16 %v2573, %v2573
      %v2638 = vpack.c.b16 %v2574, %v2574
      %v2639 = vpack.c.b16 %v2575, %v2575
      %v2640 = vpack.c.b16 %v2576, %v2576
      %v2641 = vpack.c.b16 %v2577, %v2577
      %v2642 = vpack.c.b16 %v2578, %v2578
      %v2643 = vpack.c.b16 %v2579, %v2579
      %v2644 = vpack.c.b16 %v2580, %v2580
      %v2645 = vpack.c.b16 %v2581, %v2581
      %v2646 = vpack.c.b16 %v2582, %v2582
      %v2647 = vpack.c.b16 %v2583, %v2583
      %v2648 = vpack.c.b16 %v2584, %v2584
      %v2649 = vpack.c.b16 %v2585, %v2585
      %v2650 = vpack.c.b16 %v2586, %v2586
      %v2651 = vpack.c.b16 %v2587, %v2587
      %vm2716 = vcmask 519168
      %2717 = vst.msk [vmem:[%s175] sm:$0xf] %vm2716, %v2588
      %2718 = vst.msk [vmem:[%s175 + $0x4] sm:$0xf] %vm2716, %v2589
      %2719 = vst.msk [vmem:[%s175 + $0x8] sm:$0xf] %vm2716, %v2590
      %2720 = vst.msk [vmem:[%s175 + $0xc] sm:$0xf] %vm2716, %v2591
      %2721 = vst.msk [vmem:[%s175 + $0x10] sm:$0xf] %vm2716, %v2592
      %2722 = vst.msk [vmem:[%s175 + $0x14] sm:$0xf] %vm2716, %v2593
      %2723 = vst.msk [vmem:[%s175 + $0x18] sm:$0xf] %vm2716, %v2594
      %2724 = vst.msk [vmem:[%s175 + $0x1c] sm:$0xf] %vm2716, %v2595
      %2725 = vst.msk [vmem:[%s175 + $0x20] sm:$0xf] %vm2716, %v2596
      %2726 = vst.msk [vmem:[%s175 + $0x24] sm:$0xf] %vm2716, %v2597
      %2727 = vst.msk [vmem:[%s175 + $0x28] sm:$0xf] %vm2716, %v2598
      %2728 = vst.msk [vmem:[%s175 + $0x2c] sm:$0xf] %vm2716, %v2599
      %2729 = vst.msk [vmem:[%s175 + $0x30] sm:$0xf] %vm2716, %v2600
      %2730 = vst.msk [vmem:[%s175 + $0x34] sm:$0xf] %vm2716, %v2601
      %2731 = vst.msk [vmem:[%s175 + $0x38] sm:$0xf] %vm2716, %v2602
      %2732 = vst.msk [vmem:[%s175 + $0x3c] sm:$0xf] %vm2716, %v2603
      %2733 = vst.msk [vmem:[%s175 + $0x40] sm:$0xf] %vm2716, %v2604
      %2734 = vst.msk [vmem:[%s175 + $0x44] sm:$0xf] %vm2716, %v2605
      %2735 = vst.msk [vmem:[%s175 + $0x48] sm:$0xf] %vm2716, %v2606
      %2736 = vst.msk [vmem:[%s175 + $0x4c] sm:$0xf] %vm2716, %v2607
      %2737 = vst.msk [vmem:[%s175 + $0x50] sm:$0xf] %vm2716, %v2608
      %2738 = vst.msk [vmem:[%s175 + $0x54] sm:$0xf] %vm2716, %v2609
      %2739 = vst.msk [vmem:[%s175 + $0x58] sm:$0xf] %vm2716, %v2610
      %2740 = vst.msk [vmem:[%s175 + $0x5c] sm:$0xf] %vm2716, %v2611
      %2741 = vst.msk [vmem:[%s175 + $0x60] sm:$0xf] %vm2716, %v2612
      %2742 = vst.msk [vmem:[%s175 + $0x64] sm:$0xf] %vm2716, %v2613
      %2743 = vst.msk [vmem:[%s175 + $0x68] sm:$0xf] %vm2716, %v2614
      %2744 = vst.msk [vmem:[%s175 + $0x6c] sm:$0xf] %vm2716, %v2615
      %2745 = vst.msk [vmem:[%s175 + $0x70] sm:$0xf] %vm2716, %v2616
      %2746 = vst.msk [vmem:[%s175 + $0x74] sm:$0xf] %vm2716, %v2617
      %2747 = vst.msk [vmem:[%s175 + $0x78] sm:$0xf] %vm2716, %v2618
      %2748 = vst.msk [vmem:[%s175 + $0x7c] sm:$0xf] %vm2716, %v2619
      %2749 = vst.msk [vmem:[%s175 + $0x80] sm:$0xf] %vm2716, %v2620
      %2750 = vst.msk [vmem:[%s175 + $0x84] sm:$0xf] %vm2716, %v2621
      %2751 = vst.msk [vmem:[%s175 + $0x88] sm:$0xf] %vm2716, %v2622
      %2752 = vst.msk [vmem:[%s175 + $0x8c] sm:$0xf] %vm2716, %v2623
      %2753 = vst.msk [vmem:[%s175 + $0x90] sm:$0xf] %vm2716, %v2624
      %2754 = vst.msk [vmem:[%s175 + $0x94] sm:$0xf] %vm2716, %v2625
      %2755 = vst.msk [vmem:[%s175 + $0x98] sm:$0xf] %vm2716, %v2626
      %2756 = vst.msk [vmem:[%s175 + $0x9c] sm:$0xf] %vm2716, %v2627
      %2757 = vst.msk [vmem:[%s175 + $0xa0] sm:$0xf] %vm2716, %v2628
      %2758 = vst.msk [vmem:[%s175 + $0xa4] sm:$0xf] %vm2716, %v2629
      %2759 = vst.msk [vmem:[%s175 + $0xa8] sm:$0xf] %vm2716, %v2630
      %2760 = vst.msk [vmem:[%s175 + $0xac] sm:$0xf] %vm2716, %v2631
      %2761 = vst.msk [vmem:[%s175 + $0xb0] sm:$0xf] %vm2716, %v2632
      %2762 = vst.msk [vmem:[%s175 + $0xb4] sm:$0xf] %vm2716, %v2633
      %2763 = vst.msk [vmem:[%s175 + $0xb8] sm:$0xf] %vm2716, %v2634
      %2764 = vst.msk [vmem:[%s175 + $0xbc] sm:$0xf] %vm2716, %v2635
      %2765 = vst.msk [vmem:[%s175 + $0xc0] sm:$0xf] %vm2716, %v2636
      %2766 = vst.msk [vmem:[%s175 + $0xc4] sm:$0xf] %vm2716, %v2637
      %2767 = vst.msk [vmem:[%s175 + $0xc8] sm:$0xf] %vm2716, %v2638
      %2768 = vst.msk [vmem:[%s175 + $0xcc] sm:$0xf] %vm2716, %v2639
      %2769 = vst.msk [vmem:[%s175 + $0xd0] sm:$0xf] %vm2716, %v2640
      %2770 = vst.msk [vmem:[%s175 + $0xd4] sm:$0xf] %vm2716, %v2641
      %2771 = vst.msk [vmem:[%s175 + $0xd8] sm:$0xf] %vm2716, %v2642
      %2772 = vst.msk [vmem:[%s175 + $0xdc] sm:$0xf] %vm2716, %v2643
      %2773 = vst.msk [vmem:[%s175 + $0xe0] sm:$0xf] %vm2716, %v2644
      %2774 = vst.msk [vmem:[%s175 + $0xe4] sm:$0xf] %vm2716, %v2645
      %2775 = vst.msk [vmem:[%s175 + $0xe8] sm:$0xf] %vm2716, %v2646
      %2776 = vst.msk [vmem:[%s175 + $0xec] sm:$0xf] %vm2716, %v2647
      %2777 = vst.msk [vmem:[%s175 + $0xf0] sm:$0xf] %vm2716, %v2648
      %2778 = vst.msk [vmem:[%s175 + $0xf4] sm:$0xf] %vm2716, %v2649
      %2779 = vst.msk [vmem:[%s175 + $0xf8] sm:$0xf] %vm2716, %v2650
      %2780 = vst.msk [vmem:[%s175 + $0xfc] sm:$0xf] %vm2716, %v2651
      %s2781 = smul.u32 64, %s14
      %p2782 = scmp.lt.s32.totalorder %s2781, 127
      %s2783 = scalar_select %p2782, %s2781, 127
      %s2784 = smul.addr %s2783, 4
      %s2785 = scalar_lea.vmem %s3, %s2784
      // Predicated region
      $region33: #{implicit_loss.4} parent=31 // pred_check
        %p2786 = pneg %p100
      $region34: #{implicit_loss.4} parent=31 // pred_check_branch
        %2788 = sbr.rel (%p2786) target = $region36
      $region35: #{implicit_loss.4} parent=31 // pred_region
        %s2789 = smul.u32 64, %s14
      $region36: #{implicit_loss.4} parent=31 // pred_fallthru
        _
    $region32: #{implicit_loss.4} parent=5 // pred_fallthru
      _
    %p2790 = scmp.le.s32.totalorder 2, %s9
    // Predicated region
    $region37: #{implicit_loss.4} parent=5 // pred_check
      %p2791 = pneg %p2790
    $region38: #{implicit_loss.4} parent=5 // pred_check_branch
      %2793 = sbr.rel (%p2791) target = $region40
    $region39: #{implicit_loss.4} parent=5 // pred_region
      %s2794 = ssub.s32 %s9, 2
      // Predicated region
      $region41: #{implicit_loss.4} parent=39 // pred_check
        %p2795 = pneg %p106
      $region42: #{implicit_loss.4} parent=39 // pred_check_branch
        %2797 = sbr.rel (%p2795) target = $region44
      $region43: #{implicit_loss.4} parent=39 // pred_region
        %s2798 = smul.u32 64, %s15
        %p2799 = scmp.lt.s32.totalorder %s2798, 127
        %s2800 = scalar_select %p2799, %s2798, 127
        %s2801 = smul.addr %s2800, 4
        %s2802 = scalar_lea.vmem %s3, %s2801
      $region44: #{implicit_loss.4} parent=39 // pred_fallthru
        _
    $region40: #{implicit_loss.4} parent=5 // pred_fallthru
      _
  $region6: #{implicit_loss.4} parent=0 // loop_footer
    %s13 = sadd.s32 1, %s9
  $region7: #{implicit_loss.4} parent=0 // loop_footer_branch
    %8 = sbr.rel target = $region3
  $region8: #{implicit_loss.4} parent=0 // loop_exit
    _

// kernel: implicit_loss.5
$region0: #{implicit_loss.5}
  #allocation0 [shape = 'u32[]', space=smem, size = 0x4, offset = 0x4, fixed_abs, tag = 'smem constant byte address 0x4 - core index']
  #allocation1 [shape = 'u32[144,128]{1,0:T(1,128)}', space=vmem, size = 0x12000, scoped, tag = 'internal scratch']
  #allocation2 [shape = 'f32[1,1]{1,0:T(1,128)}', space=smem, size = 0x200, scoped, tag = 'scratch operand']
  %s0 = inlined_call_operand.vmem [shape: bf16[128,640], index: 0, kind: input, shape index: {}]
  %s1 = inlined_call_operand.vmem [shape: bf16[128,640], index: 1, kind: input, shape index: {}]
  %s2 = inlined_call_operand.vmem [shape: bf16[640,128], index: 2, kind: input, shape index: {}]
  %s3 = inlined_call_operand.hbm [shape: f32[1,1], index: 3, kind: output, shape index: {}]
  %s4 = sld [smem:[#allocation0]]
  $region30: #{implicit_loss.5} parent=0
    _
  %s6 = ssub.s32 1, %s4
  %s7 = scalar_select 0, %s6, %s4
  $region1: #{implicit_loss.5} parent=0
    #allocation3 [shape = 'u8[512]{0}', space=smem, size = 0x200, scoped, tag = 'output window, operand 0, single buffered']
    #allocation4 [shape = 's32[1]{0}', space=sflag, size = 0x4, scoped, tag = 'scoped memory for implicit_loss.5']
    %8 = vsyncpa [#allocation4], 0
    // Predicated region
    $region2: #{implicit_loss.5} parent=1 // pred_check
      _
    $region3: #{implicit_loss.5} parent=1 // pred_check_branch
      %10 = sbr.rel (0) target = $region5
    $region4: #{implicit_loss.5} parent=1 // pred_region
      _
    $region5: #{implicit_loss.5} parent=1 // pred_fallthru
      _
    // Predicated region
    $region6: #{implicit_loss.5} parent=1 // pred_check
      _
    $region7: #{implicit_loss.5} parent=1 // pred_check_branch
      %12 = sbr.rel (0) target = $region9
    $region8: #{implicit_loss.5} parent=1 // pred_region
      _
    $region9: #{implicit_loss.5} parent=1 // pred_fallthru
      _
    // Predicated region
    $region10: #{implicit_loss.5} parent=1 // pred_check
      _
    $region11: #{implicit_loss.5} parent=1 // pred_check_branch
      %14 = sbr.rel (0) target = $region13
    $region12: #{implicit_loss.5} parent=1 // pred_region
      _
    $region13: #{implicit_loss.5} parent=1 // pred_fallthru
      _
    %p16 = scmp.eq.s32.totalorder 0, 0
    // Predicated region
    $region14: #{implicit_loss.5} parent=1 // pred_check
      %p17 = pneg %p16
    $region15: #{implicit_loss.5} parent=1 // pred_check_branch
      %19 = sbr.rel (%p17) target = $region17
    $region16: #{implicit_loss.5} parent=1 // pred_region
      %s20 = scalar_lea.smem [#allocation2], 0
      %21 = sst [smem:[%s20]] 0.0
    $region17: #{implicit_loss.5} parent=1 // pred_fallthru
      _
    %v22 = vld [vmem:[%s0] sm:$0xff]
    %v23 = vld [vmem:[%s0 + $0x8] sm:$0xff]
    %v24 = vld [vmem:[%s0 + $0x10] sm:$0xf]
    %v25 = vld [vmem:[%s0 + $0x14] sm:$0xff]
    %v26 = vld [vmem:[%s0 + $0x1c] sm:$0xff]
    %v27 = vld [vmem:[%s0 + $0x24] sm:$0xf]
    %v28 = vld [vmem:[%s0 + $0x28] sm:$0xff]
    %v29 = vld [vmem:[%s0 + $0x30] sm:$0xff]
    %v30 = vld [vmem:[%s0 + $0x38] sm:$0xf]
    %v31 = vld [vmem:[%s0 + $0x3c] sm:$0xff]
    %v32 = vld [vmem:[%s0 + $0x44] sm:$0xff]
    %v33 = vld [vmem:[%s0 + $0x4c] sm:$0xf]
    %v34 = vld [vmem:[%s0 + $0x50] sm:$0xff]
    %v35 = vld [vmem:[%s0 + $0x58] sm:$0xff]
    %v36 = vld [vmem:[%s0 + $0x60] sm:$0xf]
    %v37 = vld [vmem:[%s0 + $0x64] sm:$0xff]
    %v38 = vld [vmem:[%s0 + $0x6c] sm:$0xff]
    %v39 = vld [vmem:[%s0 + $0x74] sm:$0xf]
    %v40 = vld [vmem:[%s0 + $0x78] sm:$0xff]
    %v41 = vld [vmem:[%s0 + $0x80] sm:$0xff]
    %v42 = vld [vmem:[%s0 + $0x88] sm:$0xf]
    %v43 = vld [vmem:[%s0 + $0x8c] sm:$0xff]
    %v44 = vld [vmem:[%s0 + $0x94] sm:$0xff]
    %v45 = vld [vmem:[%s0 + $0x9c] sm:$0xf]
    %v46 = vld [vmem:[%s0 + $0xa0] sm:$0xff]
    %v47 = vld [vmem:[%s0 + $0xa8] sm:$0xff]
    %v48 = vld [vmem:[%s0 + $0xb0] sm:$0xf]
    %v49 = vld [vmem:[%s0 + $0xb4] sm:$0xff]
    %v50 = vld [vmem:[%s0 + $0xbc] sm:$0xff]
    %v51 = vld [vmem:[%s0 + $0xc4] sm:$0xf]
    %v52 = vld [vmem:[%s0 + $0xc8] sm:$0xff]
    %v53 = vld [vmem:[%s0 + $0xd0] sm:$0xff]
    %v54 = vld [vmem:[%s0 + $0xd8] sm:$0xf]
    %v55 = vld [vmem:[%s0 + $0xdc] sm:$0xff]
    %v56 = vld [vmem:[%s0 + $0xe4] sm:$0xff]
    %v57 = vld [vmem:[%s0 + $0xec] sm:$0xf]
    %v58 = vld [vmem:[%s0 + $0xf0] sm:$0xff]
    %v59 = vld [vmem:[%s0 + $0xf8] sm:$0xff]
    %v60 = vld [vmem:[%s0 + $0x100] sm:$0xf]
    %v61 = vld [vmem:[%s0 + $0x104] sm:$0xff]
    %v62 = vld [vmem:[%s0 + $0x10c] sm:$0xff]
    %v63 = vld [vmem:[%s0 + $0x114] sm:$0xf]
    %v64 = vld [vmem:[%s0 + $0x118] sm:$0xff]
    %v65 = vld [vmem:[%s0 + $0x120] sm:$0xff]
    %v66 = vld [vmem:[%s0 + $0x128] sm:$0xf]
    %v67 = vld [vmem:[%s0 + $0x12c] sm:$0xff]
    %v68 = vld [vmem:[%s0 + $0x134] sm:$0xff]
    %v69 = vld [vmem:[%s0 + $0x13c] sm:$0xf]
    %v70 = vld [vmem:[%s1] sm:$0xff]
    %v71 = vld [vmem:[%s1 + $0x8] sm:$0xff]
    %v72 = vld [vmem:[%s1 + $0x10] sm:$0xf]
    %v73 = vld [vmem:[%s1 + $0x14] sm:$0xff]
    %v74 = vld [vmem:[%s1 + $0x1c] sm:$0xff]
    %v75 = vld [vmem:[%s1 + $0x24] sm:$0xf]
    %v76 = vld [vmem:[%s1 + $0x28] sm:$0xff]
    %v77 = vld [vmem:[%s1 + $0x30] sm:$0xff]
    %v78 = vld [vmem:[%s1 + $0x38] sm:$0xf]
    %v79 = vld [vmem:[%s1 + $0x3c] sm:$0xff]
    %v80 = vld [vmem:[%s1 + $0x44] sm:$0xff]
    %v81 = vld [vmem:[%s1 + $0x4c] sm:$0xf]
    %v82 = vld [vmem:[%s1 + $0x50] sm:$0xff]
    %v83 = vld [vmem:[%s1 + $0x58] sm:$0xff]
    %v84 = vld [vmem:[%s1 + $0x60] sm:$0xf]
    %v85 = vld [vmem:[%s1 + $0x64] sm:$0xff]
    %v86 = vld [vmem:[%s1 + $0x6c] sm:$0xff]
    %v87 = vld [vmem:[%s1 + $0x74] sm:$0xf]
    %v88 = vld [vmem:[%s1 + $0x78] sm:$0xff]
    %v89 = vld [vmem:[%s1 + $0x80] sm:$0xff]
    %v90 = vld [vmem:[%s1 + $0x88] sm:$0xf]
    %v91 = vld [vmem:[%s1 + $0x8c] sm:$0xff]
    %v92 = vld [vmem:[%s1 + $0x94] sm:$0xff]
    %v93 = vld [vmem:[%s1 + $0x9c] sm:$0xf]
    %v94 = vld [vmem:[%s1 + $0xa0] sm:$0xff]
    %v95 = vld [vmem:[%s1 + $0xa8] sm:$0xff]
    %v96 = vld [vmem:[%s1 + $0xb0] sm:$0xf]
    %v97 = vld [vmem:[%s1 + $0xb4] sm:$0xff]
    %v98 = vld [vmem:[%s1 + $0xbc] sm:$0xff]
    %v99 = vld [vmem:[%s1 + $0xc4] sm:$0xf]
    %v100 = vld [vmem:[%s1 + $0xc8] sm:$0xff]
    %v101 = vld [vmem:[%s1 + $0xd0] sm:$0xff]
    %v102 = vld [vmem:[%s1 + $0xd8] sm:$0xf]
    %v103 = vld [vmem:[%s1 + $0xdc] sm:$0xff]
    %v104 = vld [vmem:[%s1 + $0xe4] sm:$0xff]
    %v105 = vld [vmem:[%s1 + $0xec] sm:$0xf]
    %v106 = vld [vmem:[%s1 + $0xf0] sm:$0xff]
    %v107 = vld [vmem:[%s1 + $0xf8] sm:$0xff]
    %v108 = vld [vmem:[%s1 + $0x100] sm:$0xf]
    %v109 = vld [vmem:[%s1 + $0x104] sm:$0xff]
    %v110 = vld [vmem:[%s1 + $0x10c] sm:$0xff]
    %v111 = vld [vmem:[%s1 + $0x114] sm:$0xf]
    %v112 = vld [vmem:[%s1 + $0x118] sm:$0xff]
    %v113 = vld [vmem:[%s1 + $0x120] sm:$0xff]
    %v114 = vld [vmem:[%s1 + $0x128] sm:$0xf]
    %v115 = vld [vmem:[%s1 + $0x12c] sm:$0xff]
    %v116 = vld [vmem:[%s1 + $0x134] sm:$0xff]
    %v117 = vld [vmem:[%s1 + $0x13c] sm:$0xf]
    %v118 = vsub.bf16 %v22, %v70
    %v119 = vsub.bf16 %v23, %v71
    %v120 = vsub.bf16 %v24, %v72
    %v121 = vsub.bf16 %v25, %v73
    %v122 = vsub.bf16 %v26, %v74
    %v123 = vsub.bf16 %v27, %v75
    %v124 = vsub.bf16 %v28, %v76
    %v125 = vsub.bf16 %v29, %v77
    %v126 = vsub.bf16 %v30, %v78
    %v127 = vsub.bf16 %v31, %v79
    %v128 = vsub.bf16 %v32, %v80
    %v129 = vsub.bf16 %v33, %v81
    %v130 = vsub.bf16 %v34, %v82
    %v131 = vsub.bf16 %v35, %v83
    %v132 = vsub.bf16 %v36, %v84
    %v133 = vsub.bf16 %v37, %v85
    %v134 = vsub.bf16 %v38, %v86
    %v135 = vsub.bf16 %v39, %v87
    %v136 = vsub.bf16 %v40, %v88
    %v137 = vsub.bf16 %v41, %v89
    %v138 = vsub.bf16 %v42, %v90
    %v139 = vsub.bf16 %v43, %v91
    %v140 = vsub.bf16 %v44, %v92
    %v141 = vsub.bf16 %v45, %v93
    %v142 = vsub.bf16 %v46, %v94
    %v143 = vsub.bf16 %v47, %v95
    %v144 = vsub.bf16 %v48, %v96
    %v145 = vsub.bf16 %v49, %v97
    %v146 = vsub.bf16 %v50, %v98
    %v147 = vsub.bf16 %v51, %v99
    %v148 = vsub.bf16 %v52, %v100
    %v149 = vsub.bf16 %v53, %v101
    %v150 = vsub.bf16 %v54, %v102
    %v151 = vsub.bf16 %v55, %v103
    %v152 = vsub.bf16 %v56, %v104
    %v153 = vsub.bf16 %v57, %v105
    %v154 = vsub.bf16 %v58, %v106
    %v155 = vsub.bf16 %v59, %v107
    %v156 = vsub.bf16 %v60, %v108
    %v157 = vsub.bf16 %v61, %v109
    %v158 = vsub.bf16 %v62, %v110
    %v159 = vsub.bf16 %v63, %v111
    %v160 = vsub.bf16 %v64, %v112
    %v161 = vsub.bf16 %v65, %v113
    %v162 = vsub.bf16 %v66, %v114
    %v163 = vsub.bf16 %v67, %v115
    %v164 = vsub.bf16 %v68, %v116
    %v165 = vsub.bf16 %v69, %v117
    %v166 = vld [vmem:[%s2] sm:$0xf]
    %v167 = vld [vmem:[%s2 + $0x4] sm:$0xf]
    %v168 = vld [vmem:[%s2 + $0x8] sm:$0xf]
    %v169 = vld [vmem:[%s2 + $0xc] sm:$0xf]
    %v170 = vld [vmem:[%s2 + $0x10] sm:$0xf]
    %v171 = vld [vmem:[%s2 + $0x14] sm:$0xf]
    %v172 = vld [vmem:[%s2 + $0x18] sm:$0xf]
    %v173 = vld [vmem:[%s2 + $0x1c] sm:$0xf]
    %v174 = vld [vmem:[%s2 + $0x20] sm:$0xf]
    %v175 = vld [vmem:[%s2 + $0x24] sm:$0xf]
    %v176 = vld [vmem:[%s2 + $0x28] sm:$0xf]
    %v177 = vld [vmem:[%s2 + $0x2c] sm:$0xf]
    %v178 = vld [vmem:[%s2 + $0x30] sm:$0xf]
    %v179 = vld [vmem:[%s2 + $0x34] sm:$0xf]
    %v180 = vld [vmem:[%s2 + $0x38] sm:$0xf]
    %v181 = vld [vmem:[%s2 + $0x3c] sm:$0xf]
    %v182 = vld [vmem:[%s2 + $0x40] sm:$0xf]
    %v183 = vld [vmem:[%s2 + $0x44] sm:$0xf]
    %v184 = vld [vmem:[%s2 + $0x48] sm:$0xf]
    %v185 = vld [vmem:[%s2 + $0x4c] sm:$0xf]
    %v186 = vld [vmem:[%s2 + $0x50] sm:$0xf]
    %v187 = vld [vmem:[%s2 + $0x54] sm:$0xf]
    %v188 = vld [vmem:[%s2 + $0x58] sm:$0xf]
    %v189 = vld [vmem:[%s2 + $0x5c] sm:$0xf]
    %v190 = vld [vmem:[%s2 + $0x60] sm:$0xf]
    %v191 = vld [vmem:[%s2 + $0x64] sm:$0xf]
    %v192 = vld [vmem:[%s2 + $0x68] sm:$0xf]
    %v193 = vld [vmem:[%s2 + $0x6c] sm:$0xf]
    %v194 = vld [vmem:[%s2 + $0x70] sm:$0xf]
    %v195 = vld [vmem:[%s2 + $0x74] sm:$0xf]
    %v196 = vld [vmem:[%s2 + $0x78] sm:$0xf]
    %v197 = vld [vmem:[%s2 + $0x7c] sm:$0xf]
    %v198 = vld [vmem:[%s2 + $0x80] sm:$0xf]
    %v199 = vld [vmem:[%s2 + $0x84] sm:$0xf]
    %v200 = vld [vmem:[%s2 + $0x88] sm:$0xf]
    %v201 = vld [vmem:[%s2 + $0x8c] sm:$0xf]
    %v202 = vld [vmem:[%s2 + $0x90] sm:$0xf]
    %v203 = vld [vmem:[%s2 + $0x94] sm:$0xf]
    %v204 = vld [vmem:[%s2 + $0x98] sm:$0xf]
    %v205 = vld [vmem:[%s2 + $0x9c] sm:$0xf]
    %v206 = vld [vmem:[%s2 + $0xa0] sm:$0xf]
    %v207 = vld [vmem:[%s2 + $0xa4] sm:$0xf]
    %v208 = vld [vmem:[%s2 + $0xa8] sm:$0xf]
    %v209 = vld [vmem:[%s2 + $0xac] sm:$0xf]
    %v210 = vld [vmem:[%s2 + $0xb0] sm:$0xf]
    %v211 = vld [vmem:[%s2 + $0xb4] sm:$0xf]
    %v212 = vld [vmem:[%s2 + $0xb8] sm:$0xf]
    %v213 = vld [vmem:[%s2 + $0xbc] sm:$0xf]
    %v214 = vld [vmem:[%s2 + $0xc0] sm:$0xf]
    %v215 = vld [vmem:[%s2 + $0xc4] sm:$0xf]
    %v216 = vld [vmem:[%s2 + $0xc8] sm:$0xf]
    %v217 = vld [vmem:[%s2 + $0xcc] sm:$0xf]
    %v218 = vld [vmem:[%s2 + $0xd0] sm:$0xf]
    %v219 = vld [vmem:[%s2 + $0xd4] sm:$0xf]
    %v220 = vld [vmem:[%s2 + $0xd8] sm:$0xf]
    %v221 = vld [vmem:[%s2 + $0xdc] sm:$0xf]
    %v222 = vld [vmem:[%s2 + $0xe0] sm:$0xf]
    %v223 = vld [vmem:[%s2 + $0xe4] sm:$0xf]
    %v224 = vld [vmem:[%s2 + $0xe8] sm:$0xf]
    %v225 = vld [vmem:[%s2 + $0xec] sm:$0xf]
    %v226 = vld [vmem:[%s2 + $0xf0] sm:$0xf]
    %v227 = vld [vmem:[%s2 + $0xf4] sm:$0xf]
    %v228 = vld [vmem:[%s2 + $0xf8] sm:$0xf]
    %v229 = vld [vmem:[%s2 + $0xfc] sm:$0xf]
    %v230 = vld [vmem:[%s2 + $0x100] sm:$0xf]
    %v231 = vld [vmem:[%s2 + $0x104] sm:$0xf]
    %v232 = vld [vmem:[%s2 + $0x108] sm:$0xf]
    %v233 = vld [vmem:[%s2 + $0x10c] sm:$0xf]
    %v234 = vld [vmem:[%s2 + $0x110] sm:$0xf]
    %v235 = vld [vmem:[%s2 + $0x114] sm:$0xf]
    %v236 = vld [vmem:[%s2 + $0x118] sm:$0xf]
    %v237 = vld [vmem:[%s2 + $0x11c] sm:$0xf]
    %v238 = vld [vmem:[%s2 + $0x120] sm:$0xf]
    %v239 = vld [vmem:[%s2 + $0x124] sm:$0xf]
    %v240 = vld [vmem:[%s2 + $0x128] sm:$0xf]
    %v241 = vld [vmem:[%s2 + $0x12c] sm:$0xf]
    %v242 = vld [vmem:[%s2 + $0x130] sm:$0xf]
    %v243 = vld [vmem:[%s2 + $0x134] sm:$0xf]
    %v244 = vld [vmem:[%s2 + $0x138] sm:$0xf]
    %v245 = vld [vmem:[%s2 + $0x13c] sm:$0xf]
    %v294 = vunpack.c.l.b16 %v118
    %v295 = vunpack.c.h.b16 %v118
    %v296 = vunpack.c.l.b16 %v119
    %v297 = vunpack.c.h.b16 %v119
    %v298 = vunpack.c.l.b16 %v120
    %v299 = vunpack.c.l.b16 %v121
    %v300 = vunpack.c.h.b16 %v121
    %v301 = vunpack.c.l.b16 %v122
    %v302 = vunpack.c.h.b16 %v122
    %v303 = vunpack.c.l.b16 %v123
    %v304 = vunpack.c.l.b16 %v124
    %v305 = vunpack.c.h.b16 %v124
    %v306 = vunpack.c.l.b16 %v125
    %v307 = vunpack.c.h.b16 %v125
    %v308 = vunpack.c.l.b16 %v126
    %v309 = vunpack.c.l.b16 %v127
    %v310 = vunpack.c.h.b16 %v127
    %v311 = vunpack.c.l.b16 %v128
    %v312 = vunpack.c.h.b16 %v128
    %v313 = vunpack.c.l.b16 %v129
    %v314 = vunpack.c.l.b16 %v130
    %v315 = vunpack.c.h.b16 %v130
    %v316 = vunpack.c.l.b16 %v131
    %v317 = vunpack.c.h.b16 %v131
    %v318 = vunpack.c.l.b16 %v132
    %v319 = vunpack.c.l.b16 %v133
    %v320 = vunpack.c.h.b16 %v133
    %v321 = vunpack.c.l.b16 %v134
    %v322 = vunpack.c.h.b16 %v134
    %v323 = vunpack.c.l.b16 %v135
    %v324 = vunpack.c.l.b16 %v136
    %v325 = vunpack.c.h.b16 %v136
    %v326 = vunpack.c.l.b16 %v137
    %v327 = vunpack.c.h.b16 %v137
    %v328 = vunpack.c.l.b16 %v138
    %v329 = vunpack.c.l.b16 %v139
    %v330 = vunpack.c.h.b16 %v139
    %v331 = vunpack.c.l.b16 %v140
    %v332 = vunpack.c.h.b16 %v140
    %v333 = vunpack.c.l.b16 %v141
    %v334 = vunpack.c.l.b16 %v142
    %v335 = vunpack.c.h.b16 %v142
    %v336 = vunpack.c.l.b16 %v143
    %v337 = vunpack.c.h.b16 %v143
    %v338 = vunpack.c.l.b16 %v144
    %v339 = vunpack.c.l.b16 %v145
    %v340 = vunpack.c.h.b16 %v145
    %v341 = vunpack.c.l.b16 %v146
    %v342 = vunpack.c.h.b16 %v146
    %v343 = vunpack.c.l.b16 %v147
    %v344 = vunpack.c.l.b16 %v148
    %v345 = vunpack.c.h.b16 %v148
    %v346 = vunpack.c.l.b16 %v149
    %v347 = vunpack.c.h.b16 %v149
    %v348 = vunpack.c.l.b16 %v150
    %v349 = vunpack.c.l.b16 %v151
    %v350 = vunpack.c.h.b16 %v151
    %v351 = vunpack.c.l.b16 %v152
    %v352 = vunpack.c.h.b16 %v152
    %v353 = vunpack.c.l.b16 %v153
    %v354 = vunpack.c.l.b16 %v154
    %v355 = vunpack.c.h.b16 %v154
    %v356 = vunpack.c.l.b16 %v155
    %v357 = vunpack.c.h.b16 %v155
    %v358 = vunpack.c.l.b16 %v156
    %v359 = vunpack.c.l.b16 %v157
    %v360 = vunpack.c.h.b16 %v157
    %v361 = vunpack.c.l.b16 %v158
    %v362 = vunpack.c.h.b16 %v158
    %v363 = vunpack.c.l.b16 %v159
    %v364 = vunpack.c.l.b16 %v160
    %v365 = vunpack.c.h.b16 %v160
    %v366 = vunpack.c.l.b16 %v161
    %v367 = vunpack.c.h.b16 %v161
    %v368 = vunpack.c.l.b16 %v162
    %v369 = vunpack.c.l.b16 %v163
    %v370 = vunpack.c.h.b16 %v163
    %v371 = vunpack.c.l.b16 %v164
    %v372 = vunpack.c.h.b16 %v164
    %v373 = vunpack.c.l.b16 %v165
    %v374 = vpack.c.b16 %v299, %v294
    %v375 = vpack.c.b16 %v300, %v295
    %v376 = vpack.c.b16 %v301, %v296
    %v377 = vpack.c.b16 %v302, %v297
    %v378 = vpack.c.b16 %v303, %v298
    %v379 = vpack.c.b16 %v309, %v304
    %v380 = vpack.c.b16 %v310, %v305
    %v381 = vpack.c.b16 %v311, %v306
    %v382 = vpack.c.b16 %v312, %v307
    %v383 = vpack.c.b16 %v313, %v308
    %v384 = vpack.c.b16 %v319, %v314
    %v385 = vpack.c.b16 %v320, %v315
    %v386 = vpack.c.b16 %v321, %v316
    %v387 = vpack.c.b16 %v322, %v317
    %v388 = vpack.c.b16 %v323, %v318
    %v389 = vpack.c.b16 %v329, %v324
    %v390 = vpack.c.b16 %v330, %v325
    %v391 = vpack.c.b16 %v331, %v326
    %v392 = vpack.c.b16 %v332, %v327
    %v393 = vpack.c.b16 %v333, %v328
    %v394 = vpack.c.b16 %v339, %v334
    %v395 = vpack.c.b16 %v340, %v335
    %v396 = vpack.c.b16 %v341, %v336
    %v397 = vpack.c.b16 %v342, %v337
    %v398 = vpack.c.b16 %v343, %v338
    %v399 = vpack.c.b16 %v349, %v344
    %v400 = vpack.c.b16 %v350, %v345
    %v401 = vpack.c.b16 %v351, %v346
    %v402 = vpack.c.b16 %v352, %v347
    %v403 = vpack.c.b16 %v353, %v348
    %v404 = vpack.c.b16 %v359, %v354
    %v405 = vpack.c.b16 %v360, %v355
    %v406 = vpack.c.b16 %v361, %v356
    %v407 = vpack.c.b16 %v362, %v357
    %v408 = vpack.c.b16 %v363, %v358
    %v409 = vpack.c.b16 %v369, %v364
    %v410 = vpack.c.b16 %v370, %v365
    %v411 = vpack.c.b16 %v371, %v366
    %v412 = vpack.c.b16 %v372, %v367
    %v413 = vpack.c.b16 %v373, %v368
    %v534 = vunpack.c.l.b16 %v166
    %v535 = vunpack.c.l.b16 %v167
    %v536 = vunpack.c.l.b16 %v168
    %v537 = vunpack.c.l.b16 %v169
    %v538 = vunpack.c.l.b16 %v170
    %v539 = vunpack.c.l.b16 %v171
    %v540 = vunpack.c.l.b16 %v172
    %v541 = vunpack.c.l.b16 %v173
    %v542 = vunpack.c.l.b16 %v174
    %v543 = vunpack.c.l.b16 %v175
    %v544 = vunpack.c.l.b16 %v176
    %v545 = vunpack.c.l.b16 %v177
    %v546 = vunpack.c.l.b16 %v178
    %v547 = vunpack.c.l.b16 %v179
    %v548 = vunpack.c.l.b16 %v180
    %v549 = vunpack.c.l.b16 %v181
    %v550 = vunpack.c.l.b16 %v182
    %v551 = vunpack.c.l.b16 %v183
    %v552 = vunpack.c.l.b16 %v184
    %v553 = vunpack.c.l.b16 %v185
    %v554 = vunpack.c.l.b16 %v186
    %v555 = vunpack.c.l.b16 %v187
    %v556 = vunpack.c.l.b16 %v188
    %v557 = vunpack.c.l.b16 %v189
    %v558 = vunpack.c.l.b16 %v190
    %v559 = vunpack.c.l.b16 %v191
    %v560 = vunpack.c.l.b16 %v192
    %v561 = vunpack.c.l.b16 %v193
    %v562 = vunpack.c.l.b16 %v194
    %v563 = vunpack.c.l.b16 %v195
    %v564 = vunpack.c.l.b16 %v196
    %v565 = vunpack.c.l.b16 %v197
    %v566 = vunpack.c.l.b16 %v198
    %v567 = vunpack.c.l.b16 %v199
    %v568 = vunpack.c.l.b16 %v200
    %v569 = vunpack.c.l.b16 %v201
    %v570 = vunpack.c.l.b16 %v202
    %v571 = vunpack.c.l.b16 %v203
    %v572 = vunpack.c.l.b16 %v204
    %v573 = vunpack.c.l.b16 %v205
    %v574 = vunpack.c.l.b16 %v206
    %v575 = vunpack.c.l.b16 %v207
    %v576 = vunpack.c.l.b16 %v208
    %v577 = vunpack.c.l.b16 %v209
    %v578 = vunpack.c.l.b16 %v210
    %v579 = vunpack.c.l.b16 %v211
    %v580 = vunpack.c.l.b16 %v212
    %v581 = vunpack.c.l.b16 %v213
    %v582 = vunpack.c.l.b16 %v214
    %v583 = vunpack.c.l.b16 %v215
    %v584 = vunpack.c.l.b16 %v216
    %v585 = vunpack.c.l.b16 %v217
    %v586 = vunpack.c.l.b16 %v218
    %v587 = vunpack.c.l.b16 %v219
    %v588 = vunpack.c.l.b16 %v220
    %v589 = vunpack.c.l.b16 %v221
    %v590 = vunpack.c.l.b16 %v222
    %v591 = vunpack.c.l.b16 %v223
    %v592 = vunpack.c.l.b16 %v224
    %v593 = vunpack.c.l.b16 %v225
    %v594 = vunpack.c.l.b16 %v226
    %v595 = vunpack.c.l.b16 %v227
    %v596 = vunpack.c.l.b16 %v228
    %v597 = vunpack.c.l.b16 %v229
    %v598 = vunpack.c.l.b16 %v230
    %v599 = vunpack.c.l.b16 %v231
    %v600 = vunpack.c.l.b16 %v232
    %v601 = vunpack.c.l.b16 %v233
    %v602 = vunpack.c.l.b16 %v234
    %v603 = vunpack.c.l.b16 %v235
    %v604 = vunpack.c.l.b16 %v236
    %v605 = vunpack.c.l.b16 %v237
    %v606 = vunpack.c.l.b16 %v238
    %v607 = vunpack.c.l.b16 %v239
    %v608 = vunpack.c.l.b16 %v240
    %v609 = vunpack.c.l.b16 %v241
    %v610 = vunpack.c.l.b16 %v242
    %v611 = vunpack.c.l.b16 %v243
    %v612 = vunpack.c.l.b16 %v244
    %v613 = vunpack.c.l.b16 %v245
    %v614 = vpack.c.b16 %v535, %v534
    %v615 = vpack.c.b16 %v537, %v536
    %v616 = vpack.c.b16 %v539, %v538
    %v617 = vpack.c.b16 %v541, %v540
    %v618 = vpack.c.b16 %v543, %v542
    %v619 = vpack.c.b16 %v545, %v544
    %v620 = vpack.c.b16 %v547, %v546
    %v621 = vpack.c.b16 %v549, %v548
    %v622 = vpack.c.b16 %v551, %v550
    %v623 = vpack.c.b16 %v553, %v552
    %v624 = vpack.c.b16 %v555, %v554
    %v625 = vpack.c.b16 %v557, %v556
    %v626 = vpack.c.b16 %v559, %v558
    %v627 = vpack.c.b16 %v561, %v560
    %v628 = vpack.c.b16 %v563, %v562
    %v629 = vpack.c.b16 %v565, %v564
    %v630 = vpack.c.b16 %v567, %v566
    %v631 = vpack.c.b16 %v569, %v568
    %v632 = vpack.c.b16 %v571, %v570
    %v633 = vpack.c.b16 %v573, %v572
    %v634 = vpack.c.b16 %v575, %v574
    %v635 = vpack.c.b16 %v577, %v576
    %v636 = vpack.c.b16 %v579, %v578
    %v637 = vpack.c.b16 %v581, %v580
    %v638 = vpack.c.b16 %v583, %v582
    %v639 = vpack.c.b16 %v585, %v584
    %v640 = vpack.c.b16 %v587, %v586
    %v641 = vpack.c.b16 %v589, %v588
    %v642 = vpack.c.b16 %v591, %v590
    %v643 = vpack.c.b16 %v593, %v592
    %v644 = vpack.c.b16 %v595, %v594
    %v645 = vpack.c.b16 %v597, %v596
    %v646 = vpack.c.b16 %v599, %v598
    %v647 = vpack.c.b16 %v601, %v600
    %v648 = vpack.c.b16 %v603, %v602
    %v649 = vpack.c.b16 %v605, %v604
    %v650 = vpack.c.b16 %v607, %v606
    %v651 = vpack.c.b16 %v609, %v608
    %v652 = vpack.c.b16 %v611, %v610
    %v653 = vpack.c.b16 %v613, %v612
    %694 = vmatprep.subr.bf16.mxu0 0
    %695 = vmatpush1.bf16.msra.mxu0 %v614
    %696 = vmatprep.subr.bf16.mxu0 0
    %697 = vmatpush1.bf16.msra.mxu0 %v615
    %698 = vmatprep.subr.bf16.mxu0 0
    %699 = vmatpush1.bf16.msra.mxu0 %v616
    %700 = vmatprep.subr.bf16.mxu0 0
    %701 = vmatpush1.bf16.msra.mxu0 %v617
    %702 = vmatprep.subr.bf16.mxu0 0
    %703 = vmatpush1.bf16.msra.mxu0 %v618
    %704 = vmatprep.subr.bf16.mxu0 0
    %705 = vmatpush1.bf16.msra.mxu0 %v619
    %706 = vmatprep.subr.bf16.mxu0 0
    %707 = vmatpush1.bf16.msra.mxu0 %v620
    %708 = vmatprep.subr.bf16.mxu0 0
    %709 = vmatpush1.bf16.msra.mxu0 %v621
    %710 = vmatprep.subr.bf16.mxu0 0
    %711 = vmatpush1.bf16.msra.mxu0 %v622
    %712 = vmatprep.subr.bf16.mxu0 0
    %713 = vmatpush1.bf16.msra.mxu0 %v623
    %714 = vmatprep.subr.bf16.mxu0 0
    %715 = vmatpush1.bf16.msra.mxu0 %v624
    %716 = vmatprep.subr.bf16.mxu0 0
    %717 = vmatpush1.bf16.msra.mxu0 %v625
    %718 = vmatprep.subr.bf16.mxu0 0
    %719 = vmatpush1.bf16.msra.mxu0 %v626
    %720 = vmatprep.subr.bf16.mxu0 0
    %721 = vmatpush1.bf16.msra.mxu0 %v627
    %722 = vmatprep.subr.bf16.mxu0 0
    %723 = vmatpush1.bf16.msra.mxu0 %v628
    %724 = vmatprep.subr.bf16.mxu0 0
    %725 = vmatpush1.bf16.msra.mxu0 %v629
    %726 = vmatprep.mubr.bf16.mxu0 %v375
    %727 = vmatmul.mubr.bf16.gmra.mrb[0].mxu0 %v374
    %v728 = vpop.f32.mrb[0].mxu0
    %v729 = vadd.f32 0.0, %v728
    %v730 = vpop.f32.mrb[0].mxu0
    %v731 = vpop.f32.mrb[0].mxu0
    %v732 = vadd.f32 0.0, %v731
    %v733 = vpop.f32.mrb[0].mxu0
    %734 = vmatprep.mubr.bf16.mxu0 %v380
    %735 = vmatmul.mubr.bf16.gmra.mrb[0].mxu0 %v379
    %v736 = vpop.f32.mrb[0].mxu0
    %v737 = vadd.f32 0.0, %v736
    %v738 = vpop.f32.mrb[0].mxu0
    %v739 = vpop.f32.mrb[0].mxu0
    %v740 = vadd.f32 0.0, %v739
    %v741 = vpop.f32.mrb[0].mxu0
    %742 = vmatprep.mubr.bf16.mxu0 %v385
    %743 = vmatmul.mubr.bf16.gmra.mrb[0].mxu0 %v384
    %v744 = vpop.f32.mrb[0].mxu0
    %v745 = vadd.f32 0.0, %v744
    %v746 = vpop.f32.mrb[0].mxu0
    %v747 = vpop.f32.mrb[0].mxu0
    %v748 = vadd.f32 0.0, %v747
    %v749 = vpop.f32.mrb[0].mxu0
    %750 = vmatprep.mubr.bf16.mxu0 %v390
    %751 = vmatmul.mubr.bf16.gmra.mrb[0].mxu0 %v389
    %v752 = vpop.f32.mrb[0].mxu0
    %v753 = vadd.f32 0.0, %v752
    %v754 = vpop.f32.mrb[0].mxu0
    %v755 = vpop.f32.mrb[0].mxu0
    %v756 = vadd.f32 0.0, %v755
    %v757 = vpop.f32.mrb[0].mxu0
    %758 = vmatprep.mubr.bf16.mxu0 %v395
    %759 = vmatmul.mubr.bf16.gmra.mrb[0].mxu0 %v394
    %v760 = vpop.f32.mrb[0].mxu0
    %v761 = vadd.f32 0.0, %v760
    %v762 = vpop.f32.mrb[0].mxu0
    %v763 = vpop.f32.mrb[0].mxu0
    %v764 = vadd.f32 0.0, %v763
    %v765 = vpop.f32.mrb[0].mxu0
    %766 = vmatprep.mubr.bf16.mxu0 %v400
    %767 = vmatmul.mubr.bf16.gmra.mrb[0].mxu0 %v399
    %v768 = vpop.f32.mrb[0].mxu0
    %v769 = vadd.f32 0.0, %v768
    %v770 = vpop.f32.mrb[0].mxu0
    %v771 = vpop.f32.mrb[0].mxu0
    %v772 = vadd.f32 0.0, %v771
    %v773 = vpop.f32.mrb[0].mxu0
    %774 = vmatprep.mubr.bf16.mxu0 %v405
    %775 = vmatmul.mubr.bf16.gmra.mrb[0].mxu0 %v404
    %v776 = vpop.f32.mrb[0].mxu0
    %v777 = vadd.f32 0.0, %v776
    %v778 = vpop.f32.mrb[0].mxu0
    %v779 = vpop.f32.mrb[0].mxu0
    %v780 = vadd.f32 0.0, %v779
    %v781 = vpop.f32.mrb[0].mxu0
    %782 = vmatprep.mubr.bf16.mxu0 %v410
    %783 = vmatmul.mubr.bf16.gmra.mrb[0].mxu0 %v409
    %v784 = vpop.f32.mrb[0].mxu0
    %v785 = vadd.f32 0.0, %v784
    %v786 = vpop.f32.mrb[0].mxu0
    %v787 = vpop.f32.mrb[0].mxu0
    %v788 = vadd.f32 0.0, %v787
    %v789 = vpop.f32.mrb[0].mxu0
    %790 = vdwg.mxu0
    %791 = vmatprep.subr.bf16.mxu0 0
    %792 = vmatpush1.bf16.msra.mxu0 %v630
    %793 = vmatprep.subr.bf16.mxu0 0
    %794 = vmatpush1.bf16.msra.mxu0 %v631
    %795 = vmatprep.subr.bf16.mxu0 0
    %796 = vmatpush1.bf16.msra.mxu0 %v632
    %797 = vmatprep.subr.bf16.mxu0 0
    %798 = vmatpush1.bf16.msra.mxu0 %v633
    %799 = vmatprep.subr.bf16.mxu0 0
    %800 = vmatpush1.bf16.msra.mxu0 %v634
    %801 = vmatprep.subr.bf16.mxu0 0
    %802 = vmatpush1.bf16.msra.mxu0 %v635
    %803 = vmatprep.subr.bf16.mxu0 0
    %804 = vmatpush1.bf16.msra.mxu0 %v636
    %805 = vmatprep.subr.bf16.mxu0 0
    %806 = vmatpush1.bf16.msra.mxu0 %v637
    %807 = vmatprep.subr.bf16.mxu0 0
    %808 = vmatpush1.bf16.msra.mxu0 %v638
    %809 = vmatprep.subr.bf16.mxu0 0
    %810 = vmatpush1.bf16.msra.mxu0 %v639
    %811 = vmatprep.subr.bf16.mxu0 0
    %812 = vmatpush1.bf16.msra.mxu0 %v640
    %813 = vmatprep.subr.bf16.mxu0 0
    %814 = vmatpush1.bf16.msra.mxu0 %v641
    %815 = vmatprep.subr.bf16.mxu0 0
    %816 = vmatpush1.bf16.msra.mxu0 %v642
    %817 = vmatprep.subr.bf16.mxu0 0
    %818 = vmatpush1.bf16.msra.mxu0 %v643
    %819 = vmatprep.subr.bf16.mxu0 0
    %820 = vmatpush1.bf16.msra.mxu0 %v644
    %821 = vmatprep.subr.bf16.mxu0 0
    %822 = vmatpush1.bf16.msra.mxu0 %v645
    %823 = vmatprep.mubr.bf16.mxu0 %v377
    %824 = vmatmul.mubr.bf16.gmra.mrb[0].mxu0 %v376
    %v825 = vpop.f32.mrb[0].mxu0
    %v826 = vadd.f32 %v729, %v825
    %v827 = vpop.f32.mrb[0].mxu0
    %v828 = vpop.f32.mrb[0].mxu0
    %v829 = vadd.f32 %v732, %v828
    %v830 = vpop.f32.mrb[0].mxu0
    %831 = vmatprep.mubr.bf16.mxu0 %v382
    %832 = vmatmul.mubr.bf16.gmra.mrb[0].mxu0 %v381
    %v833 = vpop.f32.mrb[0].mxu0
    %v834 = vadd.f32 %v737, %v833
    %v835 = vpop.f32.mrb[0].mxu0
    %v836 = vpop.f32.mrb[0].mxu0
    %v837 = vadd.f32 %v740, %v836
    %v838 = vpop.f32.mrb[0].mxu0
    %839 = vmatprep.mubr.bf16.mxu0 %v387
    %840 = vmatmul.mubr.bf16.gmra.mrb[0].mxu0 %v386
    %v841 = vpop.f32.mrb[0].mxu0
    %v842 = vadd.f32 %v745, %v841
    %v843 = vpop.f32.mrb[0].mxu0
    %v844 = vpop.f32.mrb[0].mxu0
    %v845 = vadd.f32 %v748, %v844
    %v846 = vpop.f32.mrb[0].mxu0
    %847 = vmatprep.mubr.bf16.mxu0 %v392
    %848 = vmatmul.mubr.bf16.gmra.mrb[0].mxu0 %v391
    %v849 = vpop.f32.mrb[0].mxu0
    %v850 = vadd.f32 %v753, %v849
    %v851 = vpop.f32.mrb[0].mxu0
    %v852 = vpop.f32.mrb[0].mxu0
    %v853 = vadd.f32 %v756, %v852
    %v854 = vpop.f32.mrb[0].mxu0
    %855 = vmatprep.mubr.bf16.mxu0 %v397
    %856 = vmatmul.mubr.bf16.gmra.mrb[0].mxu0 %v396
    %v857 = vpop.f32.mrb[0].mxu0
    %v858 = vadd.f32 %v761, %v857
    %v859 = vpop.f32.mrb[0].mxu0
    %v860 = vpop.f32.mrb[0].mxu0
    %v861 = vadd.f32 %v764, %v860
    %v862 = vpop.f32.mrb[0].mxu0
    %863 = vmatprep.mubr.bf16.mxu0 %v402
    %864 = vmatmul.mubr.bf16.gmra.mrb[0].mxu0 %v401
    %v865 = vpop.f32.mrb[0].mxu0
    %v866 = vadd.f32 %v769, %v865
    %v867 = vpop.f32.mrb[0].mxu0
    %v868 = vpop.f32.mrb[0].mxu0
    %v869 = vadd.f32 %v772, %v868
    %v870 = vpop.f32.mrb[0].mxu0
    %871 = vmatprep.mubr.bf16.mxu0 %v407
    %872 = vmatmul.mubr.bf16.gmra.mrb[0].mxu0 %v406
    %v873 = vpop.f32.mrb[0].mxu0
    %v874 = vadd.f32 %v777, %v873
    %v875 = vpop.f32.mrb[0].mxu0
    %v876 = vpop.f32.mrb[0].mxu0
    %v877 = vadd.f32 %v780, %v876
    %v878 = vpop.f32.mrb[0].mxu0
    %879 = vmatprep.mubr.bf16.mxu0 %v412
    %880 = vmatmul.mubr.bf16.gmra.mrb[0].mxu0 %v411
    %v881 = vpop.f32.mrb[0].mxu0
    %v882 = vadd.f32 %v785, %v881
    %v883 = vpop.f32.mrb[0].mxu0
    %v884 = vpop.f32.mrb[0].mxu0
    %v885 = vadd.f32 %v788, %v884
    %v886 = vpop.f32.mrb[0].mxu0
    %887 = vdwg.mxu0
    %888 = vmatprep.subr.bf16.mxu0 0
    %889 = vmatpush1.bf16.msra.mxu0 %v646
    %890 = vmatprep.subr.bf16.mxu0 0
    %891 = vmatpush1.bf16.msra.mxu0 %v647
    %892 = vmatprep.subr.bf16.mxu0 0
    %893 = vmatpush1.bf16.msra.mxu0 %v648
    %894 = vmatprep.subr.bf16.mxu0 0
    %895 = vmatpush1.bf16.msra.mxu0 %v649
    %896 = vmatprep.subr.bf16.mxu0 0
    %897 = vmatpush1.bf16.msra.mxu0 %v650
    %898 = vmatprep.subr.bf16.mxu0 0
    %899 = vmatpush1.bf16.msra.mxu0 %v651
    %900 = vmatprep.subr.bf16.mxu0 0
    %901 = vmatpush1.bf16.msra.mxu0 %v652
    %902 = vmatprep.subr.bf16.mxu0 0
    %903 = vmatpush1.bf16.msra.mxu0 %v653
    %904 = vmatprep.subr.bf16.mxu0 0
    %905 = vmatpush1.bf16.msra.mxu0 0
    %906 = vmatprep.subr.bf16.mxu0 0
    %907 = vmatpush1.bf16.msra.mxu0 0
    %908 = vmatprep.subr.bf16.mxu0 0
    %909 = vmatpush1.bf16.msra.mxu0 0
    %910 = vmatprep.subr.bf16.mxu0 0
    %911 = vmatpush1.bf16.msra.mxu0 0
    %912 = vmatprep.subr.bf16.mxu0 0
    %913 = vmatpush1.bf16.msra.mxu0 0
    %914 = vmatprep.subr.bf16.mxu0 0
    %915 = vmatpush1.bf16.msra.mxu0 0
    %916 = vmatprep.subr.bf16.mxu0 0
    %917 = vmatpush1.bf16.msra.mxu0 0
    %918 = vmatprep.subr.bf16.mxu0 0
    %919 = vmatpush1.bf16.msra.mxu0 0
    %920 = vmatprep.mubr.bf16.mxu0 0
    %921 = vmatmul.mubr.bf16.gmra.mrb[0].mxu0 %v378
    %v922 = vpop.f32.mrb[0].mxu0
    %v923 = vadd.f32 %v826, %v922
    %v924 = vpop.f32.mrb[0].mxu0
    %v925 = vpop.f32.mrb[0].mxu0
    %v926 = vadd.f32 %v829, %v925
    %v927 = vpop.f32.mrb[0].mxu0
    %928 = vmatprep.mubr.bf16.mxu0 0
    %929 = vmatmul.mubr.bf16.gmra.mrb[0].mxu0 %v383
    %v930 = vpop.f32.mrb[0].mxu0
    %v931 = vadd.f32 %v834, %v930
    %v932 = vpop.f32.mrb[0].mxu0
    %v933 = vpop.f32.mrb[0].mxu0
    %v934 = vadd.f32 %v837, %v933
    %v935 = vpop.f32.mrb[0].mxu0
    %936 = vmatprep.mubr.bf16.mxu0 0
    %937 = vmatmul.mubr.bf16.gmra.mrb[0].mxu0 %v388
    %v938 = vpop.f32.mrb[0].mxu0
    %v939 = vadd.f32 %v842, %v938
    %v940 = vpop.f32.mrb[0].mxu0
    %v941 = vpop.f32.mrb[0].mxu0
    %v942 = vadd.f32 %v845, %v941
    %v943 = vpop.f32.mrb[0].mxu0
    %944 = vmatprep.mubr.bf16.mxu0 0
    %945 = vmatmul.mubr.bf16.gmra.mrb[0].mxu0 %v393
    %v946 = vpop.f32.mrb[0].mxu0
    %v947 = vadd.f32 %v850, %v946
    %v948 = vpop.f32.mrb[0].mxu0
    %v949 = vpop.f32.mrb[0].mxu0
    %v950 = vadd.f32 %v853, %v949
    %v951 = vpop.f32.mrb[0].mxu0
    %952 = vmatprep.mubr.bf16.mxu0 0
    %953 = vmatmul.mubr.bf16.gmra.mrb[0].mxu0 %v398
    %v954 = vpop.f32.mrb[0].mxu0
    %v955 = vadd.f32 %v858, %v954
    %v956 = vpop.f32.mrb[0].mxu0
    %v957 = vpop.f32.mrb[0].mxu0
    %v958 = vadd.f32 %v861, %v957
    %v959 = vpop.f32.mrb[0].mxu0
    %960 = vmatprep.mubr.bf16.mxu0 0
    %961 = vmatmul.mubr.bf16.gmra.mrb[0].mxu0 %v403
    %v962 = vpop.f32.mrb[0].mxu0
    %v963 = vadd.f32 %v866, %v962
    %v964 = vpop.f32.mrb[0].mxu0
    %v965 = vpop.f32.mrb[0].mxu0
    %v966 = vadd.f32 %v869, %v965
    %v967 = vpop.f32.mrb[0].mxu0
    %968 = vmatprep.mubr.bf16.mxu0 0
    %969 = vmatmul.mubr.bf16.gmra.mrb[0].mxu0 %v408
    %v970 = vpop.f32.mrb[0].mxu0
    %v971 = vadd.f32 %v874, %v970
    %v972 = vpop.f32.mrb[0].mxu0
    %v973 = vpop.f32.mrb[0].mxu0
    %v974 = vadd.f32 %v877, %v973
    %v975 = vpop.f32.mrb[0].mxu0
    %976 = vmatprep.mubr.bf16.mxu0 0
    %977 = vmatmul.mubr.bf16.gmra.mrb[0].mxu0 %v413
    %v978 = vpop.f32.mrb[0].mxu0
    %v979 = vadd.f32 %v882, %v978
    %v980 = vpop.f32.mrb[0].mxu0
    %v981 = vpop.f32.mrb[0].mxu0
    %v982 = vadd.f32 %v885, %v981
    %v983 = vpop.f32.mrb[0].mxu0
    %984 = vdwg.mxu0
    %s985 = sld [smem:[#allocation2]]
    %v986 = vmul.f32 %v923, %v923
    %v987 = vmul.f32 %v926, %v926
    %v988 = vmul.f32 %v931, %v931
    %v989 = vmul.f32 %v934, %v934
    %v990 = vmul.f32 %v939, %v939
    %v991 = vmul.f32 %v942, %v942
    %v992 = vmul.f32 %v947, %v947
    %v993 = vmul.f32 %v950, %v950
    %v994 = vmul.f32 %v955, %v955
    %v995 = vmul.f32 %v958, %v958
    %v996 = vmul.f32 %v963, %v963
    %v997 = vmul.f32 %v966, %v966
    %v998 = vmul.f32 %v971, %v971
    %v999 = vmul.f32 %v974, %v974
    %v1000 = vmul.f32 %v979, %v979
    %v1001 = vmul.f32 %v982, %v982
    %v1002 = vadd.f32 %v986, %v987
    %v1003 = vadd.f32 %v1002, %v988
    %v1004 = vadd.f32 %v1003, %v989
    %v1005 = vadd.f32 %v1004, %v990
    %v1006 = vadd.f32 %v1005, %v991
    %v1007 = vadd.f32 %v1006, %v992
    %v1008 = vadd.f32 %v1007, %v993
    %v1009 = vadd.f32 %v1008, %v994
    %v1010 = vadd.f32 %v1009, %v995
    %v1011 = vadd.f32 %v1010, %v996
    %v1012 = vadd.f32 %v1011, %v997
    %v1013 = vadd.f32 %v1012, %v998
    %v1014 = vadd.f32 %v1013, %v999
    %v1015 = vadd.f32 %v1014, %v1000
    %v1016 = vadd.f32 %v1015, %v1001
    %1017 = vadd.xlane.f32.xlu0 %v1016
    %v1018 = vpop.xlane.xlu0 %1017
    %v1019 = vrot.slane %v1018, 4
    %v1020 = vadd.f32 %v1018, %v1019
    %v1021 = vrot.slane %v1020, 2
    %v1022 = vadd.f32 %v1020, %v1021
    %v1023 = vrot.slane %v1022, 1
    %v1024 = vadd.f32 %v1022, %v1023
    %s1025 = vtos %v1024
    %s1026 = sadd.f32 %s985, %s1025
    %s1027 = scalar_lea.smem [#allocation2], 0
    %1028 = sst [smem:[%s1027]] %s1026
    // Predicated region
    $region18: #{implicit_loss.5} parent=1 // pred_check
      %p1029 = pneg %p16
    $region19: #{implicit_loss.5} parent=1 // pred_check_branch
      %1031 = sbr.rel (%p1029) target = $region21
    $region20: #{implicit_loss.5} parent=1 // pred_region
      %s1032 = sld [smem:[#allocation2]]
      %s1033 = smul.f32 %s1032, 6.1035156e-05
      %s1034 = scalar_lea.smem [#allocation3], 0
      %1035 = sst [smem:[%s1034]] %s1033
    $region21: #{implicit_loss.5} parent=1 // pred_fallthru
      _
    // Predicated region
    $region22: #{implicit_loss.5} parent=1 // pred_check
      _
    $region23: #{implicit_loss.5} parent=1 // pred_check_branch
      %1037 = sbr.rel (0) target = $region25
    $region24: #{implicit_loss.5} parent=1 // pred_region
      %s1039 = ssub.s32 16, 16
      %1040 = vsyncadd [#allocation4], %s1039
      %1043 = dma.smem_to_hbm [#allocation3], 16, %s3, [#allocation4]
    $region25: #{implicit_loss.5} parent=1 // pred_fallthru
      _
    // Predicated region
    $region26: #{implicit_loss.5} parent=1 // pred_check
      _
    $region27: #{implicit_loss.5} parent=1 // pred_check_branch
      %1045 = sbr.rel (0) target = $region29
    $region28: #{implicit_loss.5} parent=1 // pred_region
      %1046 = dma.done [#allocation4], 16
    $region29: #{implicit_loss.5} parent=1 // pred_fallthru
      _
    %1047 = sfence
    %1048 = vsyncpa [#allocation4], 1

</llo_original>
